<compile_context>
chip_gen: v6e
topology: v6e:2x2x1
jax: 0.10.0
libtpu: 0.0.40
codegen_flags: <defaults>
</compile_context>

<pallas_src>
import jax
import jax.numpy as jnp
from jax import lax
from jax.experimental import pallas as pl
from jax.experimental.pallas import tpu as pltpu

# ---- problem sizes (fixed by the module definition) ----
N, H, W = 1, 14, 14
C_SE_IN = 56        # conv2d160 input channels
C_MID = 1344        # conv2d160 output / conv2d161 input channels
C_OUT = 224         # conv2d161 output channels
BN_EPS = 1e-3
P = N * H * W       # spatial positions = 196


def se_conv_bn_kernel(xse_ref, w1t_ref, b1_ref, x_ref, w2_ref, gb_ref, out_ref):
    """Fused SE-gate + 1x1 conv + batch norm, channel-major, single grid step.

      xse_ref: [56, 1]       squeeze input (x502), column (free reshape)
      w1t_ref: [56, 1344]    conv2d160 weight, pre-transposed
      b1_ref:  [1, 1344]     conv2d160 bias, lane-dense row
      x_ref:   [1344, 196]   x499 as channels x pixels (free reshape), f32
      w2_ref:  [224, 1344]   conv2d161 weight, bf16 (pre-cast once)
      gb_ref:  [224, 2]      col 0 = BN gamma, col 1 = BN beta
      out_ref: [224, 196]    f32
    """
    # --- SE branch: 1x1 conv (56 -> 1344) + sigmoid, exact f32, lane-dense.
    # [56,1344] * [56,1] broadcast, sublane-reduce -> [1,1344] row.
    prod = w1t_ref[...] * xse_ref[...]
    s = jnp.sum(prod, axis=0, keepdims=True) + b1_ref[...]       # [1, 1344]
    gate = jax.nn.sigmoid(s)                                     # [1, 1344]

    # --- Fold the gate into w2 (K on lanes -> free sublane broadcast of the
    # gate row), then run the 1x1 conv on the bf16 MXU path, f32 accumulation.
    w2g = (w2_ref[...] * gate).astype(jnp.bfloat16)              # [224, 1344]
    y = jnp.dot(w2g, x_ref[...].astype(jnp.bfloat16),
                preferred_element_type=jnp.float32)              # [224, 196] f32

    # --- BatchNorm2d (training-mode batch statistics over the 196 pixels),
    # two-pass variance, affine folded into one scale/shift FMA.
    inv_p = 1.0 / P
    mean = jnp.sum(y, axis=1, keepdims=True) * inv_p             # [224, 1]
    d = y - mean
    var = jnp.sum(d * d, axis=1, keepdims=True) * inv_p          # [224, 1]
    gb = gb_ref[...]
    scale = gb[:, 0:1] * lax.rsqrt(var + BN_EPS)                 # gamma * inv_std
    out_ref[...] = d * scale + gb[:, 1:2]                        # + beta


def prepare_params(params):
    """One-time parameter prep (reshape + dtype cast). Keep OUT of the per-call
    path: under jit a per-call .astype is a separate convert op that triples
    the w2 HBM traffic of this memory-bound kernel."""
    return {
        "w1_t": jnp.asarray(params["w1"].reshape(C_MID, C_SE_IN).T, jnp.float32),
        "b1": jnp.asarray(params["b1"].reshape(1, C_MID), jnp.float32),
        "w2": jnp.asarray(params["w2"].reshape(C_OUT, C_MID), jnp.bfloat16),
        "gb": jnp.stack([params["gamma"], params["beta"]], axis=1).astype(jnp.float32),
    }


def module_m_forward(x502, x499, prep):
    """x502: [1, 56, 1, 1], x499: [1, 1344, 14, 14] (NCHW) -> [1, 224, 14, 14].

    All activation reshapes are layout-free (NCHW with N=1 is already
    channel-major contiguous); no dtype casts in the per-call path.
    """
    xse = x502.reshape(C_SE_IN, 1)     # [56, 1]
    x = x499.reshape(C_MID, P)         # [1344, 196]

    out = pl.pallas_call(
        se_conv_bn_kernel,
        out_shape=jax.ShapeDtypeStruct((C_OUT, P), jnp.float32),
        grid_spec=pltpu.PrefetchScalarGridSpec(
            num_scalar_prefetch=0,
            grid=(1,),   # single step: whole problem (~2 MB) resident in VMEM
            in_specs=[
                pl.BlockSpec((C_SE_IN, 1), lambda i: (0, 0)),        # xse
                pl.BlockSpec((C_SE_IN, C_MID), lambda i: (0, 0)),    # w1_t
                pl.BlockSpec((1, C_MID), lambda i: (0, 0)),          # b1 row
                pl.BlockSpec((C_MID, P), lambda i: (0, 0)),          # x
                pl.BlockSpec((C_OUT, C_MID), lambda i: (0, 0)),      # w2 (bf16)
                pl.BlockSpec((C_OUT, 2), lambda i: (0, 0)),          # gamma/beta
            ],
            out_specs=pl.BlockSpec((C_OUT, P), lambda i: (0, 0)),
        ),
        compiler_params=pltpu.CompilerParams(
            dimension_semantics=("arbitrary",)),
    )(xse, prep["w1_t"], prep["b1"], x, prep["w2"], prep["gb"])

    # Channel-major [224, 196] is exactly NCHW for N=1 -> free reshape.
    return out.reshape(N, C_OUT, H, W)


def _reference(x502, x499, params, *, emulate_bf16=False):
    """Plain-JAX reference (f32, highest matmul precision).

    With emulate_bf16=True it applies the kernel's deliberate bf16 rounding of
    (w2 * gate) and of x, so it checks the kernel wiring at tight tolerance;
    with False it is the exact f32 module math.
    """
    hi = lax.Precision.HIGHEST
    w1 = params["w1"].reshape(C_MID, C_SE_IN)
    b1 = params["b1"].reshape(C_MID)
    w2 = params["w2"].reshape(C_OUT, C_MID)
    gamma = params["gamma"].reshape(1, C_OUT, 1, 1)
    beta = params["beta"].reshape(1, C_OUT, 1, 1)

    xse = x502.reshape(C_SE_IN)
    s = jnp.einsum("oc,c->o", w1, xse, precision=hi) + b1          # [1344]
    gate = jax.nn.sigmoid(s)                                       # [1344]
    x = x499.reshape(C_MID, P)                                     # [1344, 196]

    if emulate_bf16:
        w2_q = w2.astype(jnp.bfloat16).astype(jnp.float32)
        w2g = (w2_q * gate[None, :]).astype(jnp.bfloat16).astype(jnp.float32)
        x_q = x.astype(jnp.bfloat16).astype(jnp.float32)
    else:
        w2g = w2 * gate[None, :]
        x_q = x

    y = jnp.dot(w2g, x_q, precision=hi).reshape(1, C_OUT, H, W)
    mean = jnp.mean(y, axis=(0, 2, 3), keepdims=True)
    var = jnp.mean((y - mean) ** 2, axis=(0, 2, 3), keepdims=True)
    return (y - mean) * lax.rsqrt(var + BN_EPS) * gamma + beta


def init_params(key):
    """Deterministic synthetic parameters matching the module's shapes."""
    k1, k2, k3, k4, k5 = jax.random.split(key, 5)
    bound1 = 1.0 / jnp.sqrt(C_SE_IN)
    bound2 = 1.0 / jnp.sqrt(C_MID)
    return {
        # Conv2d(56, 1344, 1x1) weight/bias
        "w1": jax.random.uniform(k1, (C_MID, C_SE_IN, 1, 1), jnp.float32,
                                 -bound1, bound1),
        "b1": jax.random.uniform(k2, (C_MID,), jnp.float32, -bound1, bound1),
        # Conv2d(1344, 224, 1x1, bias=False) weight
        "w2": jax.random.uniform(k3, (C_OUT, C_MID, 1, 1), jnp.float32,
                                 -bound2, bound2),
        # BatchNorm2d(224) affine params (perturbed from identity, deterministic)
        "gamma": 1.0 + 0.1 * jax.random.normal(k4, (C_OUT,), jnp.float32),
        "beta": 0.1 * jax.random.normal(k5, (C_OUT,), jnp.float32),
    }


if __name__ == "__main__":
    key = jax.random.PRNGKey(0)
    kx1, kx2, kp = jax.random.split(key, 3)

    x499 = jax.random.normal(kx1, (N, C_MID, H, W), jnp.float32)
    x502 = jax.random.normal(kx2, (N, C_SE_IN, 1, 1), jnp.float32)
    params = init_params(kp)

    # One-time param prep (bf16 cast of w2, transposes, packing) outside jit.
    prep = jax.tree_util.tree_map(jax.block_until_ready, prepare_params(params))

    fwd = jax.jit(module_m_forward)
    out = jax.block_until_ready(fwd(x502, x499, prep))
    assert out.shape == (N, C_OUT, H, W), out.shape

    # Tight check: kernel vs. a reference that applies the same deliberate bf16
    # rounding of (w2 * gate) and x (verifies the kernel wiring/math).
    ref_q = jax.block_until_ready(_reference(x502, x499, params, emulate_bf16=True))
    if not jnp.allclose(out, ref_q, atol=2e-3, rtol=2e-3):
        raise AssertionError("Pallas kernel does not match bf16-emulating reference")

    # Loose check vs. the exact f32 module math: bf16 storage of w2 and the
    # in-kernel bf16 rounding are intentional bandwidth optimizations, so the
    # tolerance is widened deliberately.
    ref = jax.block_until_ready(_reference(x502, x499, params))
    if not jnp.allclose(out, ref, atol=2e-2, rtol=2e-2):
        raise AssertionError("Pallas kernel deviates too far from f32 reference")

    print("KERNEL_OK")
</pallas_src>

<mosaic_0001>
module attributes {stable_mosaic.version = 11 : i64} {
  func.func @se_conv_bn_kernel(%arg0: i32, %arg1: memref<56x1xf32, #tpu.memory_space<vmem>>, %arg2: memref<56x1344xf32, #tpu.memory_space<vmem>>, %arg3: memref<1x1344xf32, #tpu.memory_space<vmem>>, %arg4: memref<1344x196xf32, #tpu.memory_space<vmem>>, %arg5: memref<224x1344xbf16, #tpu.memory_space<vmem>>, %arg6: memref<224x2xf32, #tpu.memory_space<vmem>>, %arg7: memref<224x196xf32, #tpu.memory_space<vmem>>) attributes {dimension_semantics = [#tpu.dimension_semantics<arbitrary>], iteration_bounds = array<i64: 1>, scalar_prefetch = 0 : i64, scratch_operands = 0 : i64, tpu.core_type = #tpu.core_type<tc>, window_params = [{pipeline_mode = #tpu.pipeline_mode<synchronous>, transform_indices = @transform_0, window_bounds = array<i64: 56, 1>}, {pipeline_mode = #tpu.pipeline_mode<synchronous>, transform_indices = @transform_1, window_bounds = array<i64: 56, 1344>}, {pipeline_mode = #tpu.pipeline_mode<synchronous>, transform_indices = @transform_2, window_bounds = array<i64: 1, 1344>}, {pipeline_mode = #tpu.pipeline_mode<synchronous>, transform_indices = @transform_3, window_bounds = array<i64: 1344, 196>}, {pipeline_mode = #tpu.pipeline_mode<synchronous>, transform_indices = @transform_4, window_bounds = array<i64: 224, 1344>}, {pipeline_mode = #tpu.pipeline_mode<synchronous>, transform_indices = @transform_5, window_bounds = array<i64: 224, 2>}, {pipeline_mode = #tpu.pipeline_mode<synchronous>, transform_indices = @transform_6, window_bounds = array<i64: 224, 196>}]} {
    %c0 = arith.constant 0 : index
    %c0_0 = arith.constant 0 : index
    %0 = vector.load %arg2[%c0, %c0_0] : memref<56x1344xf32, #tpu.memory_space<vmem>>, vector<56x1344xf32>
    %c0_1 = arith.constant 0 : index
    %c0_2 = arith.constant 0 : index
    %1 = vector.load %arg1[%c0_1, %c0_2] : memref<56x1xf32, #tpu.memory_space<vmem>>, vector<56x1xf32>
    %2 = vector.broadcast %1 : vector<56x1xf32> to vector<56x1344xf32>
    %3 = arith.mulf %0, %2 : vector<56x1344xf32>
    %cst = arith.constant dense<0.000000e+00> : vector<1344xf32>
    %4 = vector.multi_reduction <add>, %3, %cst [0] : vector<56x1344xf32> to vector<1344xf32>
    %5 = vector.shape_cast %4 : vector<1344xf32> to vector<1x1344xf32>
    %c0_3 = arith.constant 0 : index
    %c0_4 = arith.constant 0 : index
    %6 = vector.load %arg3[%c0_3, %c0_4] : memref<1x1344xf32, #tpu.memory_space<vmem>>, vector<1x1344xf32>
    %7 = arith.addf %5, %6 : vector<1x1344xf32>
    %8 = arith.negf %7 : vector<1x1344xf32>
    %9 = math.exp %8 : vector<1x1344xf32>
    %cst_5 = arith.constant 1.000000e+00 : f32
    %10 = vector.broadcast %cst_5 : f32 to vector<1x1344xf32>
    %11 = arith.addf %10, %9 : vector<1x1344xf32>
    %12 = arith.divf %10, %11 : vector<1x1344xf32>
    %c0_6 = arith.constant 0 : index
    %c0_7 = arith.constant 0 : index
    %13 = vector.load %arg5[%c0_6, %c0_7] : memref<224x1344xbf16, #tpu.memory_space<vmem>>, vector<224x1344xbf16>
    %14 = arith.extf %13 : vector<224x1344xbf16> to vector<224x1344xf32>
    %15 = vector.broadcast %12 : vector<1x1344xf32> to vector<224x1344xf32>
    %16 = arith.mulf %14, %15 : vector<224x1344xf32>
    %17 = arith.truncf %16 : vector<224x1344xf32> to vector<224x1344xbf16>
    %c0_8 = arith.constant 0 : index
    %c0_9 = arith.constant 0 : index
    %18 = vector.load %arg4[%c0_8, %c0_9] : memref<1344x196xf32, #tpu.memory_space<vmem>>, vector<1344x196xf32>
    %19 = arith.truncf %18 : vector<1344x196xf32> to vector<1344x196xbf16>
    %cst_10 = arith.constant dense<0.000000e+00> : vector<224x196xf32>
    %20 = tpu.matmul %17, %19, %cst_10 {dimension_numbers = #tpu.dot_dimension_numbers<[1], [0], [0], [1], [0, 0, 1, 1], [], []>} : vector<224x1344xbf16>, vector<1344x196xbf16>, vector<224x196xf32> -> vector<224x196xf32>
    %cst_11 = arith.constant dense<0.000000e+00> : vector<224xf32>
    %21 = vector.multi_reduction <add>, %20, %cst_11 [1] : vector<224x196xf32> to vector<224xf32>
    %22 = vector.shape_cast %21 : vector<224xf32> to vector<224x1xf32>
    %cst_12 = arith.constant 0.00510204071 : f32
    %23 = vector.broadcast %cst_12 : f32 to vector<224x1xf32>
    %24 = arith.mulf %22, %23 : vector<224x1xf32>
    %25 = vector.broadcast %24 : vector<224x1xf32> to vector<224x196xf32>
    %26 = arith.subf %20, %25 : vector<224x196xf32>
    %27 = arith.mulf %26, %26 : vector<224x196xf32>
    %cst_13 = arith.constant dense<0.000000e+00> : vector<224xf32>
    %28 = vector.multi_reduction <add>, %27, %cst_13 [1] : vector<224x196xf32> to vector<224xf32>
    %29 = vector.shape_cast %28 : vector<224xf32> to vector<224x1xf32>
    %cst_14 = arith.constant 0.00510204071 : f32
    %30 = vector.broadcast %cst_14 : f32 to vector<224x1xf32>
    %31 = arith.mulf %29, %30 : vector<224x1xf32>
    %c0_15 = arith.constant 0 : index
    %c0_16 = arith.constant 0 : index
    %32 = vector.load %arg6[%c0_15, %c0_16] : memref<224x2xf32, #tpu.memory_space<vmem>>, vector<224x2xf32>
    %33 = vector.extract_strided_slice %32 {offsets = [0, 0], sizes = [224, 1], strides = [1, 1]} : vector<224x2xf32> to vector<224x1xf32>
    %cst_17 = arith.constant 1.000000e-03 : f32
    %34 = vector.broadcast %cst_17 : f32 to vector<224x1xf32>
    %35 = arith.addf %31, %34 : vector<224x1xf32>
    %36 = math.rsqrt %35 : vector<224x1xf32>
    %37 = arith.mulf %33, %36 : vector<224x1xf32>
    %38 = vector.broadcast %37 : vector<224x1xf32> to vector<224x196xf32>
    %39 = arith.mulf %26, %38 : vector<224x196xf32>
    %40 = vector.extract_strided_slice %32 {offsets = [0, 1], sizes = [224, 1], strides = [1, 1]} : vector<224x2xf32> to vector<224x1xf32>
    %41 = vector.broadcast %40 : vector<224x1xf32> to vector<224x196xf32>
    %42 = arith.addf %39, %41 : vector<224x196xf32>
    %c0_18 = arith.constant 0 : index
    %c0_19 = arith.constant 0 : index
    %43 = vector.load %arg7[%c0_18, %c0_19] : memref<224x196xf32, #tpu.memory_space<vmem>>, vector<224x196xf32>
    tpu.vector_store %arg7[%c0_18, %c0_19], %42 {strides = array<i32>} : memref<224x196xf32, #tpu.memory_space<vmem>>, vector<224x196xf32>,
    return
  }
  func.func @transform_0(%arg0: i32) -> (i32, i32) {
    %c0_i32 = arith.constant 0 : i32
    %c0_i32_0 = arith.constant 0 : i32
    %c0_i32_1 = arith.constant 0 : i32
    return %c0_i32, %c0_i32_0 : i32, i32
  }
  func.func @transform_1(%arg0: i32) -> (i32, i32) {
    %c0_i32 = arith.constant 0 : i32
    %c0_i32_0 = arith.constant 0 : i32
    %c0_i32_1 = arith.constant 0 : i32
    return %c0_i32, %c0_i32_0 : i32, i32
  }
  func.func @transform_2(%arg0: i32) -> (i32, i32) {
    %c0_i32 = arith.constant 0 : i32
    %c0_i32_0 = arith.constant 0 : i32
    %c0_i32_1 = arith.constant 0 : i32
    return %c0_i32, %c0_i32_0 : i32, i32
  }
  func.func @transform_3(%arg0: i32) -> (i32, i32) {
    %c0_i32 = arith.constant 0 : i32
    %c0_i32_0 = arith.constant 0 : i32
    %c0_i32_1 = arith.constant 0 : i32
    return %c0_i32, %c0_i32_0 : i32, i32
  }
  func.func @transform_4(%arg0: i32) -> (i32, i32) {
    %c0_i32 = arith.constant 0 : i32
    %c0_i32_0 = arith.constant 0 : i32
    %c0_i32_1 = arith.constant 0 : i32
    return %c0_i32, %c0_i32_0 : i32, i32
  }
  func.func @transform_5(%arg0: i32) -> (i32, i32) {
    %c0_i32 = arith.constant 0 : i32
    %c0_i32_0 = arith.constant 0 : i32
    %c0_i32_1 = arith.constant 0 : i32
    return %c0_i32, %c0_i32_0 : i32, i32
  }
  func.func @transform_6(%arg0: i32) -> (i32, i32) {
    %c0_i32 = arith.constant 0 : i32
    %c0_i32_0 = arith.constant 0 : i32
    %c0_i32_1 = arith.constant 0 : i32
    return %c0_i32, %c0_i32_0 : i32, i32
  }
}

</mosaic_0001>

<llo_original>
// kernel: module_m_forward.1
$region0: #{module_m_forward.1}
  #allocation0 [shape = 'u32[]', space=smem, size = 0x4, offset = 0x4, fixed_abs, tag = 'smem constant byte address 0x4 - core index']
  #allocation1 [shape = 'u32[144,128]{1,0:T(1,128)}', space=vmem, size = 0x12000, scoped, tag = 'internal scratch']
  %s0 = inlined_call_operand.vmem [shape: f32[56,1], index: 0, kind: input, shape index: {}]
  %s1 = inlined_call_operand.vmem [shape: f32[56,1344], index: 1, kind: input, shape index: {}]
  %s2 = inlined_call_operand.vmem [shape: f32[1,1344], index: 2, kind: input, shape index: {}]
  %s3 = inlined_call_operand.vmem [shape: f32[1344,196], index: 3, kind: input, shape index: {}]
  %s4 = inlined_call_operand.vmem [shape: bf16[224,1344], index: 4, kind: input, shape index: {}]
  %s5 = inlined_call_operand.vmem [shape: f32[224,2], index: 5, kind: input, shape index: {}]
  %s6 = inlined_call_operand.vmem [shape: f32[224,196], index: 6, kind: output, shape index: {}]
  %s7 = sld [smem:[#allocation0]]
  $region34: #{module_m_forward.1} parent=0
    _
  %s9 = ssub.s32 1, %s7
  %s10 = scalar_select 0, %s9, %s7
  // Predicated region
  $region2: #{module_m_forward.1} parent=0 // pred_check
    _
  $region3: #{module_m_forward.1} parent=0 // pred_check_branch
    %12 = sbr.rel (0) target = $region5
  $region4: #{module_m_forward.1} parent=0 // pred_region
    _
  $region5: #{module_m_forward.1} parent=0 // pred_fallthru
    _
  // Predicated region
  $region6: #{module_m_forward.1} parent=0 // pred_check
    _
  $region7: #{module_m_forward.1} parent=0 // pred_check_branch
    %14 = sbr.rel (0) target = $region9
  $region8: #{module_m_forward.1} parent=0 // pred_region
    _
  $region9: #{module_m_forward.1} parent=0 // pred_fallthru
    _
  // Predicated region
  $region10: #{module_m_forward.1} parent=0 // pred_check
    _
  $region11: #{module_m_forward.1} parent=0 // pred_check_branch
    %16 = sbr.rel (0) target = $region13
  $region12: #{module_m_forward.1} parent=0 // pred_region
    _
  $region13: #{module_m_forward.1} parent=0 // pred_fallthru
    _
  // Predicated region
  $region14: #{module_m_forward.1} parent=0 // pred_check
    _
  $region15: #{module_m_forward.1} parent=0 // pred_check_branch
    %18 = sbr.rel (0) target = $region17
  $region16: #{module_m_forward.1} parent=0 // pred_region
    _
  $region17: #{module_m_forward.1} parent=0 // pred_fallthru
    _
  // Predicated region
  $region18: #{module_m_forward.1} parent=0 // pred_check
    _
  $region19: #{module_m_forward.1} parent=0 // pred_check_branch
    %20 = sbr.rel (0) target = $region21
  $region20: #{module_m_forward.1} parent=0 // pred_region
    _
  $region21: #{module_m_forward.1} parent=0 // pred_fallthru
    _
  // Predicated region
  $region22: #{module_m_forward.1} parent=0 // pred_check
    _
  $region23: #{module_m_forward.1} parent=0 // pred_check_branch
    %22 = sbr.rel (0) target = $region25
  $region24: #{module_m_forward.1} parent=0 // pred_region
    _
  $region25: #{module_m_forward.1} parent=0 // pred_fallthru
    _
  %v24 = vld [vmem:[%s1] sm:$0xff]
  %v25 = vld [vmem:[%s1 + $0x8] sm:$0xff]
  %v26 = vld [vmem:[%s1 + $0x10] sm:$0xff]
  %v27 = vld [vmem:[%s1 + $0x18] sm:$0xff]
  %v28 = vld [vmem:[%s1 + $0x20] sm:$0xff]
  %v29 = vld [vmem:[%s1 + $0x28] sm:$0xff]
  %v30 = vld [vmem:[%s1 + $0x30] sm:$0xff]
  %v31 = vld [vmem:[%s1 + $0x38] sm:$0xff]
  %v32 = vld [vmem:[%s1 + $0x40] sm:$0xff]
  %v33 = vld [vmem:[%s1 + $0x48] sm:$0xff]
  %v34 = vld [vmem:[%s1 + $0x50] sm:$0xff]
  %v35 = vld [vmem:[%s1 + $0x58] sm:$0xff]
  %v36 = vld [vmem:[%s1 + $0x60] sm:$0xff]
  %v37 = vld [vmem:[%s1 + $0x68] sm:$0xff]
  %v38 = vld [vmem:[%s1 + $0x70] sm:$0xff]
  %v39 = vld [vmem:[%s1 + $0x78] sm:$0xff]
  %v40 = vld [vmem:[%s1 + $0x80] sm:$0xff]
  %v41 = vld [vmem:[%s1 + $0x88] sm:$0xff]
  %v42 = vld [vmem:[%s1 + $0x90] sm:$0xff]
  %v43 = vld [vmem:[%s1 + $0x98] sm:$0xff]
  %v44 = vld [vmem:[%s1 + $0xa0] sm:$0xff]
  %v45 = vld [vmem:[%s1 + $0xa8] sm:$0xff]
  %v46 = vld [vmem:[%s1 + $0xb0] sm:$0xff]
  %v47 = vld [vmem:[%s1 + $0xb8] sm:$0xff]
  %v48 = vld [vmem:[%s1 + $0xc0] sm:$0xff]
  %v49 = vld [vmem:[%s1 + $0xc8] sm:$0xff]
  %v50 = vld [vmem:[%s1 + $0xd0] sm:$0xff]
  %v51 = vld [vmem:[%s1 + $0xd8] sm:$0xff]
  %v52 = vld [vmem:[%s1 + $0xe0] sm:$0xff]
  %v53 = vld [vmem:[%s1 + $0xe8] sm:$0xff]
  %v54 = vld [vmem:[%s1 + $0xf0] sm:$0xff]
  %v55 = vld [vmem:[%s1 + $0xf8] sm:$0xff]
  %v56 = vld [vmem:[%s1 + $0x100] sm:$0xff]
  %v57 = vld [vmem:[%s1 + $0x108] sm:$0xff]
  %v58 = vld [vmem:[%s1 + $0x110] sm:$0xff]
  %v59 = vld [vmem:[%s1 + $0x118] sm:$0xff]
  %v60 = vld [vmem:[%s1 + $0x120] sm:$0xff]
  %v61 = vld [vmem:[%s1 + $0x128] sm:$0xff]
  %v62 = vld [vmem:[%s1 + $0x130] sm:$0xff]
  %v63 = vld [vmem:[%s1 + $0x138] sm:$0xff]
  %v64 = vld [vmem:[%s1 + $0x140] sm:$0xff]
  %v65 = vld [vmem:[%s1 + $0x148] sm:$0xff]
  %v66 = vld [vmem:[%s1 + $0x150] sm:$0xff]
  %v67 = vld [vmem:[%s1 + $0x158] sm:$0xff]
  %v68 = vld [vmem:[%s1 + $0x160] sm:$0xff]
  %v69 = vld [vmem:[%s1 + $0x168] sm:$0xff]
  %v70 = vld [vmem:[%s1 + $0x170] sm:$0xff]
  %v71 = vld [vmem:[%s1 + $0x178] sm:$0xff]
  %v72 = vld [vmem:[%s1 + $0x180] sm:$0xff]
  %v73 = vld [vmem:[%s1 + $0x188] sm:$0xff]
  %v74 = vld [vmem:[%s1 + $0x190] sm:$0xff]
  %v75 = vld [vmem:[%s1 + $0x198] sm:$0xff]
  %v76 = vld [vmem:[%s1 + $0x1a0] sm:$0xff]
  %v77 = vld [vmem:[%s1 + $0x1a8] sm:$0xff]
  %v78 = vld [vmem:[%s1 + $0x1b0] sm:$0xff]
  %v79 = vld [vmem:[%s1 + $0x1b8] sm:$0xff]
  %v80 = vld [vmem:[%s1 + $0x1c0] sm:$0xff]
  %v81 = vld [vmem:[%s1 + $0x1c8] sm:$0xff]
  %v82 = vld [vmem:[%s1 + $0x1d0] sm:$0xff]
  %v83 = vld [vmem:[%s1 + $0x1d8] sm:$0xff]
  %v84 = vld [vmem:[%s1 + $0x1e0] sm:$0xff]
  %v85 = vld [vmem:[%s1 + $0x1e8] sm:$0xff]
  %v86 = vld [vmem:[%s1 + $0x1f0] sm:$0xff]
  %v87 = vld [vmem:[%s1 + $0x1f8] sm:$0xff]
  %v88 = vld [vmem:[%s1 + $0x200] sm:$0xff]
  %v89 = vld [vmem:[%s1 + $0x208] sm:$0xff]
  %v90 = vld [vmem:[%s1 + $0x210] sm:$0xff]
  %v91 = vld [vmem:[%s1 + $0x218] sm:$0xff]
  %v92 = vld [vmem:[%s1 + $0x220] sm:$0xff]
  %v93 = vld [vmem:[%s1 + $0x228] sm:$0xff]
  %v94 = vld [vmem:[%s1 + $0x230] sm:$0xff]
  %v95 = vld [vmem:[%s1 + $0x238] sm:$0xff]
  %v96 = vld [vmem:[%s1 + $0x240] sm:$0xff]
  %v97 = vld [vmem:[%s1 + $0x248] sm:$0xff]
  %v98 = vld [vmem:[%s1 + $0x250] sm:$0xff]
  %v99 = vld [vmem:[%s1 + $0x258] sm:$0xff]
  %v100 = vld [vmem:[%s1 + $0x260] sm:$0xff]
  %v101 = vld [vmem:[%s0] sm:$0xff]
  %v102 = vld [vmem:[%s0 + $0x8] sm:$0xff]
  %v103 = vld [vmem:[%s0 + $0x10] sm:$0xff]
  %v104 = vld [vmem:[%s0 + $0x18] sm:$0xff]
  %v105 = vld [vmem:[%s0 + $0x20] sm:$0xff]
  %v106 = vld [vmem:[%s0 + $0x28] sm:$0xff]
  %v107 = vld [vmem:[%s0 + $0x30] sm:$0xff]
  %109 = vset.pattern.permute.xlu0 0
  %110 = vperm.xlu0 %109, %v101
  %v111 = vpop.permute.xlu0 %110
  %114 = vset.pattern.permute.xlu0 0
  %115 = vperm.xlu0 %114, %v102
  %v116 = vpop.permute.xlu0 %115
  %119 = vset.pattern.permute.xlu0 0
  %120 = vperm.xlu0 %119, %v103
  %v121 = vpop.permute.xlu0 %120
  %124 = vset.pattern.permute.xlu0 0
  %125 = vperm.xlu0 %124, %v104
  %v126 = vpop.permute.xlu0 %125
  %129 = vset.pattern.permute.xlu0 0
  %130 = vperm.xlu0 %129, %v105
  %v131 = vpop.permute.xlu0 %130
  %134 = vset.pattern.permute.xlu0 0
  %135 = vperm.xlu0 %134, %v106
  %v136 = vpop.permute.xlu0 %135
  %139 = vset.pattern.permute.xlu0 0
  %140 = vperm.xlu0 %139, %v107
  %v141 = vpop.permute.xlu0 %140
  %v143 = vmul.f32 %v24, %v111
  %v144 = vmul.f32 %v25, %v111
  %v145 = vmul.f32 %v26, %v111
  %v146 = vmul.f32 %v27, %v111
  %v147 = vmul.f32 %v28, %v111
  %v148 = vmul.f32 %v29, %v111
  %v149 = vmul.f32 %v30, %v111
  %v150 = vmul.f32 %v31, %v111
  %v151 = vmul.f32 %v32, %v111
  %v152 = vmul.f32 %v33, %v111
  %v153 = vmul.f32 %v34, %v111
  %v154 = vmul.f32 %v35, %v116
  %v155 = vmul.f32 %v36, %v116
  %v156 = vmul.f32 %v37, %v116
  %v157 = vmul.f32 %v38, %v116
  %v158 = vmul.f32 %v39, %v116
  %v159 = vmul.f32 %v40, %v116
  %v160 = vmul.f32 %v41, %v116
  %v161 = vmul.f32 %v42, %v116
  %v162 = vmul.f32 %v43, %v116
  %v163 = vmul.f32 %v44, %v116
  %v164 = vmul.f32 %v45, %v116
  %v165 = vmul.f32 %v46, %v121
  %v166 = vmul.f32 %v47, %v121
  %v167 = vmul.f32 %v48, %v121
  %v168 = vmul.f32 %v49, %v121
  %v169 = vmul.f32 %v50, %v121
  %v170 = vmul.f32 %v51, %v121
  %v171 = vmul.f32 %v52, %v121
  %v172 = vmul.f32 %v53, %v121
  %v173 = vmul.f32 %v54, %v121
  %v174 = vmul.f32 %v55, %v121
  %v175 = vmul.f32 %v56, %v121
  %v176 = vmul.f32 %v57, %v126
  %v177 = vmul.f32 %v58, %v126
  %v178 = vmul.f32 %v59, %v126
  %v179 = vmul.f32 %v60, %v126
  %v180 = vmul.f32 %v61, %v126
  %v181 = vmul.f32 %v62, %v126
  %v182 = vmul.f32 %v63, %v126
  %v183 = vmul.f32 %v64, %v126
  %v184 = vmul.f32 %v65, %v126
  %v185 = vmul.f32 %v66, %v126
  %v186 = vmul.f32 %v67, %v126
  %v187 = vmul.f32 %v68, %v131
  %v188 = vmul.f32 %v69, %v131
  %v189 = vmul.f32 %v70, %v131
  %v190 = vmul.f32 %v71, %v131
  %v191 = vmul.f32 %v72, %v131
  %v192 = vmul.f32 %v73, %v131
  %v193 = vmul.f32 %v74, %v131
  %v194 = vmul.f32 %v75, %v131
  %v195 = vmul.f32 %v76, %v131
  %v196 = vmul.f32 %v77, %v131
  %v197 = vmul.f32 %v78, %v131
  %v198 = vmul.f32 %v79, %v136
  %v199 = vmul.f32 %v80, %v136
  %v200 = vmul.f32 %v81, %v136
  %v201 = vmul.f32 %v82, %v136
  %v202 = vmul.f32 %v83, %v136
  %v203 = vmul.f32 %v84, %v136
  %v204 = vmul.f32 %v85, %v136
  %v205 = vmul.f32 %v86, %v136
  %v206 = vmul.f32 %v87, %v136
  %v207 = vmul.f32 %v88, %v136
  %v208 = vmul.f32 %v89, %v136
  %v209 = vmul.f32 %v90, %v141
  %v210 = vmul.f32 %v91, %v141
  %v211 = vmul.f32 %v92, %v141
  %v212 = vmul.f32 %v93, %v141
  %v213 = vmul.f32 %v94, %v141
  %v214 = vmul.f32 %v95, %v141
  %v215 = vmul.f32 %v96, %v141
  %v216 = vmul.f32 %v97, %v141
  %v217 = vmul.f32 %v98, %v141
  %v218 = vmul.f32 %v99, %v141
  %v219 = vmul.f32 %v100, %v141
  %v220 = vadd.f32 %v143, %v154
  %v221 = vadd.f32 %v220, %v165
  %v222 = vadd.f32 %v221, %v176
  %v223 = vadd.f32 %v222, %v187
  %v224 = vadd.f32 %v223, %v198
  %v225 = vadd.f32 %v224, %v209
  %v226 = vrot.slane %v225, 4
  %v227 = vadd.f32 %v225, %v226
  %v228 = vrot.slane %v227, 2
  %v229 = vadd.f32 %v227, %v228
  %v230 = vrot.slane %v229, 1
  %v231 = vadd.f32 %v229, %v230
  %v232 = vadd.f32 %v144, %v155
  %v233 = vadd.f32 %v232, %v166
  %v234 = vadd.f32 %v233, %v177
  %v235 = vadd.f32 %v234, %v188
  %v236 = vadd.f32 %v235, %v199
  %v237 = vadd.f32 %v236, %v210
  %v238 = vrot.slane %v237, 4
  %v239 = vadd.f32 %v237, %v238
  %v240 = vrot.slane %v239, 2
  %v241 = vadd.f32 %v239, %v240
  %v242 = vrot.slane %v241, 1
  %v243 = vadd.f32 %v241, %v242
  %v244 = vadd.f32 %v145, %v156
  %v245 = vadd.f32 %v244, %v167
  %v246 = vadd.f32 %v245, %v178
  %v247 = vadd.f32 %v246, %v189
  %v248 = vadd.f32 %v247, %v200
  %v249 = vadd.f32 %v248, %v211
  %v250 = vrot.slane %v249, 4
  %v251 = vadd.f32 %v249, %v250
  %v252 = vrot.slane %v251, 2
  %v253 = vadd.f32 %v251, %v252
  %v254 = vrot.slane %v253, 1
  %v255 = vadd.f32 %v253, %v254
  %v256 = vadd.f32 %v146, %v157
  %v257 = vadd.f32 %v256, %v168
  %v258 = vadd.f32 %v257, %v179
  %v259 = vadd.f32 %v258, %v190
  %v260 = vadd.f32 %v259, %v201
  %v261 = vadd.f32 %v260, %v212
  %v262 = vrot.slane %v261, 4
  %v263 = vadd.f32 %v261, %v262
  %v264 = vrot.slane %v263, 2
  %v265 = vadd.f32 %v263, %v264
  %v266 = vrot.slane %v265, 1
  %v267 = vadd.f32 %v265, %v266
  %v268 = vadd.f32 %v147, %v158
  %v269 = vadd.f32 %v268, %v169
  %v270 = vadd.f32 %v269, %v180
  %v271 = vadd.f32 %v270, %v191
  %v272 = vadd.f32 %v271, %v202
  %v273 = vadd.f32 %v272, %v213
  %v274 = vrot.slane %v273, 4
  %v275 = vadd.f32 %v273, %v274
  %v276 = vrot.slane %v275, 2
  %v277 = vadd.f32 %v275, %v276
  %v278 = vrot.slane %v277, 1
  %v279 = vadd.f32 %v277, %v278
  %v280 = vadd.f32 %v148, %v159
  %v281 = vadd.f32 %v280, %v170
  %v282 = vadd.f32 %v281, %v181
  %v283 = vadd.f32 %v282, %v192
  %v284 = vadd.f32 %v283, %v203
  %v285 = vadd.f32 %v284, %v214
  %v286 = vrot.slane %v285, 4
  %v287 = vadd.f32 %v285, %v286
  %v288 = vrot.slane %v287, 2
  %v289 = vadd.f32 %v287, %v288
  %v290 = vrot.slane %v289, 1
  %v291 = vadd.f32 %v289, %v290
  %v292 = vadd.f32 %v149, %v160
  %v293 = vadd.f32 %v292, %v171
  %v294 = vadd.f32 %v293, %v182
  %v295 = vadd.f32 %v294, %v193
  %v296 = vadd.f32 %v295, %v204
  %v297 = vadd.f32 %v296, %v215
  %v298 = vrot.slane %v297, 4
  %v299 = vadd.f32 %v297, %v298
  %v300 = vrot.slane %v299, 2
  %v301 = vadd.f32 %v299, %v300
  %v302 = vrot.slane %v301, 1
  %v303 = vadd.f32 %v301, %v302
  %v304 = vadd.f32 %v150, %v161
  %v305 = vadd.f32 %v304, %v172
  %v306 = vadd.f32 %v305, %v183
  %v307 = vadd.f32 %v306, %v194
  %v308 = vadd.f32 %v307, %v205
  %v309 = vadd.f32 %v308, %v216
  %v310 = vrot.slane %v309, 4
  %v311 = vadd.f32 %v309, %v310
  %v312 = vrot.slane %v311, 2
  %v313 = vadd.f32 %v311, %v312
  %v314 = vrot.slane %v313, 1
  %v315 = vadd.f32 %v313, %v314
  %v316 = vadd.f32 %v151, %v162
  %v317 = vadd.f32 %v316, %v173
  %v318 = vadd.f32 %v317, %v184
  %v319 = vadd.f32 %v318, %v195
  %v320 = vadd.f32 %v319, %v206
  %v321 = vadd.f32 %v320, %v217
  %v322 = vrot.slane %v321, 4
  %v323 = vadd.f32 %v321, %v322
  %v324 = vrot.slane %v323, 2
  %v325 = vadd.f32 %v323, %v324
  %v326 = vrot.slane %v325, 1
  %v327 = vadd.f32 %v325, %v326
  %v328 = vadd.f32 %v152, %v163
  %v329 = vadd.f32 %v328, %v174
  %v330 = vadd.f32 %v329, %v185
  %v331 = vadd.f32 %v330, %v196
  %v332 = vadd.f32 %v331, %v207
  %v333 = vadd.f32 %v332, %v218
  %v334 = vrot.slane %v333, 4
  %v335 = vadd.f32 %v333, %v334
  %v336 = vrot.slane %v335, 2
  %v337 = vadd.f32 %v335, %v336
  %v338 = vrot.slane %v337, 1
  %v339 = vadd.f32 %v337, %v338
  %vm340 = vcmask 523264
  %v341 = vsel %vm340, %v153, 0.0
  %v342 = vsel %vm340, %v164, 0.0
  %v343 = vadd.f32 %v341, %v342
  %v344 = vsel %vm340, %v175, 0.0
  %v345 = vadd.f32 %v343, %v344
  %v346 = vsel %vm340, %v186, 0.0
  %v347 = vadd.f32 %v345, %v346
  %v348 = vsel %vm340, %v197, 0.0
  %v349 = vadd.f32 %v347, %v348
  %v350 = vsel %vm340, %v208, 0.0
  %v351 = vadd.f32 %v349, %v350
  %v352 = vsel %vm340, %v219, 0.0
  %v353 = vadd.f32 %v351, %v352
  %v354 = vrot.slane %v353, 4
  %v355 = vadd.f32 %v353, %v354
  %v356 = vrot.slane %v355, 2
  %v357 = vadd.f32 %v355, %v356
  %v358 = vrot.slane %v357, 1
  %v359 = vadd.f32 %v357, %v358
  %v360 = vld [vmem:[%s2] sm:$0xff]
  %v361 = vld [vmem:[%s2 + $0x8] sm:$0x7]
  %v364 = vlaneseq
  %v365 = vshrl.u32 %v364, 7
  %v366 = vsub.s32 0, %v365
  %v367 = vrot.slane %v360, %v366
  %v368 = vlaneseq
  %v369 = vshrl.u32 %v368, 7
  %v370 = vsub.s32 1, %v369
  %v371 = vrot.slane %v360, %v370
  %v372 = vlaneseq
  %v373 = vshrl.u32 %v372, 7
  %v374 = vsub.s32 2, %v373
  %v375 = vrot.slane %v360, %v374
  %v376 = vlaneseq
  %v377 = vshrl.u32 %v376, 7
  %v378 = vsub.s32 3, %v377
  %v379 = vrot.slane %v360, %v378
  %v380 = vlaneseq
  %v381 = vshrl.u32 %v380, 7
  %v382 = vsub.s32 4, %v381
  %v383 = vrot.slane %v360, %v382
  %v384 = vlaneseq
  %v385 = vshrl.u32 %v384, 7
  %v386 = vsub.s32 5, %v385
  %v387 = vrot.slane %v360, %v386
  %v388 = vlaneseq
  %v389 = vshrl.u32 %v388, 7
  %v390 = vsub.s32 6, %v389
  %v391 = vrot.slane %v360, %v390
  %v392 = vlaneseq
  %v393 = vshrl.u32 %v392, 7
  %v394 = vsub.s32 7, %v393
  %v395 = vrot.slane %v360, %v394
  %v396 = vlaneseq
  %v397 = vshrl.u32 %v396, 7
  %v398 = vsub.s32 0, %v397
  %v399 = vrot.slane %v361, %v398
  %v400 = vlaneseq
  %v401 = vshrl.u32 %v400, 7
  %v402 = vsub.s32 1, %v401
  %v403 = vrot.slane %v361, %v402
  %v404 = vlaneseq
  %v405 = vshrl.u32 %v404, 7
  %v406 = vsub.s32 2, %v405
  %v407 = vrot.slane %v361, %v406
  %v419 = vadd.f32 %v231, %v367
  %v420 = vadd.f32 %v243, %v371
  %v421 = vadd.f32 %v255, %v375
  %v422 = vadd.f32 %v267, %v379
  %v423 = vadd.f32 %v279, %v383
  %v424 = vadd.f32 %v291, %v387
  %v425 = vadd.f32 %v303, %v391
  %v426 = vadd.f32 %v315, %v395
  %v427 = vadd.f32 %v327, %v399
  %v428 = vadd.f32 %v339, %v403
  %v429 = vadd.f32 %v359, %v407
  %v430 = vxor.u32 %v419, 2147483648
  %v431 = vxor.u32 %v420, 2147483648
  %v432 = vxor.u32 %v421, 2147483648
  %v433 = vxor.u32 %v422, 2147483648
  %v434 = vxor.u32 %v423, 2147483648
  %v435 = vxor.u32 %v424, 2147483648
  %v436 = vxor.u32 %v425, 2147483648
  %v437 = vxor.u32 %v426, 2147483648
  %v438 = vxor.u32 %v427, 2147483648
  %v439 = vxor.u32 %v428, 2147483648
  %v440 = vxor.u32 %v429, 2147483648
  %v441 = vmul.f32 %v430, 1.442695
  %v442 = vpow.pop %v441
  %v443 = vmul.f32 %v431, 1.442695
  %v444 = vpow.pop %v443
  %v445 = vmul.f32 %v432, 1.442695
  %v446 = vpow.pop %v445
  %v447 = vmul.f32 %v433, 1.442695
  %v448 = vpow.pop %v447
  %v449 = vmul.f32 %v434, 1.442695
  %v450 = vpow.pop %v449
  %v451 = vmul.f32 %v435, 1.442695
  %v452 = vpow.pop %v451
  %v453 = vmul.f32 %v436, 1.442695
  %v454 = vpow.pop %v453
  %v455 = vmul.f32 %v437, 1.442695
  %v456 = vpow.pop %v455
  %v457 = vmul.f32 %v438, 1.442695
  %v458 = vpow.pop %v457
  %v459 = vmul.f32 %v439, 1.442695
  %v460 = vpow.pop %v459
  %v461 = vmul.f32 %v440, 1.442695
  %v462 = vpow.pop %v461
  %v463 = vadd.f32 %v442, 1.0
  %v464 = vadd.f32 %v444, 1.0
  %v465 = vadd.f32 %v446, 1.0
  %v466 = vadd.f32 %v448, 1.0
  %v467 = vadd.f32 %v450, 1.0
  %v468 = vadd.f32 %v452, 1.0
  %v469 = vadd.f32 %v454, 1.0
  %v470 = vadd.f32 %v456, 1.0
  %v471 = vadd.f32 %v458, 1.0
  %v472 = vadd.f32 %v460, 1.0
  %v473 = vadd.f32 %v462, 1.0
  %v474 = vrcp.pop %v463
  %v475 = vmul.f32 1.0, %v474
  %v476 = vrcp.pop %v464
  %v477 = vmul.f32 1.0, %v476
  %v478 = vrcp.pop %v465
  %v479 = vmul.f32 1.0, %v478
  %v480 = vrcp.pop %v466
  %v481 = vmul.f32 1.0, %v480
  %v482 = vrcp.pop %v467
  %v483 = vmul.f32 1.0, %v482
  %v484 = vrcp.pop %v468
  %v485 = vmul.f32 1.0, %v484
  %v486 = vrcp.pop %v469
  %v487 = vmul.f32 1.0, %v486
  %v488 = vrcp.pop %v470
  %v489 = vmul.f32 1.0, %v488
  %v490 = vrcp.pop %v471
  %v491 = vmul.f32 1.0, %v490
  %v492 = vrcp.pop %v472
  %v493 = vmul.f32 1.0, %v492
  %v494 = vrcp.pop %v473
  %v495 = vmul.f32 1.0, %v494
  %v496 = vld [vmem:[%s4] sm:$0xff]
  %v497 = vld [vmem:[%s4 + $0x8] sm:$0xff]
  %v498 = vld [vmem:[%s4 + $0x10] sm:$0xff]
  %v499 = vld [vmem:[%s4 + $0x18] sm:$0xff]
  %v500 = vld [vmem:[%s4 + $0x20] sm:$0xff]
  %v501 = vld [vmem:[%s4 + $0x28] sm:$0xf]
  %v502 = vld [vmem:[%s4 + $0x2c] sm:$0xff]
  %v503 = vld [vmem:[%s4 + $0x34] sm:$0xff]
  %v504 = vld [vmem:[%s4 + $0x3c] sm:$0xff]
  %v505 = vld [vmem:[%s4 + $0x44] sm:$0xff]
  %v506 = vld [vmem:[%s4 + $0x4c] sm:$0xff]
  %v507 = vld [vmem:[%s4 + $0x54] sm:$0xf]
  %v508 = vld [vmem:[%s4 + $0x58] sm:$0xff]
  %v509 = vld [vmem:[%s4 + $0x60] sm:$0xff]
  %v510 = vld [vmem:[%s4 + $0x68] sm:$0xff]
  %v511 = vld [vmem:[%s4 + $0x70] sm:$0xff]
  %v512 = vld [vmem:[%s4 + $0x78] sm:$0xff]
  %v513 = vld [vmem:[%s4 + $0x80] sm:$0xf]
  %v514 = vld [vmem:[%s4 + $0x84] sm:$0xff]
  %v515 = vld [vmem:[%s4 + $0x8c] sm:$0xff]
  %v516 = vld [vmem:[%s4 + $0x94] sm:$0xff]
  %v517 = vld [vmem:[%s4 + $0x9c] sm:$0xff]
  %v518 = vld [vmem:[%s4 + $0xa4] sm:$0xff]
  %v519 = vld [vmem:[%s4 + $0xac] sm:$0xf]
  %v520 = vld [vmem:[%s4 + $0xb0] sm:$0xff]
  %v521 = vld [vmem:[%s4 + $0xb8] sm:$0xff]
  %v522 = vld [vmem:[%s4 + $0xc0] sm:$0xff]
  %v523 = vld [vmem:[%s4 + $0xc8] sm:$0xff]
  %v524 = vld [vmem:[%s4 + $0xd0] sm:$0xff]
  %v525 = vld [vmem:[%s4 + $0xd8] sm:$0xf]
  %v526 = vld [vmem:[%s4 + $0xdc] sm:$0xff]
  %v527 = vld [vmem:[%s4 + $0xe4] sm:$0xff]
  %v528 = vld [vmem:[%s4 + $0xec] sm:$0xff]
  %v529 = vld [vmem:[%s4 + $0xf4] sm:$0xff]
  %v530 = vld [vmem:[%s4 + $0xfc] sm:$0xff]
  %v531 = vld [vmem:[%s4 + $0x104] sm:$0xf]
  %v532 = vld [vmem:[%s4 + $0x108] sm:$0xff]
  %v533 = vld [vmem:[%s4 + $0x110] sm:$0xff]
  %v534 = vld [vmem:[%s4 + $0x118] sm:$0xff]
  %v535 = vld [vmem:[%s4 + $0x120] sm:$0xff]
  %v536 = vld [vmem:[%s4 + $0x128] sm:$0xff]
  %v537 = vld [vmem:[%s4 + $0x130] sm:$0xf]
  %v538 = vld [vmem:[%s4 + $0x134] sm:$0xff]
  %v539 = vld [vmem:[%s4 + $0x13c] sm:$0xff]
  %v540 = vld [vmem:[%s4 + $0x144] sm:$0xff]
  %v541 = vld [vmem:[%s4 + $0x14c] sm:$0xff]
  %v542 = vld [vmem:[%s4 + $0x154] sm:$0xff]
  %v543 = vld [vmem:[%s4 + $0x15c] sm:$0xf]
  %v544 = vld [vmem:[%s4 + $0x160] sm:$0xff]
  %v545 = vld [vmem:[%s4 + $0x168] sm:$0xff]
  %v546 = vld [vmem:[%s4 + $0x170] sm:$0xff]
  %v547 = vld [vmem:[%s4 + $0x178] sm:$0xff]
  %v548 = vld [vmem:[%s4 + $0x180] sm:$0xff]
  %v549 = vld [vmem:[%s4 + $0x188] sm:$0xf]
  %v550 = vld [vmem:[%s4 + $0x18c] sm:$0xff]
  %v551 = vld [vmem:[%s4 + $0x194] sm:$0xff]
  %v552 = vld [vmem:[%s4 + $0x19c] sm:$0xff]
  %v553 = vld [vmem:[%s4 + $0x1a4] sm:$0xff]
  %v554 = vld [vmem:[%s4 + $0x1ac] sm:$0xff]
  %v555 = vld [vmem:[%s4 + $0x1b4] sm:$0xf]
  %v556 = vld [vmem:[%s4 + $0x1b8] sm:$0xff]
  %v557 = vld [vmem:[%s4 + $0x1c0] sm:$0xff]
  %v558 = vld [vmem:[%s4 + $0x1c8] sm:$0xff]
  %v559 = vld [vmem:[%s4 + $0x1d0] sm:$0xff]
  %v560 = vld [vmem:[%s4 + $0x1d8] sm:$0xff]
  %v561 = vld [vmem:[%s4 + $0x1e0] sm:$0xf]
  %v562 = vld [vmem:[%s4 + $0x1e4] sm:$0xff]
  %v563 = vld [vmem:[%s4 + $0x1ec] sm:$0xff]
  %v564 = vld [vmem:[%s4 + $0x1f4] sm:$0xff]
  %v565 = vld [vmem:[%s4 + $0x1fc] sm:$0xff]
  %v566 = vld [vmem:[%s4 + $0x204] sm:$0xff]
  %v567 = vld [vmem:[%s4 + $0x20c] sm:$0xf]
  %v568 = vld [vmem:[%s4 + $0x210] sm:$0xff]
  %v569 = vld [vmem:[%s4 + $0x218] sm:$0xff]
  %v570 = vld [vmem:[%s4 + $0x220] sm:$0xff]
  %v571 = vld [vmem:[%s4 + $0x228] sm:$0xff]
  %v572 = vld [vmem:[%s4 + $0x230] sm:$0xff]
  %v573 = vld [vmem:[%s4 + $0x238] sm:$0xf]
  %v574 = vld [vmem:[%s4 + $0x23c] sm:$0xff]
  %v575 = vld [vmem:[%s4 + $0x244] sm:$0xff]
  %v576 = vld [vmem:[%s4 + $0x24c] sm:$0xff]
  %v577 = vld [vmem:[%s4 + $0x254] sm:$0xff]
  %v578 = vld [vmem:[%s4 + $0x25c] sm:$0xff]
  %v579 = vld [vmem:[%s4 + $0x264] sm:$0xf]
  %v580 = vld [vmem:[%s4 + $0x268] sm:$0xff]
  %v581 = vld [vmem:[%s4 + $0x270] sm:$0xff]
  %v582 = vld [vmem:[%s4 + $0x278] sm:$0xff]
  %v583 = vld [vmem:[%s4 + $0x280] sm:$0xff]
  %v584 = vld [vmem:[%s4 + $0x288] sm:$0xff]
  %v585 = vld [vmem:[%s4 + $0x290] sm:$0xf]
  %v586 = vld [vmem:[%s4 + $0x294] sm:$0xff]
  %v587 = vld [vmem:[%s4 + $0x29c] sm:$0xff]
  %v588 = vld [vmem:[%s4 + $0x2a4] sm:$0xff]
  %v589 = vld [vmem:[%s4 + $0x2ac] sm:$0xff]
  %v590 = vld [vmem:[%s4 + $0x2b4] sm:$0xff]
  %v591 = vld [vmem:[%s4 + $0x2bc] sm:$0xf]
  %v592 = vld [vmem:[%s4 + $0x2c0] sm:$0xff]
  %v593 = vld [vmem:[%s4 + $0x2c8] sm:$0xff]
  %v594 = vld [vmem:[%s4 + $0x2d0] sm:$0xff]
  %v595 = vld [vmem:[%s4 + $0x2d8] sm:$0xff]
  %v596 = vld [vmem:[%s4 + $0x2e0] sm:$0xff]
  %v597 = vld [vmem:[%s4 + $0x2e8] sm:$0xf]
  %v598 = vld [vmem:[%s4 + $0x2ec] sm:$0xff]
  %v599 = vld [vmem:[%s4 + $0x2f4] sm:$0xff]
  %v600 = vld [vmem:[%s4 + $0x2fc] sm:$0xff]
  %v601 = vld [vmem:[%s4 + $0x304] sm:$0xff]
  %v602 = vld [vmem:[%s4 + $0x30c] sm:$0xff]
  %v603 = vld [vmem:[%s4 + $0x314] sm:$0xf]
  %v604 = vld [vmem:[%s4 + $0x318] sm:$0xff]
  %v605 = vld [vmem:[%s4 + $0x320] sm:$0xff]
  %v606 = vld [vmem:[%s4 + $0x328] sm:$0xff]
  %v607 = vld [vmem:[%s4 + $0x330] sm:$0xff]
  %v608 = vld [vmem:[%s4 + $0x338] sm:$0xff]
  %v609 = vld [vmem:[%s4 + $0x340] sm:$0xf]
  %v610 = vld [vmem:[%s4 + $0x344] sm:$0xff]
  %v611 = vld [vmem:[%s4 + $0x34c] sm:$0xff]
  %v612 = vld [vmem:[%s4 + $0x354] sm:$0xff]
  %v613 = vld [vmem:[%s4 + $0x35c] sm:$0xff]
  %v614 = vld [vmem:[%s4 + $0x364] sm:$0xff]
  %v615 = vld [vmem:[%s4 + $0x36c] sm:$0xf]
  %v616 = vld [vmem:[%s4 + $0x370] sm:$0xff]
  %v617 = vld [vmem:[%s4 + $0x378] sm:$0xff]
  %v618 = vld [vmem:[%s4 + $0x380] sm:$0xff]
  %v619 = vld [vmem:[%s4 + $0x388] sm:$0xff]
  %v620 = vld [vmem:[%s4 + $0x390] sm:$0xff]
  %v621 = vld [vmem:[%s4 + $0x398] sm:$0xf]
  %v622 = vld [vmem:[%s4 + $0x39c] sm:$0xff]
  %v623 = vld [vmem:[%s4 + $0x3a4] sm:$0xff]
  %v624 = vld [vmem:[%s4 + $0x3ac] sm:$0xff]
  %v625 = vld [vmem:[%s4 + $0x3b4] sm:$0xff]
  %v626 = vld [vmem:[%s4 + $0x3bc] sm:$0xff]
  %v627 = vld [vmem:[%s4 + $0x3c4] sm:$0xf]
  %v628 = vld [vmem:[%s4 + $0x3c8] sm:$0xff]
  %v629 = vld [vmem:[%s4 + $0x3d0] sm:$0xff]
  %v630 = vld [vmem:[%s4 + $0x3d8] sm:$0xff]
  %v631 = vld [vmem:[%s4 + $0x3e0] sm:$0xff]
  %v632 = vld [vmem:[%s4 + $0x3e8] sm:$0xff]
  %v633 = vld [vmem:[%s4 + $0x3f0] sm:$0xf]
  %v634 = vld [vmem:[%s4 + $0x3f4] sm:$0xff]
  %v635 = vld [vmem:[%s4 + $0x3fc] sm:$0xff]
  %v636 = vld [vmem:[%s4 + $0x404] sm:$0xff]
  %v637 = vld [vmem:[%s4 + $0x40c] sm:$0xff]
  %v638 = vld [vmem:[%s4 + $0x414] sm:$0xff]
  %v639 = vld [vmem:[%s4 + $0x41c] sm:$0xf]
  %v640 = vld [vmem:[%s4 + $0x420] sm:$0xff]
  %v641 = vld [vmem:[%s4 + $0x428] sm:$0xff]
  %v642 = vld [vmem:[%s4 + $0x430] sm:$0xff]
  %v643 = vld [vmem:[%s4 + $0x438] sm:$0xff]
  %v644 = vld [vmem:[%s4 + $0x440] sm:$0xff]
  %v645 = vld [vmem:[%s4 + $0x448] sm:$0xf]
  %v646 = vld [vmem:[%s4 + $0x44c] sm:$0xff]
  %v647 = vld [vmem:[%s4 + $0x454] sm:$0xff]
  %v648 = vld [vmem:[%s4 + $0x45c] sm:$0xff]
  %v649 = vld [vmem:[%s4 + $0x464] sm:$0xff]
  %v650 = vld [vmem:[%s4 + $0x46c] sm:$0xff]
  %v651 = vld [vmem:[%s4 + $0x474] sm:$0xf]
  %v652 = vld [vmem:[%s4 + $0x478] sm:$0xff]
  %v653 = vld [vmem:[%s4 + $0x480] sm:$0xff]
  %v654 = vld [vmem:[%s4 + $0x488] sm:$0xff]
  %v655 = vld [vmem:[%s4 + $0x490] sm:$0xff]
  %v656 = vld [vmem:[%s4 + $0x498] sm:$0xff]
  %v657 = vld [vmem:[%s4 + $0x4a0] sm:$0xf]
  %v658 = vld [vmem:[%s4 + $0x4a4] sm:$0xff]
  %v659 = vld [vmem:[%s4 + $0x4ac] sm:$0xff]
  %v660 = vld [vmem:[%s4 + $0x4b4] sm:$0xff]
  %v661 = vld [vmem:[%s4 + $0x4bc] sm:$0xff]
  %v662 = vld [vmem:[%s4 + $0x4c4] sm:$0xff]
  %v663 = vld [vmem:[%s4 + $0x4cc] sm:$0xf]
  %v664 = vunpack.c.l.bf16 %v496
  %v665 = vunpack.c.h.bf16 %v496
  %v666 = vunpack.c.l.bf16 %v497
  %v667 = vunpack.c.h.bf16 %v497
  %v668 = vunpack.c.l.bf16 %v498
  %v669 = vunpack.c.h.bf16 %v498
  %v670 = vunpack.c.l.bf16 %v499
  %v671 = vunpack.c.h.bf16 %v499
  %v672 = vunpack.c.l.bf16 %v500
  %v673 = vunpack.c.h.bf16 %v500
  %v674 = vunpack.c.l.bf16 %v501
  %v675 = vunpack.c.l.bf16 %v502
  %v676 = vunpack.c.h.bf16 %v502
  %v677 = vunpack.c.l.bf16 %v503
  %v678 = vunpack.c.h.bf16 %v503
  %v679 = vunpack.c.l.bf16 %v504
  %v680 = vunpack.c.h.bf16 %v504
  %v681 = vunpack.c.l.bf16 %v505
  %v682 = vunpack.c.h.bf16 %v505
  %v683 = vunpack.c.l.bf16 %v506
  %v684 = vunpack.c.h.bf16 %v506
  %v685 = vunpack.c.l.bf16 %v507
  %v686 = vunpack.c.l.bf16 %v508
  %v687 = vunpack.c.h.bf16 %v508
  %v688 = vunpack.c.l.bf16 %v509
  %v689 = vunpack.c.h.bf16 %v509
  %v690 = vunpack.c.l.bf16 %v510
  %v691 = vunpack.c.h.bf16 %v510
  %v692 = vunpack.c.l.bf16 %v511
  %v693 = vunpack.c.h.bf16 %v511
  %v694 = vunpack.c.l.bf16 %v512
  %v695 = vunpack.c.h.bf16 %v512
  %v696 = vunpack.c.l.bf16 %v513
  %v697 = vunpack.c.l.bf16 %v514
  %v698 = vunpack.c.h.bf16 %v514
  %v699 = vunpack.c.l.bf16 %v515
  %v700 = vunpack.c.h.bf16 %v515
  %v701 = vunpack.c.l.bf16 %v516
  %v702 = vunpack.c.h.bf16 %v516
  %v703 = vunpack.c.l.bf16 %v517
  %v704 = vunpack.c.h.bf16 %v517
  %v705 = vunpack.c.l.bf16 %v518
  %v706 = vunpack.c.h.bf16 %v518
  %v707 = vunpack.c.l.bf16 %v519
  %v708 = vunpack.c.l.bf16 %v520
  %v709 = vunpack.c.h.bf16 %v520
  %v710 = vunpack.c.l.bf16 %v521
  %v711 = vunpack.c.h.bf16 %v521
  %v712 = vunpack.c.l.bf16 %v522
  %v713 = vunpack.c.h.bf16 %v522
  %v714 = vunpack.c.l.bf16 %v523
  %v715 = vunpack.c.h.bf16 %v523
  %v716 = vunpack.c.l.bf16 %v524
  %v717 = vunpack.c.h.bf16 %v524
  %v718 = vunpack.c.l.bf16 %v525
  %v719 = vunpack.c.l.bf16 %v526
  %v720 = vunpack.c.h.bf16 %v526
  %v721 = vunpack.c.l.bf16 %v527
  %v722 = vunpack.c.h.bf16 %v527
  %v723 = vunpack.c.l.bf16 %v528
  %v724 = vunpack.c.h.bf16 %v528
  %v725 = vunpack.c.l.bf16 %v529
  %v726 = vunpack.c.h.bf16 %v529
  %v727 = vunpack.c.l.bf16 %v530
  %v728 = vunpack.c.h.bf16 %v530
  %v729 = vunpack.c.l.bf16 %v531
  %v730 = vunpack.c.l.bf16 %v532
  %v731 = vunpack.c.h.bf16 %v532
  %v732 = vunpack.c.l.bf16 %v533
  %v733 = vunpack.c.h.bf16 %v533
  %v734 = vunpack.c.l.bf16 %v534
  %v735 = vunpack.c.h.bf16 %v534
  %v736 = vunpack.c.l.bf16 %v535
  %v737 = vunpack.c.h.bf16 %v535
  %v738 = vunpack.c.l.bf16 %v536
  %v739 = vunpack.c.h.bf16 %v536
  %v740 = vunpack.c.l.bf16 %v537
  %v741 = vunpack.c.l.bf16 %v538
  %v742 = vunpack.c.h.bf16 %v538
  %v743 = vunpack.c.l.bf16 %v539
  %v744 = vunpack.c.h.bf16 %v539
  %v745 = vunpack.c.l.bf16 %v540
  %v746 = vunpack.c.h.bf16 %v540
  %v747 = vunpack.c.l.bf16 %v541
  %v748 = vunpack.c.h.bf16 %v541
  %v749 = vunpack.c.l.bf16 %v542
  %v750 = vunpack.c.h.bf16 %v542
  %v751 = vunpack.c.l.bf16 %v543
  %v752 = vunpack.c.l.bf16 %v544
  %v753 = vunpack.c.h.bf16 %v544
  %v754 = vunpack.c.l.bf16 %v545
  %v755 = vunpack.c.h.bf16 %v545
  %v756 = vunpack.c.l.bf16 %v546
  %v757 = vunpack.c.h.bf16 %v546
  %v758 = vunpack.c.l.bf16 %v547
  %v759 = vunpack.c.h.bf16 %v547
  %v760 = vunpack.c.l.bf16 %v548
  %v761 = vunpack.c.h.bf16 %v548
  %v762 = vunpack.c.l.bf16 %v549
  %v763 = vunpack.c.l.bf16 %v550
  %v764 = vunpack.c.h.bf16 %v550
  %v765 = vunpack.c.l.bf16 %v551
  %v766 = vunpack.c.h.bf16 %v551
  %v767 = vunpack.c.l.bf16 %v552
  %v768 = vunpack.c.h.bf16 %v552
  %v769 = vunpack.c.l.bf16 %v553
  %v770 = vunpack.c.h.bf16 %v553
  %v771 = vunpack.c.l.bf16 %v554
  %v772 = vunpack.c.h.bf16 %v554
  %v773 = vunpack.c.l.bf16 %v555
  %v774 = vunpack.c.l.bf16 %v556
  %v775 = vunpack.c.h.bf16 %v556
  %v776 = vunpack.c.l.bf16 %v557
  %v777 = vunpack.c.h.bf16 %v557
  %v778 = vunpack.c.l.bf16 %v558
  %v779 = vunpack.c.h.bf16 %v558
  %v780 = vunpack.c.l.bf16 %v559
  %v781 = vunpack.c.h.bf16 %v559
  %v782 = vunpack.c.l.bf16 %v560
  %v783 = vunpack.c.h.bf16 %v560
  %v784 = vunpack.c.l.bf16 %v561
  %v785 = vunpack.c.l.bf16 %v562
  %v786 = vunpack.c.h.bf16 %v562
  %v787 = vunpack.c.l.bf16 %v563
  %v788 = vunpack.c.h.bf16 %v563
  %v789 = vunpack.c.l.bf16 %v564
  %v790 = vunpack.c.h.bf16 %v564
  %v791 = vunpack.c.l.bf16 %v565
  %v792 = vunpack.c.h.bf16 %v565
  %v793 = vunpack.c.l.bf16 %v566
  %v794 = vunpack.c.h.bf16 %v566
  %v795 = vunpack.c.l.bf16 %v567
  %v796 = vunpack.c.l.bf16 %v568
  %v797 = vunpack.c.h.bf16 %v568
  %v798 = vunpack.c.l.bf16 %v569
  %v799 = vunpack.c.h.bf16 %v569
  %v800 = vunpack.c.l.bf16 %v570
  %v801 = vunpack.c.h.bf16 %v570
  %v802 = vunpack.c.l.bf16 %v571
  %v803 = vunpack.c.h.bf16 %v571
  %v804 = vunpack.c.l.bf16 %v572
  %v805 = vunpack.c.h.bf16 %v572
  %v806 = vunpack.c.l.bf16 %v573
  %v807 = vunpack.c.l.bf16 %v574
  %v808 = vunpack.c.h.bf16 %v574
  %v809 = vunpack.c.l.bf16 %v575
  %v810 = vunpack.c.h.bf16 %v575
  %v811 = vunpack.c.l.bf16 %v576
  %v812 = vunpack.c.h.bf16 %v576
  %v813 = vunpack.c.l.bf16 %v577
  %v814 = vunpack.c.h.bf16 %v577
  %v815 = vunpack.c.l.bf16 %v578
  %v816 = vunpack.c.h.bf16 %v578
  %v817 = vunpack.c.l.bf16 %v579
  %v818 = vunpack.c.l.bf16 %v580
  %v819 = vunpack.c.h.bf16 %v580
  %v820 = vunpack.c.l.bf16 %v581
  %v821 = vunpack.c.h.bf16 %v581
  %v822 = vunpack.c.l.bf16 %v582
  %v823 = vunpack.c.h.bf16 %v582
  %v824 = vunpack.c.l.bf16 %v583
  %v825 = vunpack.c.h.bf16 %v583
  %v826 = vunpack.c.l.bf16 %v584
  %v827 = vunpack.c.h.bf16 %v584
  %v828 = vunpack.c.l.bf16 %v585
  %v829 = vunpack.c.l.bf16 %v586
  %v830 = vunpack.c.h.bf16 %v586
  %v831 = vunpack.c.l.bf16 %v587
  %v832 = vunpack.c.h.bf16 %v587
  %v833 = vunpack.c.l.bf16 %v588
  %v834 = vunpack.c.h.bf16 %v588
  %v835 = vunpack.c.l.bf16 %v589
  %v836 = vunpack.c.h.bf16 %v589
  %v837 = vunpack.c.l.bf16 %v590
  %v838 = vunpack.c.h.bf16 %v590
  %v839 = vunpack.c.l.bf16 %v591
  %v840 = vunpack.c.l.bf16 %v592
  %v841 = vunpack.c.h.bf16 %v592
  %v842 = vunpack.c.l.bf16 %v593
  %v843 = vunpack.c.h.bf16 %v593
  %v844 = vunpack.c.l.bf16 %v594
  %v845 = vunpack.c.h.bf16 %v594
  %v846 = vunpack.c.l.bf16 %v595
  %v847 = vunpack.c.h.bf16 %v595
  %v848 = vunpack.c.l.bf16 %v596
  %v849 = vunpack.c.h.bf16 %v596
  %v850 = vunpack.c.l.bf16 %v597
  %v851 = vunpack.c.l.bf16 %v598
  %v852 = vunpack.c.h.bf16 %v598
  %v853 = vunpack.c.l.bf16 %v599
  %v854 = vunpack.c.h.bf16 %v599
  %v855 = vunpack.c.l.bf16 %v600
  %v856 = vunpack.c.h.bf16 %v600
  %v857 = vunpack.c.l.bf16 %v601
  %v858 = vunpack.c.h.bf16 %v601
  %v859 = vunpack.c.l.bf16 %v602
  %v860 = vunpack.c.h.bf16 %v602
  %v861 = vunpack.c.l.bf16 %v603
  %v862 = vunpack.c.l.bf16 %v604
  %v863 = vunpack.c.h.bf16 %v604
  %v864 = vunpack.c.l.bf16 %v605
  %v865 = vunpack.c.h.bf16 %v605
  %v866 = vunpack.c.l.bf16 %v606
  %v867 = vunpack.c.h.bf16 %v606
  %v868 = vunpack.c.l.bf16 %v607
  %v869 = vunpack.c.h.bf16 %v607
  %v870 = vunpack.c.l.bf16 %v608
  %v871 = vunpack.c.h.bf16 %v608
  %v872 = vunpack.c.l.bf16 %v609
  %v873 = vunpack.c.l.bf16 %v610
  %v874 = vunpack.c.h.bf16 %v610
  %v875 = vunpack.c.l.bf16 %v611
  %v876 = vunpack.c.h.bf16 %v611
  %v877 = vunpack.c.l.bf16 %v612
  %v878 = vunpack.c.h.bf16 %v612
  %v879 = vunpack.c.l.bf16 %v613
  %v880 = vunpack.c.h.bf16 %v613
  %v881 = vunpack.c.l.bf16 %v614
  %v882 = vunpack.c.h.bf16 %v614
  %v883 = vunpack.c.l.bf16 %v615
  %v884 = vunpack.c.l.bf16 %v616
  %v885 = vunpack.c.h.bf16 %v616
  %v886 = vunpack.c.l.bf16 %v617
  %v887 = vunpack.c.h.bf16 %v617
  %v888 = vunpack.c.l.bf16 %v618
  %v889 = vunpack.c.h.bf16 %v618
  %v890 = vunpack.c.l.bf16 %v619
  %v891 = vunpack.c.h.bf16 %v619
  %v892 = vunpack.c.l.bf16 %v620
  %v893 = vunpack.c.h.bf16 %v620
  %v894 = vunpack.c.l.bf16 %v621
  %v895 = vunpack.c.l.bf16 %v622
  %v896 = vunpack.c.h.bf16 %v622
  %v897 = vunpack.c.l.bf16 %v623
  %v898 = vunpack.c.h.bf16 %v623
  %v899 = vunpack.c.l.bf16 %v624
  %v900 = vunpack.c.h.bf16 %v624
  %v901 = vunpack.c.l.bf16 %v625
  %v902 = vunpack.c.h.bf16 %v625
  %v903 = vunpack.c.l.bf16 %v626
  %v904 = vunpack.c.h.bf16 %v626
  %v905 = vunpack.c.l.bf16 %v627
  %v906 = vunpack.c.l.bf16 %v628
  %v907 = vunpack.c.h.bf16 %v628
  %v908 = vunpack.c.l.bf16 %v629
  %v909 = vunpack.c.h.bf16 %v629
  %v910 = vunpack.c.l.bf16 %v630
  %v911 = vunpack.c.h.bf16 %v630
  %v912 = vunpack.c.l.bf16 %v631
  %v913 = vunpack.c.h.bf16 %v631
  %v914 = vunpack.c.l.bf16 %v632
  %v915 = vunpack.c.h.bf16 %v632
  %v916 = vunpack.c.l.bf16 %v633
  %v917 = vunpack.c.l.bf16 %v634
  %v918 = vunpack.c.h.bf16 %v634
  %v919 = vunpack.c.l.bf16 %v635
  %v920 = vunpack.c.h.bf16 %v635
  %v921 = vunpack.c.l.bf16 %v636
  %v922 = vunpack.c.h.bf16 %v636
  %v923 = vunpack.c.l.bf16 %v637
  %v924 = vunpack.c.h.bf16 %v637
  %v925 = vunpack.c.l.bf16 %v638
  %v926 = vunpack.c.h.bf16 %v638
  %v927 = vunpack.c.l.bf16 %v639
  %v928 = vunpack.c.l.bf16 %v640
  %v929 = vunpack.c.h.bf16 %v640
  %v930 = vunpack.c.l.bf16 %v641
  %v931 = vunpack.c.h.bf16 %v641
  %v932 = vunpack.c.l.bf16 %v642
  %v933 = vunpack.c.h.bf16 %v642
  %v934 = vunpack.c.l.bf16 %v643
  %v935 = vunpack.c.h.bf16 %v643
  %v936 = vunpack.c.l.bf16 %v644
  %v937 = vunpack.c.h.bf16 %v644
  %v938 = vunpack.c.l.bf16 %v645
  %v939 = vunpack.c.l.bf16 %v646
  %v940 = vunpack.c.h.bf16 %v646
  %v941 = vunpack.c.l.bf16 %v647
  %v942 = vunpack.c.h.bf16 %v647
  %v943 = vunpack.c.l.bf16 %v648
  %v944 = vunpack.c.h.bf16 %v648
  %v945 = vunpack.c.l.bf16 %v649
  %v946 = vunpack.c.h.bf16 %v649
  %v947 = vunpack.c.l.bf16 %v650
  %v948 = vunpack.c.h.bf16 %v650
  %v949 = vunpack.c.l.bf16 %v651
  %v950 = vunpack.c.l.bf16 %v652
  %v951 = vunpack.c.h.bf16 %v652
  %v952 = vunpack.c.l.bf16 %v653
  %v953 = vunpack.c.h.bf16 %v653
  %v954 = vunpack.c.l.bf16 %v654
  %v955 = vunpack.c.h.bf16 %v654
  %v956 = vunpack.c.l.bf16 %v655
  %v957 = vunpack.c.h.bf16 %v655
  %v958 = vunpack.c.l.bf16 %v656
  %v959 = vunpack.c.h.bf16 %v656
  %v960 = vunpack.c.l.bf16 %v657
  %v961 = vunpack.c.l.bf16 %v658
  %v962 = vunpack.c.h.bf16 %v658
  %v963 = vunpack.c.l.bf16 %v659
  %v964 = vunpack.c.h.bf16 %v659
  %v965 = vunpack.c.l.bf16 %v660
  %v966 = vunpack.c.h.bf16 %v660
  %v967 = vunpack.c.l.bf16 %v661
  %v968 = vunpack.c.h.bf16 %v661
  %v969 = vunpack.c.l.bf16 %v662
  %v970 = vunpack.c.h.bf16 %v662
  %v971 = vunpack.c.l.bf16 %v663
  %v972 = vlaneseq
  %v973 = vshrl.u32 %v972, 7
  %v974 = vsub.s32 0, %v973
  %v975 = vrot.slane %v475, %v974
  %v976 = vlaneseq
  %v977 = vshrl.u32 %v976, 7
  %v978 = vsub.s32 0, %v977
  %v979 = vrot.slane %v477, %v978
  %v980 = vlaneseq
  %v981 = vshrl.u32 %v980, 7
  %v982 = vsub.s32 0, %v981
  %v983 = vrot.slane %v479, %v982
  %v984 = vlaneseq
  %v985 = vshrl.u32 %v984, 7
  %v986 = vsub.s32 0, %v985
  %v987 = vrot.slane %v481, %v986
  %v988 = vlaneseq
  %v989 = vshrl.u32 %v988, 7
  %v990 = vsub.s32 0, %v989
  %v991 = vrot.slane %v483, %v990
  %v992 = vlaneseq
  %v993 = vshrl.u32 %v992, 7
  %v994 = vsub.s32 0, %v993
  %v995 = vrot.slane %v485, %v994
  %v996 = vlaneseq
  %v997 = vshrl.u32 %v996, 7
  %v998 = vsub.s32 0, %v997
  %v999 = vrot.slane %v487, %v998
  %v1000 = vlaneseq
  %v1001 = vshrl.u32 %v1000, 7
  %v1002 = vsub.s32 0, %v1001
  %v1003 = vrot.slane %v489, %v1002
  %v1004 = vlaneseq
  %v1005 = vshrl.u32 %v1004, 7
  %v1006 = vsub.s32 0, %v1005
  %v1007 = vrot.slane %v491, %v1006
  %v1008 = vlaneseq
  %v1009 = vshrl.u32 %v1008, 7
  %v1010 = vsub.s32 0, %v1009
  %v1011 = vrot.slane %v493, %v1010
  %v1012 = vlaneseq
  %v1013 = vshrl.u32 %v1012, 7
  %v1014 = vsub.s32 0, %v1013
  %v1015 = vrot.slane %v495, %v1014
  %v1016 = vmul.f32 %v664, %v975
  %v1017 = vmul.f32 %v665, %v979
  %v1018 = vmul.f32 %v666, %v983
  %v1019 = vmul.f32 %v667, %v987
  %v1020 = vmul.f32 %v668, %v991
  %v1021 = vmul.f32 %v669, %v995
  %v1022 = vmul.f32 %v670, %v999
  %v1023 = vmul.f32 %v671, %v1003
  %v1024 = vmul.f32 %v672, %v1007
  %v1025 = vmul.f32 %v673, %v1011
  %v1026 = vmul.f32 %v674, %v1015
  %v1027 = vmul.f32 %v675, %v975
  %v1028 = vmul.f32 %v676, %v979
  %v1029 = vmul.f32 %v677, %v983
  %v1030 = vmul.f32 %v678, %v987
  %v1031 = vmul.f32 %v679, %v991
  %v1032 = vmul.f32 %v680, %v995
  %v1033 = vmul.f32 %v681, %v999
  %v1034 = vmul.f32 %v682, %v1003
  %v1035 = vmul.f32 %v683, %v1007
  %v1036 = vmul.f32 %v684, %v1011
  %v1037 = vmul.f32 %v685, %v1015
  %v1038 = vmul.f32 %v686, %v975
  %v1039 = vmul.f32 %v687, %v979
  %v1040 = vmul.f32 %v688, %v983
  %v1041 = vmul.f32 %v689, %v987
  %v1042 = vmul.f32 %v690, %v991
  %v1043 = vmul.f32 %v691, %v995
  %v1044 = vmul.f32 %v692, %v999
  %v1045 = vmul.f32 %v693, %v1003
  %v1046 = vmul.f32 %v694, %v1007
  %v1047 = vmul.f32 %v695, %v1011
  %v1048 = vmul.f32 %v696, %v1015
  %v1049 = vmul.f32 %v697, %v975
  %v1050 = vmul.f32 %v698, %v979
  %v1051 = vmul.f32 %v699, %v983
  %v1052 = vmul.f32 %v700, %v987
  %v1053 = vmul.f32 %v701, %v991
  %v1054 = vmul.f32 %v702, %v995
  %v1055 = vmul.f32 %v703, %v999
  %v1056 = vmul.f32 %v704, %v1003
  %v1057 = vmul.f32 %v705, %v1007
  %v1058 = vmul.f32 %v706, %v1011
  %v1059 = vmul.f32 %v707, %v1015
  %v1060 = vmul.f32 %v708, %v975
  %v1061 = vmul.f32 %v709, %v979
  %v1062 = vmul.f32 %v710, %v983
  %v1063 = vmul.f32 %v711, %v987
  %v1064 = vmul.f32 %v712, %v991
  %v1065 = vmul.f32 %v713, %v995
  %v1066 = vmul.f32 %v714, %v999
  %v1067 = vmul.f32 %v715, %v1003
  %v1068 = vmul.f32 %v716, %v1007
  %v1069 = vmul.f32 %v717, %v1011
  %v1070 = vmul.f32 %v718, %v1015
  %v1071 = vmul.f32 %v719, %v975
  %v1072 = vmul.f32 %v720, %v979
  %v1073 = vmul.f32 %v721, %v983
  %v1074 = vmul.f32 %v722, %v987
  %v1075 = vmul.f32 %v723, %v991
  %v1076 = vmul.f32 %v724, %v995
  %v1077 = vmul.f32 %v725, %v999
  %v1078 = vmul.f32 %v726, %v1003
  %v1079 = vmul.f32 %v727, %v1007
  %v1080 = vmul.f32 %v728, %v1011
  %v1081 = vmul.f32 %v729, %v1015
  %v1082 = vmul.f32 %v730, %v975
  %v1083 = vmul.f32 %v731, %v979
  %v1084 = vmul.f32 %v732, %v983
  %v1085 = vmul.f32 %v733, %v987
  %v1086 = vmul.f32 %v734, %v991
  %v1087 = vmul.f32 %v735, %v995
  %v1088 = vmul.f32 %v736, %v999
  %v1089 = vmul.f32 %v737, %v1003
  %v1090 = vmul.f32 %v738, %v1007
  %v1091 = vmul.f32 %v739, %v1011
  %v1092 = vmul.f32 %v740, %v1015
  %v1093 = vmul.f32 %v741, %v975
  %v1094 = vmul.f32 %v742, %v979
  %v1095 = vmul.f32 %v743, %v983
  %v1096 = vmul.f32 %v744, %v987
  %v1097 = vmul.f32 %v745, %v991
  %v1098 = vmul.f32 %v746, %v995
  %v1099 = vmul.f32 %v747, %v999
  %v1100 = vmul.f32 %v748, %v1003
  %v1101 = vmul.f32 %v749, %v1007
  %v1102 = vmul.f32 %v750, %v1011
  %v1103 = vmul.f32 %v751, %v1015
  %v1104 = vmul.f32 %v752, %v975
  %v1105 = vmul.f32 %v753, %v979
  %v1106 = vmul.f32 %v754, %v983
  %v1107 = vmul.f32 %v755, %v987
  %v1108 = vmul.f32 %v756, %v991
  %v1109 = vmul.f32 %v757, %v995
  %v1110 = vmul.f32 %v758, %v999
  %v1111 = vmul.f32 %v759, %v1003
  %v1112 = vmul.f32 %v760, %v1007
  %v1113 = vmul.f32 %v761, %v1011
  %v1114 = vmul.f32 %v762, %v1015
  %v1115 = vmul.f32 %v763, %v975
  %v1116 = vmul.f32 %v764, %v979
  %v1117 = vmul.f32 %v765, %v983
  %v1118 = vmul.f32 %v766, %v987
  %v1119 = vmul.f32 %v767, %v991
  %v1120 = vmul.f32 %v768, %v995
  %v1121 = vmul.f32 %v769, %v999
  %v1122 = vmul.f32 %v770, %v1003
  %v1123 = vmul.f32 %v771, %v1007
  %v1124 = vmul.f32 %v772, %v1011
  %v1125 = vmul.f32 %v773, %v1015
  %v1126 = vmul.f32 %v774, %v975
  %v1127 = vmul.f32 %v775, %v979
  %v1128 = vmul.f32 %v776, %v983
  %v1129 = vmul.f32 %v777, %v987
  %v1130 = vmul.f32 %v778, %v991
  %v1131 = vmul.f32 %v779, %v995
  %v1132 = vmul.f32 %v780, %v999
  %v1133 = vmul.f32 %v781, %v1003
  %v1134 = vmul.f32 %v782, %v1007
  %v1135 = vmul.f32 %v783, %v1011
  %v1136 = vmul.f32 %v784, %v1015
  %v1137 = vmul.f32 %v785, %v975
  %v1138 = vmul.f32 %v786, %v979
  %v1139 = vmul.f32 %v787, %v983
  %v1140 = vmul.f32 %v788, %v987
  %v1141 = vmul.f32 %v789, %v991
  %v1142 = vmul.f32 %v790, %v995
  %v1143 = vmul.f32 %v791, %v999
  %v1144 = vmul.f32 %v792, %v1003
  %v1145 = vmul.f32 %v793, %v1007
  %v1146 = vmul.f32 %v794, %v1011
  %v1147 = vmul.f32 %v795, %v1015
  %v1148 = vmul.f32 %v796, %v975
  %v1149 = vmul.f32 %v797, %v979
  %v1150 = vmul.f32 %v798, %v983
  %v1151 = vmul.f32 %v799, %v987
  %v1152 = vmul.f32 %v800, %v991
  %v1153 = vmul.f32 %v801, %v995
  %v1154 = vmul.f32 %v802, %v999
  %v1155 = vmul.f32 %v803, %v1003
  %v1156 = vmul.f32 %v804, %v1007
  %v1157 = vmul.f32 %v805, %v1011
  %v1158 = vmul.f32 %v806, %v1015
  %v1159 = vmul.f32 %v807, %v975
  %v1160 = vmul.f32 %v808, %v979
  %v1161 = vmul.f32 %v809, %v983
  %v1162 = vmul.f32 %v810, %v987
  %v1163 = vmul.f32 %v811, %v991
  %v1164 = vmul.f32 %v812, %v995
  %v1165 = vmul.f32 %v813, %v999
  %v1166 = vmul.f32 %v814, %v1003
  %v1167 = vmul.f32 %v815, %v1007
  %v1168 = vmul.f32 %v816, %v1011
  %v1169 = vmul.f32 %v817, %v1015
  %v1170 = vmul.f32 %v818, %v975
  %v1171 = vmul.f32 %v819, %v979
  %v1172 = vmul.f32 %v820, %v983
  %v1173 = vmul.f32 %v821, %v987
  %v1174 = vmul.f32 %v822, %v991
  %v1175 = vmul.f32 %v823, %v995
  %v1176 = vmul.f32 %v824, %v999
  %v1177 = vmul.f32 %v825, %v1003
  %v1178 = vmul.f32 %v826, %v1007
  %v1179 = vmul.f32 %v827, %v1011
  %v1180 = vmul.f32 %v828, %v1015
  %v1181 = vmul.f32 %v829, %v975
  %v1182 = vmul.f32 %v830, %v979
  %v1183 = vmul.f32 %v831, %v983
  %v1184 = vmul.f32 %v832, %v987
  %v1185 = vmul.f32 %v833, %v991
  %v1186 = vmul.f32 %v834, %v995
  %v1187 = vmul.f32 %v835, %v999
  %v1188 = vmul.f32 %v836, %v1003
  %v1189 = vmul.f32 %v837, %v1007
  %v1190 = vmul.f32 %v838, %v1011
  %v1191 = vmul.f32 %v839, %v1015
  %v1192 = vmul.f32 %v840, %v975
  %v1193 = vmul.f32 %v841, %v979
  %v1194 = vmul.f32 %v842, %v983
  %v1195 = vmul.f32 %v843, %v987
  %v1196 = vmul.f32 %v844, %v991
  %v1197 = vmul.f32 %v845, %v995
  %v1198 = vmul.f32 %v846, %v999
  %v1199 = vmul.f32 %v847, %v1003
  %v1200 = vmul.f32 %v848, %v1007
  %v1201 = vmul.f32 %v849, %v1011
  %v1202 = vmul.f32 %v850, %v1015
  %v1203 = vmul.f32 %v851, %v975
  %v1204 = vmul.f32 %v852, %v979
  %v1205 = vmul.f32 %v853, %v983
  %v1206 = vmul.f32 %v854, %v987
  %v1207 = vmul.f32 %v855, %v991
  %v1208 = vmul.f32 %v856, %v995
  %v1209 = vmul.f32 %v857, %v999
  %v1210 = vmul.f32 %v858, %v1003
  %v1211 = vmul.f32 %v859, %v1007
  %v1212 = vmul.f32 %v860, %v1011
  %v1213 = vmul.f32 %v861, %v1015
  %v1214 = vmul.f32 %v862, %v975
  %v1215 = vmul.f32 %v863, %v979
  %v1216 = vmul.f32 %v864, %v983
  %v1217 = vmul.f32 %v865, %v987
  %v1218 = vmul.f32 %v866, %v991
  %v1219 = vmul.f32 %v867, %v995
  %v1220 = vmul.f32 %v868, %v999
  %v1221 = vmul.f32 %v869, %v1003
  %v1222 = vmul.f32 %v870, %v1007
  %v1223 = vmul.f32 %v871, %v1011
  %v1224 = vmul.f32 %v872, %v1015
  %v1225 = vmul.f32 %v873, %v975
  %v1226 = vmul.f32 %v874, %v979
  %v1227 = vmul.f32 %v875, %v983
  %v1228 = vmul.f32 %v876, %v987
  %v1229 = vmul.f32 %v877, %v991
  %v1230 = vmul.f32 %v878, %v995
  %v1231 = vmul.f32 %v879, %v999
  %v1232 = vmul.f32 %v880, %v1003
  %v1233 = vmul.f32 %v881, %v1007
  %v1234 = vmul.f32 %v882, %v1011
  %v1235 = vmul.f32 %v883, %v1015
  %v1236 = vmul.f32 %v884, %v975
  %v1237 = vmul.f32 %v885, %v979
  %v1238 = vmul.f32 %v886, %v983
  %v1239 = vmul.f32 %v887, %v987
  %v1240 = vmul.f32 %v888, %v991
  %v1241 = vmul.f32 %v889, %v995
  %v1242 = vmul.f32 %v890, %v999
  %v1243 = vmul.f32 %v891, %v1003
  %v1244 = vmul.f32 %v892, %v1007
  %v1245 = vmul.f32 %v893, %v1011
  %v1246 = vmul.f32 %v894, %v1015
  %v1247 = vmul.f32 %v895, %v975
  %v1248 = vmul.f32 %v896, %v979
  %v1249 = vmul.f32 %v897, %v983
  %v1250 = vmul.f32 %v898, %v987
  %v1251 = vmul.f32 %v899, %v991
  %v1252 = vmul.f32 %v900, %v995
  %v1253 = vmul.f32 %v901, %v999
  %v1254 = vmul.f32 %v902, %v1003
  %v1255 = vmul.f32 %v903, %v1007
  %v1256 = vmul.f32 %v904, %v1011
  %v1257 = vmul.f32 %v905, %v1015
  %v1258 = vmul.f32 %v906, %v975
  %v1259 = vmul.f32 %v907, %v979
  %v1260 = vmul.f32 %v908, %v983
  %v1261 = vmul.f32 %v909, %v987
  %v1262 = vmul.f32 %v910, %v991
  %v1263 = vmul.f32 %v911, %v995
  %v1264 = vmul.f32 %v912, %v999
  %v1265 = vmul.f32 %v913, %v1003
  %v1266 = vmul.f32 %v914, %v1007
  %v1267 = vmul.f32 %v915, %v1011
  %v1268 = vmul.f32 %v916, %v1015
  %v1269 = vmul.f32 %v917, %v975
  %v1270 = vmul.f32 %v918, %v979
  %v1271 = vmul.f32 %v919, %v983
  %v1272 = vmul.f32 %v920, %v987
  %v1273 = vmul.f32 %v921, %v991
  %v1274 = vmul.f32 %v922, %v995
  %v1275 = vmul.f32 %v923, %v999
  %v1276 = vmul.f32 %v924, %v1003
  %v1277 = vmul.f32 %v925, %v1007
  %v1278 = vmul.f32 %v926, %v1011
  %v1279 = vmul.f32 %v927, %v1015
  %v1280 = vmul.f32 %v928, %v975
  %v1281 = vmul.f32 %v929, %v979
  %v1282 = vmul.f32 %v930, %v983
  %v1283 = vmul.f32 %v931, %v987
  %v1284 = vmul.f32 %v932, %v991
  %v1285 = vmul.f32 %v933, %v995
  %v1286 = vmul.f32 %v934, %v999
  %v1287 = vmul.f32 %v935, %v1003
  %v1288 = vmul.f32 %v936, %v1007
  %v1289 = vmul.f32 %v937, %v1011
  %v1290 = vmul.f32 %v938, %v1015
  %v1291 = vmul.f32 %v939, %v975
  %v1292 = vmul.f32 %v940, %v979
  %v1293 = vmul.f32 %v941, %v983
  %v1294 = vmul.f32 %v942, %v987
  %v1295 = vmul.f32 %v943, %v991
  %v1296 = vmul.f32 %v944, %v995
  %v1297 = vmul.f32 %v945, %v999
  %v1298 = vmul.f32 %v946, %v1003
  %v1299 = vmul.f32 %v947, %v1007
  %v1300 = vmul.f32 %v948, %v1011
  %v1301 = vmul.f32 %v949, %v1015
  %v1302 = vmul.f32 %v950, %v975
  %v1303 = vmul.f32 %v951, %v979
  %v1304 = vmul.f32 %v952, %v983
  %v1305 = vmul.f32 %v953, %v987
  %v1306 = vmul.f32 %v954, %v991
  %v1307 = vmul.f32 %v955, %v995
  %v1308 = vmul.f32 %v956, %v999
  %v1309 = vmul.f32 %v957, %v1003
  %v1310 = vmul.f32 %v958, %v1007
  %v1311 = vmul.f32 %v959, %v1011
  %v1312 = vmul.f32 %v960, %v1015
  %v1313 = vmul.f32 %v961, %v975
  %v1314 = vmul.f32 %v962, %v979
  %v1315 = vmul.f32 %v963, %v983
  %v1316 = vmul.f32 %v964, %v987
  %v1317 = vmul.f32 %v965, %v991
  %v1318 = vmul.f32 %v966, %v995
  %v1319 = vmul.f32 %v967, %v999
  %v1320 = vmul.f32 %v968, %v1003
  %v1321 = vmul.f32 %v969, %v1007
  %v1322 = vmul.f32 %v970, %v1011
  %v1323 = vmul.f32 %v971, %v1015
  %v1324 = vpack.c.bf16 %v1027, %v1016
  %v1325 = vpack.c.bf16 %v1028, %v1017
  %v1326 = vpack.c.bf16 %v1029, %v1018
  %v1327 = vpack.c.bf16 %v1030, %v1019
  %v1328 = vpack.c.bf16 %v1031, %v1020
  %v1329 = vpack.c.bf16 %v1032, %v1021
  %v1330 = vpack.c.bf16 %v1033, %v1022
  %v1331 = vpack.c.bf16 %v1034, %v1023
  %v1332 = vpack.c.bf16 %v1035, %v1024
  %v1333 = vpack.c.bf16 %v1036, %v1025
  %v1334 = vpack.c.bf16 %v1037, %v1026
  %v1335 = vpack.c.bf16 %v1049, %v1038
  %v1336 = vpack.c.bf16 %v1050, %v1039
  %v1337 = vpack.c.bf16 %v1051, %v1040
  %v1338 = vpack.c.bf16 %v1052, %v1041
  %v1339 = vpack.c.bf16 %v1053, %v1042
  %v1340 = vpack.c.bf16 %v1054, %v1043
  %v1341 = vpack.c.bf16 %v1055, %v1044
  %v1342 = vpack.c.bf16 %v1056, %v1045
  %v1343 = vpack.c.bf16 %v1057, %v1046
  %v1344 = vpack.c.bf16 %v1058, %v1047
  %v1345 = vpack.c.bf16 %v1059, %v1048
  %v1346 = vpack.c.bf16 %v1071, %v1060
  %v1347 = vpack.c.bf16 %v1072, %v1061
  %v1348 = vpack.c.bf16 %v1073, %v1062
  %v1349 = vpack.c.bf16 %v1074, %v1063
  %v1350 = vpack.c.bf16 %v1075, %v1064
  %v1351 = vpack.c.bf16 %v1076, %v1065
  %v1352 = vpack.c.bf16 %v1077, %v1066
  %v1353 = vpack.c.bf16 %v1078, %v1067
  %v1354 = vpack.c.bf16 %v1079, %v1068
  %v1355 = vpack.c.bf16 %v1080, %v1069
  %v1356 = vpack.c.bf16 %v1081, %v1070
  %v1357 = vpack.c.bf16 %v1093, %v1082
  %v1358 = vpack.c.bf16 %v1094, %v1083
  %v1359 = vpack.c.bf16 %v1095, %v1084
  %v1360 = vpack.c.bf16 %v1096, %v1085
  %v1361 = vpack.c.bf16 %v1097, %v1086
  %v1362 = vpack.c.bf16 %v1098, %v1087
  %v1363 = vpack.c.bf16 %v1099, %v1088
  %v1364 = vpack.c.bf16 %v1100, %v1089
  %v1365 = vpack.c.bf16 %v1101, %v1090
  %v1366 = vpack.c.bf16 %v1102, %v1091
  %v1367 = vpack.c.bf16 %v1103, %v1092
  %v1368 = vpack.c.bf16 %v1115, %v1104
  %v1369 = vpack.c.bf16 %v1116, %v1105
  %v1370 = vpack.c.bf16 %v1117, %v1106
  %v1371 = vpack.c.bf16 %v1118, %v1107
  %v1372 = vpack.c.bf16 %v1119, %v1108
  %v1373 = vpack.c.bf16 %v1120, %v1109
  %v1374 = vpack.c.bf16 %v1121, %v1110
  %v1375 = vpack.c.bf16 %v1122, %v1111
  %v1376 = vpack.c.bf16 %v1123, %v1112
  %v1377 = vpack.c.bf16 %v1124, %v1113
  %v1378 = vpack.c.bf16 %v1125, %v1114
  %v1379 = vpack.c.bf16 %v1137, %v1126
  %v1380 = vpack.c.bf16 %v1138, %v1127
  %v1381 = vpack.c.bf16 %v1139, %v1128
  %v1382 = vpack.c.bf16 %v1140, %v1129
  %v1383 = vpack.c.bf16 %v1141, %v1130
  %v1384 = vpack.c.bf16 %v1142, %v1131
  %v1385 = vpack.c.bf16 %v1143, %v1132
  %v1386 = vpack.c.bf16 %v1144, %v1133
  %v1387 = vpack.c.bf16 %v1145, %v1134
  %v1388 = vpack.c.bf16 %v1146, %v1135
  %v1389 = vpack.c.bf16 %v1147, %v1136
  %v1390 = vpack.c.bf16 %v1159, %v1148
  %v1391 = vpack.c.bf16 %v1160, %v1149
  %v1392 = vpack.c.bf16 %v1161, %v1150
  %v1393 = vpack.c.bf16 %v1162, %v1151
  %v1394 = vpack.c.bf16 %v1163, %v1152
  %v1395 = vpack.c.bf16 %v1164, %v1153
  %v1396 = vpack.c.bf16 %v1165, %v1154
  %v1397 = vpack.c.bf16 %v1166, %v1155
  %v1398 = vpack.c.bf16 %v1167, %v1156
  %v1399 = vpack.c.bf16 %v1168, %v1157
  %v1400 = vpack.c.bf16 %v1169, %v1158
  %v1401 = vpack.c.bf16 %v1181, %v1170
  %v1402 = vpack.c.bf16 %v1182, %v1171
  %v1403 = vpack.c.bf16 %v1183, %v1172
  %v1404 = vpack.c.bf16 %v1184, %v1173
  %v1405 = vpack.c.bf16 %v1185, %v1174
  %v1406 = vpack.c.bf16 %v1186, %v1175
  %v1407 = vpack.c.bf16 %v1187, %v1176
  %v1408 = vpack.c.bf16 %v1188, %v1177
  %v1409 = vpack.c.bf16 %v1189, %v1178
  %v1410 = vpack.c.bf16 %v1190, %v1179
  %v1411 = vpack.c.bf16 %v1191, %v1180
  %v1412 = vpack.c.bf16 %v1203, %v1192
  %v1413 = vpack.c.bf16 %v1204, %v1193
  %v1414 = vpack.c.bf16 %v1205, %v1194
  %v1415 = vpack.c.bf16 %v1206, %v1195
  %v1416 = vpack.c.bf16 %v1207, %v1196
  %v1417 = vpack.c.bf16 %v1208, %v1197
  %v1418 = vpack.c.bf16 %v1209, %v1198
  %v1419 = vpack.c.bf16 %v1210, %v1199
  %v1420 = vpack.c.bf16 %v1211, %v1200
  %v1421 = vpack.c.bf16 %v1212, %v1201
  %v1422 = vpack.c.bf16 %v1213, %v1202
  %v1423 = vpack.c.bf16 %v1225, %v1214
  %v1424 = vpack.c.bf16 %v1226, %v1215
  %v1425 = vpack.c.bf16 %v1227, %v1216
  %v1426 = vpack.c.bf16 %v1228, %v1217
  %v1427 = vpack.c.bf16 %v1229, %v1218
  %v1428 = vpack.c.bf16 %v1230, %v1219
  %v1429 = vpack.c.bf16 %v1231, %v1220
  %v1430 = vpack.c.bf16 %v1232, %v1221
  %v1431 = vpack.c.bf16 %v1233, %v1222
  %v1432 = vpack.c.bf16 %v1234, %v1223
  %v1433 = vpack.c.bf16 %v1235, %v1224
  %v1434 = vpack.c.bf16 %v1247, %v1236
  %v1435 = vpack.c.bf16 %v1248, %v1237
  %v1436 = vpack.c.bf16 %v1249, %v1238
  %v1437 = vpack.c.bf16 %v1250, %v1239
  %v1438 = vpack.c.bf16 %v1251, %v1240
  %v1439 = vpack.c.bf16 %v1252, %v1241
  %v1440 = vpack.c.bf16 %v1253, %v1242
  %v1441 = vpack.c.bf16 %v1254, %v1243
  %v1442 = vpack.c.bf16 %v1255, %v1244
  %v1443 = vpack.c.bf16 %v1256, %v1245
  %v1444 = vpack.c.bf16 %v1257, %v1246
  %v1445 = vpack.c.bf16 %v1269, %v1258
  %v1446 = vpack.c.bf16 %v1270, %v1259
  %v1447 = vpack.c.bf16 %v1271, %v1260
  %v1448 = vpack.c.bf16 %v1272, %v1261
  %v1449 = vpack.c.bf16 %v1273, %v1262
  %v1450 = vpack.c.bf16 %v1274, %v1263
  %v1451 = vpack.c.bf16 %v1275, %v1264
  %v1452 = vpack.c.bf16 %v1276, %v1265
  %v1453 = vpack.c.bf16 %v1277, %v1266
  %v1454 = vpack.c.bf16 %v1278, %v1267
  %v1455 = vpack.c.bf16 %v1279, %v1268
  %v1456 = vpack.c.bf16 %v1291, %v1280
  %v1457 = vpack.c.bf16 %v1292, %v1281
  %v1458 = vpack.c.bf16 %v1293, %v1282
  %v1459 = vpack.c.bf16 %v1294, %v1283
  %v1460 = vpack.c.bf16 %v1295, %v1284
  %v1461 = vpack.c.bf16 %v1296, %v1285
  %v1462 = vpack.c.bf16 %v1297, %v1286
  %v1463 = vpack.c.bf16 %v1298, %v1287
  %v1464 = vpack.c.bf16 %v1299, %v1288
  %v1465 = vpack.c.bf16 %v1300, %v1289
  %v1466 = vpack.c.bf16 %v1301, %v1290
  %v1467 = vpack.c.bf16 %v1313, %v1302
  %v1468 = vpack.c.bf16 %v1314, %v1303
  %v1469 = vpack.c.bf16 %v1315, %v1304
  %v1470 = vpack.c.bf16 %v1316, %v1305
  %v1471 = vpack.c.bf16 %v1317, %v1306
  %v1472 = vpack.c.bf16 %v1318, %v1307
  %v1473 = vpack.c.bf16 %v1319, %v1308
  %v1474 = vpack.c.bf16 %v1320, %v1309
  %v1475 = vpack.c.bf16 %v1321, %v1310
  %v1476 = vpack.c.bf16 %v1322, %v1311
  %v1477 = vpack.c.bf16 %v1323, %v1312
  %v1478 = vld [vmem:[%s3] sm:$0xff]
  %v1479 = vld [vmem:[%s3 + $0x8] sm:$0xff]
  %v1480 = vld [vmem:[%s3 + $0x10] sm:$0xff]
  %v1481 = vld [vmem:[%s3 + $0x18] sm:$0xff]
  %v1482 = vld [vmem:[%s3 + $0x20] sm:$0xff]
  %v1483 = vld [vmem:[%s3 + $0x28] sm:$0xff]
  %v1484 = vld [vmem:[%s3 + $0x30] sm:$0xff]
  %v1485 = vld [vmem:[%s3 + $0x38] sm:$0xff]
  %v1486 = vld [vmem:[%s3 + $0x40] sm:$0xff]
  %v1487 = vld [vmem:[%s3 + $0x48] sm:$0xff]
  %v1488 = vld [vmem:[%s3 + $0x50] sm:$0xff]
  %v1489 = vld [vmem:[%s3 + $0x58] sm:$0xff]
  %v1490 = vld [vmem:[%s3 + $0x60] sm:$0xff]
  %v1491 = vld [vmem:[%s3 + $0x68] sm:$0xff]
  %v1492 = vld [vmem:[%s3 + $0x70] sm:$0xff]
  %v1493 = vld [vmem:[%s3 + $0x78] sm:$0xff]
  %v1494 = vld [vmem:[%s3 + $0x80] sm:$0xff]
  %v1495 = vld [vmem:[%s3 + $0x88] sm:$0xff]
  %v1496 = vld [vmem:[%s3 + $0x90] sm:$0xff]
  %v1497 = vld [vmem:[%s3 + $0x98] sm:$0xff]
  %v1498 = vld [vmem:[%s3 + $0xa0] sm:$0xff]
  %v1499 = vld [vmem:[%s3 + $0xa8] sm:$0xff]
  %v1500 = vld [vmem:[%s3 + $0xb0] sm:$0xff]
  %v1501 = vld [vmem:[%s3 + $0xb8] sm:$0xff]
  %v1502 = vld [vmem:[%s3 + $0xc0] sm:$0xff]
  %v1503 = vld [vmem:[%s3 + $0xc8] sm:$0xff]
  %v1504 = vld [vmem:[%s3 + $0xd0] sm:$0xff]
  %v1505 = vld [vmem:[%s3 + $0xd8] sm:$0xff]
  %v1506 = vld [vmem:[%s3 + $0xe0] sm:$0xff]
  %v1507 = vld [vmem:[%s3 + $0xe8] sm:$0xff]
  %v1508 = vld [vmem:[%s3 + $0xf0] sm:$0xff]
  %v1509 = vld [vmem:[%s3 + $0xf8] sm:$0xff]
  %v1510 = vld [vmem:[%s3 + $0x100] sm:$0xff]
  %v1511 = vld [vmem:[%s3 + $0x108] sm:$0xff]
  %v1512 = vld [vmem:[%s3 + $0x110] sm:$0xff]
  %v1513 = vld [vmem:[%s3 + $0x118] sm:$0xff]
  %v1514 = vld [vmem:[%s3 + $0x120] sm:$0xff]
  %v1515 = vld [vmem:[%s3 + $0x128] sm:$0xff]
  %v1516 = vld [vmem:[%s3 + $0x130] sm:$0xff]
  %v1517 = vld [vmem:[%s3 + $0x138] sm:$0xff]
  %v1518 = vld [vmem:[%s3 + $0x140] sm:$0xff]
  %v1519 = vld [vmem:[%s3 + $0x148] sm:$0xff]
  %v1520 = vld [vmem:[%s3 + $0x150] sm:$0xff]
  %v1521 = vld [vmem:[%s3 + $0x158] sm:$0xff]
  %v1522 = vld [vmem:[%s3 + $0x160] sm:$0xff]
  %v1523 = vld [vmem:[%s3 + $0x168] sm:$0xff]
  %v1524 = vld [vmem:[%s3 + $0x170] sm:$0xff]
  %v1525 = vld [vmem:[%s3 + $0x178] sm:$0xff]
  %v1526 = vld [vmem:[%s3 + $0x180] sm:$0xff]
  %v1527 = vld [vmem:[%s3 + $0x188] sm:$0xff]
  %v1528 = vld [vmem:[%s3 + $0x190] sm:$0xff]
  %v1529 = vld [vmem:[%s3 + $0x198] sm:$0xff]
  %v1530 = vld [vmem:[%s3 + $0x1a0] sm:$0xff]
  %v1531 = vld [vmem:[%s3 + $0x1a8] sm:$0xff]
  %v1532 = vld [vmem:[%s3 + $0x1b0] sm:$0xff]
  %v1533 = vld [vmem:[%s3 + $0x1b8] sm:$0xff]
  %v1534 = vld [vmem:[%s3 + $0x1c0] sm:$0xff]
  %v1535 = vld [vmem:[%s3 + $0x1c8] sm:$0xff]
  %v1536 = vld [vmem:[%s3 + $0x1d0] sm:$0xff]
  %v1537 = vld [vmem:[%s3 + $0x1d8] sm:$0xff]
  %v1538 = vld [vmem:[%s3 + $0x1e0] sm:$0xff]
  %v1539 = vld [vmem:[%s3 + $0x1e8] sm:$0xff]
  %v1540 = vld [vmem:[%s3 + $0x1f0] sm:$0xff]
  %v1541 = vld [vmem:[%s3 + $0x1f8] sm:$0xff]
  %v1542 = vld [vmem:[%s3 + $0x200] sm:$0xff]
  %v1543 = vld [vmem:[%s3 + $0x208] sm:$0xff]
  %v1544 = vld [vmem:[%s3 + $0x210] sm:$0xff]
  %v1545 = vld [vmem:[%s3 + $0x218] sm:$0xff]
  %v1546 = vld [vmem:[%s3 + $0x220] sm:$0xff]
  %v1547 = vld [vmem:[%s3 + $0x228] sm:$0xff]
  %v1548 = vld [vmem:[%s3 + $0x230] sm:$0xff]
  %v1549 = vld [vmem:[%s3 + $0x238] sm:$0xff]
  %v1550 = vld [vmem:[%s3 + $0x240] sm:$0xff]
  %v1551 = vld [vmem:[%s3 + $0x248] sm:$0xff]
  %v1552 = vld [vmem:[%s3 + $0x250] sm:$0xff]
  %v1553 = vld [vmem:[%s3 + $0x258] sm:$0xff]
  %v1554 = vld [vmem:[%s3 + $0x260] sm:$0xff]
  %v1555 = vld [vmem:[%s3 + $0x268] sm:$0xff]
  %v1556 = vld [vmem:[%s3 + $0x270] sm:$0xff]
  %v1557 = vld [vmem:[%s3 + $0x278] sm:$0xff]
  %v1558 = vld [vmem:[%s3 + $0x280] sm:$0xff]
  %v1559 = vld [vmem:[%s3 + $0x288] sm:$0xff]
  %v1560 = vld [vmem:[%s3 + $0x290] sm:$0xff]
  %v1561 = vld [vmem:[%s3 + $0x298] sm:$0xff]
  %v1562 = vld [vmem:[%s3 + $0x2a0] sm:$0xff]
  %v1563 = vld [vmem:[%s3 + $0x2a8] sm:$0xff]
  %v1564 = vld [vmem:[%s3 + $0x2b0] sm:$0xff]
  %v1565 = vld [vmem:[%s3 + $0x2b8] sm:$0xff]
  %v1566 = vld [vmem:[%s3 + $0x2c0] sm:$0xff]
  %v1567 = vld [vmem:[%s3 + $0x2c8] sm:$0xff]
  %v1568 = vld [vmem:[%s3 + $0x2d0] sm:$0xff]
  %v1569 = vld [vmem:[%s3 + $0x2d8] sm:$0xff]
  %v1570 = vld [vmem:[%s3 + $0x2e0] sm:$0xff]
  %v1571 = vld [vmem:[%s3 + $0x2e8] sm:$0xff]
  %v1572 = vld [vmem:[%s3 + $0x2f0] sm:$0xff]
  %v1573 = vld [vmem:[%s3 + $0x2f8] sm:$0xff]
  %v1574 = vld [vmem:[%s3 + $0x300] sm:$0xff]
  %v1575 = vld [vmem:[%s3 + $0x308] sm:$0xff]
  %v1576 = vld [vmem:[%s3 + $0x310] sm:$0xff]
  %v1577 = vld [vmem:[%s3 + $0x318] sm:$0xff]
  %v1578 = vld [vmem:[%s3 + $0x320] sm:$0xff]
  %v1579 = vld [vmem:[%s3 + $0x328] sm:$0xff]
  %v1580 = vld [vmem:[%s3 + $0x330] sm:$0xff]
  %v1581 = vld [vmem:[%s3 + $0x338] sm:$0xff]
  %v1582 = vld [vmem:[%s3 + $0x340] sm:$0xff]
  %v1583 = vld [vmem:[%s3 + $0x348] sm:$0xff]
  %v1584 = vld [vmem:[%s3 + $0x350] sm:$0xff]
  %v1585 = vld [vmem:[%s3 + $0x358] sm:$0xff]
  %v1586 = vld [vmem:[%s3 + $0x360] sm:$0xff]
  %v1587 = vld [vmem:[%s3 + $0x368] sm:$0xff]
  %v1588 = vld [vmem:[%s3 + $0x370] sm:$0xff]
  %v1589 = vld [vmem:[%s3 + $0x378] sm:$0xff]
  %v1590 = vld [vmem:[%s3 + $0x380] sm:$0xff]
  %v1591 = vld [vmem:[%s3 + $0x388] sm:$0xff]
  %v1592 = vld [vmem:[%s3 + $0x390] sm:$0xff]
  %v1593 = vld [vmem:[%s3 + $0x398] sm:$0xff]
  %v1594 = vld [vmem:[%s3 + $0x3a0] sm:$0xff]
  %v1595 = vld [vmem:[%s3 + $0x3a8] sm:$0xff]
  %v1596 = vld [vmem:[%s3 + $0x3b0] sm:$0xff]
  %v1597 = vld [vmem:[%s3 + $0x3b8] sm:$0xff]
  %v1598 = vld [vmem:[%s3 + $0x3c0] sm:$0xff]
  %v1599 = vld [vmem:[%s3 + $0x3c8] sm:$0xff]
  %v1600 = vld [vmem:[%s3 + $0x3d0] sm:$0xff]
  %v1601 = vld [vmem:[%s3 + $0x3d8] sm:$0xff]
  %v1602 = vld [vmem:[%s3 + $0x3e0] sm:$0xff]
  %v1603 = vld [vmem:[%s3 + $0x3e8] sm:$0xff]
  %v1604 = vld [vmem:[%s3 + $0x3f0] sm:$0xff]
  %v1605 = vld [vmem:[%s3 + $0x3f8] sm:$0xff]
  %v1606 = vld [vmem:[%s3 + $0x400] sm:$0xff]
  %v1607 = vld [vmem:[%s3 + $0x408] sm:$0xff]
  %v1608 = vld [vmem:[%s3 + $0x410] sm:$0xff]
  %v1609 = vld [vmem:[%s3 + $0x418] sm:$0xff]
  %v1610 = vld [vmem:[%s3 + $0x420] sm:$0xff]
  %v1611 = vld [vmem:[%s3 + $0x428] sm:$0xff]
  %v1612 = vld [vmem:[%s3 + $0x430] sm:$0xff]
  %v1613 = vld [vmem:[%s3 + $0x438] sm:$0xff]
  %v1614 = vld [vmem:[%s3 + $0x440] sm:$0xff]
  %v1615 = vld [vmem:[%s3 + $0x448] sm:$0xff]
  %v1616 = vld [vmem:[%s3 + $0x450] sm:$0xff]
  %v1617 = vld [vmem:[%s3 + $0x458] sm:$0xff]
  %v1618 = vld [vmem:[%s3 + $0x460] sm:$0xff]
  %v1619 = vld [vmem:[%s3 + $0x468] sm:$0xff]
  %v1620 = vld [vmem:[%s3 + $0x470] sm:$0xff]
  %v1621 = vld [vmem:[%s3 + $0x478] sm:$0xff]
  %v1622 = vld [vmem:[%s3 + $0x480] sm:$0xff]
  %v1623 = vld [vmem:[%s3 + $0x488] sm:$0xff]
  %v1624 = vld [vmem:[%s3 + $0x490] sm:$0xff]
  %v1625 = vld [vmem:[%s3 + $0x498] sm:$0xff]
  %v1626 = vld [vmem:[%s3 + $0x4a0] sm:$0xff]
  %v1627 = vld [vmem:[%s3 + $0x4a8] sm:$0xff]
  %v1628 = vld [vmem:[%s3 + $0x4b0] sm:$0xff]
  %v1629 = vld [vmem:[%s3 + $0x4b8] sm:$0xff]
  %v1630 = vld [vmem:[%s3 + $0x4c0] sm:$0xff]
  %v1631 = vld [vmem:[%s3 + $0x4c8] sm:$0xff]
  %v1632 = vld [vmem:[%s3 + $0x4d0] sm:$0xff]
  %v1633 = vld [vmem:[%s3 + $0x4d8] sm:$0xff]
  %v1634 = vld [vmem:[%s3 + $0x4e0] sm:$0xff]
  %v1635 = vld [vmem:[%s3 + $0x4e8] sm:$0xff]
  %v1636 = vld [vmem:[%s3 + $0x4f0] sm:$0xff]
  %v1637 = vld [vmem:[%s3 + $0x4f8] sm:$0xff]
  %v1638 = vld [vmem:[%s3 + $0x500] sm:$0xff]
  %v1639 = vld [vmem:[%s3 + $0x508] sm:$0xff]
  %v1640 = vld [vmem:[%s3 + $0x510] sm:$0xff]
  %v1641 = vld [vmem:[%s3 + $0x518] sm:$0xff]
  %v1642 = vld [vmem:[%s3 + $0x520] sm:$0xff]
  %v1643 = vld [vmem:[%s3 + $0x528] sm:$0xff]
  %v1644 = vld [vmem:[%s3 + $0x530] sm:$0xff]
  %v1645 = vld [vmem:[%s3 + $0x538] sm:$0xff]
  %v1646 = vld [vmem:[%s3 + $0x540] sm:$0xff]
  %v1647 = vld [vmem:[%s3 + $0x548] sm:$0xff]
  %v1648 = vld [vmem:[%s3 + $0x550] sm:$0xff]
  %v1649 = vld [vmem:[%s3 + $0x558] sm:$0xff]
  %v1650 = vld [vmem:[%s3 + $0x560] sm:$0xff]
  %v1651 = vld [vmem:[%s3 + $0x568] sm:$0xff]
  %v1652 = vld [vmem:[%s3 + $0x570] sm:$0xff]
  %v1653 = vld [vmem:[%s3 + $0x578] sm:$0xff]
  %v1654 = vld [vmem:[%s3 + $0x580] sm:$0xff]
  %v1655 = vld [vmem:[%s3 + $0x588] sm:$0xff]
  %v1656 = vld [vmem:[%s3 + $0x590] sm:$0xff]
  %v1657 = vld [vmem:[%s3 + $0x598] sm:$0xff]
  %v1658 = vld [vmem:[%s3 + $0x5a0] sm:$0xff]
  %v1659 = vld [vmem:[%s3 + $0x5a8] sm:$0xff]
  %v1660 = vld [vmem:[%s3 + $0x5b0] sm:$0xff]
  %v1661 = vld [vmem:[%s3 + $0x5b8] sm:$0xff]
  %v1662 = vld [vmem:[%s3 + $0x5c0] sm:$0xff]
  %v1663 = vld [vmem:[%s3 + $0x5c8] sm:$0xff]
  %v1664 = vld [vmem:[%s3 + $0x5d0] sm:$0xff]
  %v1665 = vld [vmem:[%s3 + $0x5d8] sm:$0xff]
  %v1666 = vld [vmem:[%s3 + $0x5e0] sm:$0xff]
  %v1667 = vld [vmem:[%s3 + $0x5e8] sm:$0xff]
  %v1668 = vld [vmem:[%s3 + $0x5f0] sm:$0xff]
  %v1669 = vld [vmem:[%s3 + $0x5f8] sm:$0xff]
  %v1670 = vld [vmem:[%s3 + $0x600] sm:$0xff]
  %v1671 = vld [vmem:[%s3 + $0x608] sm:$0xff]
  %v1672 = vld [vmem:[%s3 + $0x610] sm:$0xff]
  %v1673 = vld [vmem:[%s3 + $0x618] sm:$0xff]
  %v1674 = vld [vmem:[%s3 + $0x620] sm:$0xff]
  %v1675 = vld [vmem:[%s3 + $0x628] sm:$0xff]
  %v1676 = vld [vmem:[%s3 + $0x630] sm:$0xff]
  %v1677 = vld [vmem:[%s3 + $0x638] sm:$0xff]
  %v1678 = vld [vmem:[%s3 + $0x640] sm:$0xff]
  %v1679 = vld [vmem:[%s3 + $0x648] sm:$0xff]
  %v1680 = vld [vmem:[%s3 + $0x650] sm:$0xff]
  %v1681 = vld [vmem:[%s3 + $0x658] sm:$0xff]
  %v1682 = vld [vmem:[%s3 + $0x660] sm:$0xff]
  %v1683 = vld [vmem:[%s3 + $0x668] sm:$0xff]
  %v1684 = vld [vmem:[%s3 + $0x670] sm:$0xff]
  %v1685 = vld [vmem:[%s3 + $0x678] sm:$0xff]
  %v1686 = vld [vmem:[%s3 + $0x680] sm:$0xff]
  %v1687 = vld [vmem:[%s3 + $0x688] sm:$0xff]
  %v1688 = vld [vmem:[%s3 + $0x690] sm:$0xff]
  %v1689 = vld [vmem:[%s3 + $0x698] sm:$0xff]
  %v1690 = vld [vmem:[%s3 + $0x6a0] sm:$0xff]
  %v1691 = vld [vmem:[%s3 + $0x6a8] sm:$0xff]
  %v1692 = vld [vmem:[%s3 + $0x6b0] sm:$0xff]
  %v1693 = vld [vmem:[%s3 + $0x6b8] sm:$0xff]
  %v1694 = vld [vmem:[%s3 + $0x6c0] sm:$0xff]
  %v1695 = vld [vmem:[%s3 + $0x6c8] sm:$0xff]
  %v1696 = vld [vmem:[%s3 + $0x6d0] sm:$0xff]
  %v1697 = vld [vmem:[%s3 + $0x6d8] sm:$0xff]
  %v1698 = vld [vmem:[%s3 + $0x6e0] sm:$0xff]
  %v1699 = vld [vmem:[%s3 + $0x6e8] sm:$0xff]
  %v1700 = vld [vmem:[%s3 + $0x6f0] sm:$0xff]
  %v1701 = vld [vmem:[%s3 + $0x6f8] sm:$0xff]
  %v1702 = vld [vmem:[%s3 + $0x700] sm:$0xff]
  %v1703 = vld [vmem:[%s3 + $0x708] sm:$0xff]
  %v1704 = vld [vmem:[%s3 + $0x710] sm:$0xff]
  %v1705 = vld [vmem:[%s3 + $0x718] sm:$0xff]
  %v1706 = vld [vmem:[%s3 + $0x720] sm:$0xff]
  %v1707 = vld [vmem:[%s3 + $0x728] sm:$0xff]
  %v1708 = vld [vmem:[%s3 + $0x730] sm:$0xff]
  %v1709 = vld [vmem:[%s3 + $0x738] sm:$0xff]
  %v1710 = vld [vmem:[%s3 + $0x740] sm:$0xff]
  %v1711 = vld [vmem:[%s3 + $0x748] sm:$0xff]
  %v1712 = vld [vmem:[%s3 + $0x750] sm:$0xff]
  %v1713 = vld [vmem:[%s3 + $0x758] sm:$0xff]
  %v1714 = vld [vmem:[%s3 + $0x760] sm:$0xff]
  %v1715 = vld [vmem:[%s3 + $0x768] sm:$0xff]
  %v1716 = vld [vmem:[%s3 + $0x770] sm:$0xff]
  %v1717 = vld [vmem:[%s3 + $0x778] sm:$0xff]
  %v1718 = vld [vmem:[%s3 + $0x780] sm:$0xff]
  %v1719 = vld [vmem:[%s3 + $0x788] sm:$0xff]
  %v1720 = vld [vmem:[%s3 + $0x790] sm:$0xff]
  %v1721 = vld [vmem:[%s3 + $0x798] sm:$0xff]
  %v1722 = vld [vmem:[%s3 + $0x7a0] sm:$0xff]
  %v1723 = vld [vmem:[%s3 + $0x7a8] sm:$0xff]
  %v1724 = vld [vmem:[%s3 + $0x7b0] sm:$0xff]
  %v1725 = vld [vmem:[%s3 + $0x7b8] sm:$0xff]
  %v1726 = vld [vmem:[%s3 + $0x7c0] sm:$0xff]
  %v1727 = vld [vmem:[%s3 + $0x7c8] sm:$0xff]
  %v1728 = vld [vmem:[%s3 + $0x7d0] sm:$0xff]
  %v1729 = vld [vmem:[%s3 + $0x7d8] sm:$0xff]
  %v1730 = vld [vmem:[%s3 + $0x7e0] sm:$0xff]
  %v1731 = vld [vmem:[%s3 + $0x7e8] sm:$0xff]
  %v1732 = vld [vmem:[%s3 + $0x7f0] sm:$0xff]
  %v1733 = vld [vmem:[%s3 + $0x7f8] sm:$0xff]
  %v1734 = vld [vmem:[%s3 + $0x800] sm:$0xff]
  %v1735 = vld [vmem:[%s3 + $0x808] sm:$0xff]
  %v1736 = vld [vmem:[%s3 + $0x810] sm:$0xff]
  %v1737 = vld [vmem:[%s3 + $0x818] sm:$0xff]
  %v1738 = vld [vmem:[%s3 + $0x820] sm:$0xff]
  %v1739 = vld [vmem:[%s3 + $0x828] sm:$0xff]
  %v1740 = vld [vmem:[%s3 + $0x830] sm:$0xff]
  %v1741 = vld [vmem:[%s3 + $0x838] sm:$0xff]
  %v1742 = vld [vmem:[%s3 + $0x840] sm:$0xff]
  %v1743 = vld [vmem:[%s3 + $0x848] sm:$0xff]
  %v1744 = vld [vmem:[%s3 + $0x850] sm:$0xff]
  %v1745 = vld [vmem:[%s3 + $0x858] sm:$0xff]
  %v1746 = vld [vmem:[%s3 + $0x860] sm:$0xff]
  %v1747 = vld [vmem:[%s3 + $0x868] sm:$0xff]
  %v1748 = vld [vmem:[%s3 + $0x870] sm:$0xff]
  %v1749 = vld [vmem:[%s3 + $0x878] sm:$0xff]
  %v1750 = vld [vmem:[%s3 + $0x880] sm:$0xff]
  %v1751 = vld [vmem:[%s3 + $0x888] sm:$0xff]
  %v1752 = vld [vmem:[%s3 + $0x890] sm:$0xff]
  %v1753 = vld [vmem:[%s3 + $0x898] sm:$0xff]
  %v1754 = vld [vmem:[%s3 + $0x8a0] sm:$0xff]
  %v1755 = vld [vmem:[%s3 + $0x8a8] sm:$0xff]
  %v1756 = vld [vmem:[%s3 + $0x8b0] sm:$0xff]
  %v1757 = vld [vmem:[%s3 + $0x8b8] sm:$0xff]
  %v1758 = vld [vmem:[%s3 + $0x8c0] sm:$0xff]
  %v1759 = vld [vmem:[%s3 + $0x8c8] sm:$0xff]
  %v1760 = vld [vmem:[%s3 + $0x8d0] sm:$0xff]
  %v1761 = vld [vmem:[%s3 + $0x8d8] sm:$0xff]
  %v1762 = vld [vmem:[%s3 + $0x8e0] sm:$0xff]
  %v1763 = vld [vmem:[%s3 + $0x8e8] sm:$0xff]
  %v1764 = vld [vmem:[%s3 + $0x8f0] sm:$0xff]
  %v1765 = vld [vmem:[%s3 + $0x8f8] sm:$0xff]
  %v1766 = vld [vmem:[%s3 + $0x900] sm:$0xff]
  %v1767 = vld [vmem:[%s3 + $0x908] sm:$0xff]
  %v1768 = vld [vmem:[%s3 + $0x910] sm:$0xff]
  %v1769 = vld [vmem:[%s3 + $0x918] sm:$0xff]
  %v1770 = vld [vmem:[%s3 + $0x920] sm:$0xff]
  %v1771 = vld [vmem:[%s3 + $0x928] sm:$0xff]
  %v1772 = vld [vmem:[%s3 + $0x930] sm:$0xff]
  %v1773 = vld [vmem:[%s3 + $0x938] sm:$0xff]
  %v1774 = vld [vmem:[%s3 + $0x940] sm:$0xff]
  %v1775 = vld [vmem:[%s3 + $0x948] sm:$0xff]
  %v1776 = vld [vmem:[%s3 + $0x950] sm:$0xff]
  %v1777 = vld [vmem:[%s3 + $0x958] sm:$0xff]
  %v1778 = vld [vmem:[%s3 + $0x960] sm:$0xff]
  %v1779 = vld [vmem:[%s3 + $0x968] sm:$0xff]
  %v1780 = vld [vmem:[%s3 + $0x970] sm:$0xff]
  %v1781 = vld [vmem:[%s3 + $0x978] sm:$0xff]
  %v1782 = vld [vmem:[%s3 + $0x980] sm:$0xff]
  %v1783 = vld [vmem:[%s3 + $0x988] sm:$0xff]
  %v1784 = vld [vmem:[%s3 + $0x990] sm:$0xff]
  %v1785 = vld [vmem:[%s3 + $0x998] sm:$0xff]
  %v1786 = vld [vmem:[%s3 + $0x9a0] sm:$0xff]
  %v1787 = vld [vmem:[%s3 + $0x9a8] sm:$0xff]
  %v1788 = vld [vmem:[%s3 + $0x9b0] sm:$0xff]
  %v1789 = vld [vmem:[%s3 + $0x9b8] sm:$0xff]
  %v1790 = vld [vmem:[%s3 + $0x9c0] sm:$0xff]
  %v1791 = vld [vmem:[%s3 + $0x9c8] sm:$0xff]
  %v1792 = vld [vmem:[%s3 + $0x9d0] sm:$0xff]
  %v1793 = vld [vmem:[%s3 + $0x9d8] sm:$0xff]
  %v1794 = vld [vmem:[%s3 + $0x9e0] sm:$0xff]
  %v1795 = vld [vmem:[%s3 + $0x9e8] sm:$0xff]
  %v1796 = vld [vmem:[%s3 + $0x9f0] sm:$0xff]
  %v1797 = vld [vmem:[%s3 + $0x9f8] sm:$0xff]
  %v1798 = vld [vmem:[%s3 + $0xa00] sm:$0xff]
  %v1799 = vld [vmem:[%s3 + $0xa08] sm:$0xff]
  %v1800 = vld [vmem:[%s3 + $0xa10] sm:$0xff]
  %v1801 = vld [vmem:[%s3 + $0xa18] sm:$0xff]
  %v1802 = vld [vmem:[%s3 + $0xa20] sm:$0xff]
  %v1803 = vld [vmem:[%s3 + $0xa28] sm:$0xff]
  %v1804 = vld [vmem:[%s3 + $0xa30] sm:$0xff]
  %v1805 = vld [vmem:[%s3 + $0xa38] sm:$0xff]
  %v1806 = vld [vmem:[%s3 + $0xa40] sm:$0xff]
  %v1807 = vld [vmem:[%s3 + $0xa48] sm:$0xff]
  %v1808 = vld [vmem:[%s3 + $0xa50] sm:$0xff]
  %v1809 = vld [vmem:[%s3 + $0xa58] sm:$0xff]
  %v1810 = vld [vmem:[%s3 + $0xa60] sm:$0xff]
  %v1811 = vld [vmem:[%s3 + $0xa68] sm:$0xff]
  %v1812 = vld [vmem:[%s3 + $0xa70] sm:$0xff]
  %v1813 = vld [vmem:[%s3 + $0xa78] sm:$0xff]
  %v1814 = vpack.c.bf16 %v1480, %v1478
  %v1815 = vpack.c.bf16 %v1481, %v1479
  %v1816 = vpack.c.bf16 %v1484, %v1482
  %v1817 = vpack.c.bf16 %v1485, %v1483
  %v1818 = vpack.c.bf16 %v1488, %v1486
  %v1819 = vpack.c.bf16 %v1489, %v1487
  %v1820 = vpack.c.bf16 %v1492, %v1490
  %v1821 = vpack.c.bf16 %v1493, %v1491
  %v1822 = vpack.c.bf16 %v1496, %v1494
  %v1823 = vpack.c.bf16 %v1497, %v1495
  %v1824 = vpack.c.bf16 %v1500, %v1498
  %v1825 = vpack.c.bf16 %v1501, %v1499
  %v1826 = vpack.c.bf16 %v1504, %v1502
  %v1827 = vpack.c.bf16 %v1505, %v1503
  %v1828 = vpack.c.bf16 %v1508, %v1506
  %v1829 = vpack.c.bf16 %v1509, %v1507
  %v1830 = vpack.c.bf16 %v1512, %v1510
  %v1831 = vpack.c.bf16 %v1513, %v1511
  %v1832 = vpack.c.bf16 %v1516, %v1514
  %v1833 = vpack.c.bf16 %v1517, %v1515
  %v1834 = vpack.c.bf16 %v1520, %v1518
  %v1835 = vpack.c.bf16 %v1521, %v1519
  %v1836 = vpack.c.bf16 %v1524, %v1522
  %v1837 = vpack.c.bf16 %v1525, %v1523
  %v1838 = vpack.c.bf16 %v1528, %v1526
  %v1839 = vpack.c.bf16 %v1529, %v1527
  %v1840 = vpack.c.bf16 %v1532, %v1530
  %v1841 = vpack.c.bf16 %v1533, %v1531
  %v1842 = vpack.c.bf16 %v1536, %v1534
  %v1843 = vpack.c.bf16 %v1537, %v1535
  %v1844 = vpack.c.bf16 %v1540, %v1538
  %v1845 = vpack.c.bf16 %v1541, %v1539
  %v1846 = vpack.c.bf16 %v1544, %v1542
  %v1847 = vpack.c.bf16 %v1545, %v1543
  %v1848 = vpack.c.bf16 %v1548, %v1546
  %v1849 = vpack.c.bf16 %v1549, %v1547
  %v1850 = vpack.c.bf16 %v1552, %v1550
  %v1851 = vpack.c.bf16 %v1553, %v1551
  %v1852 = vpack.c.bf16 %v1556, %v1554
  %v1853 = vpack.c.bf16 %v1557, %v1555
  %v1854 = vpack.c.bf16 %v1560, %v1558
  %v1855 = vpack.c.bf16 %v1561, %v1559
  %v1856 = vpack.c.bf16 %v1564, %v1562
  %v1857 = vpack.c.bf16 %v1565, %v1563
  %v1858 = vpack.c.bf16 %v1568, %v1566
  %v1859 = vpack.c.bf16 %v1569, %v1567
  %v1860 = vpack.c.bf16 %v1572, %v1570
  %v1861 = vpack.c.bf16 %v1573, %v1571
  %v1862 = vpack.c.bf16 %v1576, %v1574
  %v1863 = vpack.c.bf16 %v1577, %v1575
  %v1864 = vpack.c.bf16 %v1580, %v1578
  %v1865 = vpack.c.bf16 %v1581, %v1579
  %v1866 = vpack.c.bf16 %v1584, %v1582
  %v1867 = vpack.c.bf16 %v1585, %v1583
  %v1868 = vpack.c.bf16 %v1588, %v1586
  %v1869 = vpack.c.bf16 %v1589, %v1587
  %v1870 = vpack.c.bf16 %v1592, %v1590
  %v1871 = vpack.c.bf16 %v1593, %v1591
  %v1872 = vpack.c.bf16 %v1596, %v1594
  %v1873 = vpack.c.bf16 %v1597, %v1595
  %v1874 = vpack.c.bf16 %v1600, %v1598
  %v1875 = vpack.c.bf16 %v1601, %v1599
  %v1876 = vpack.c.bf16 %v1604, %v1602
  %v1877 = vpack.c.bf16 %v1605, %v1603
  %v1878 = vpack.c.bf16 %v1608, %v1606
  %v1879 = vpack.c.bf16 %v1609, %v1607
  %v1880 = vpack.c.bf16 %v1612, %v1610
  %v1881 = vpack.c.bf16 %v1613, %v1611
  %v1882 = vpack.c.bf16 %v1616, %v1614
  %v1883 = vpack.c.bf16 %v1617, %v1615
  %v1884 = vpack.c.bf16 %v1620, %v1618
  %v1885 = vpack.c.bf16 %v1621, %v1619
  %v1886 = vpack.c.bf16 %v1624, %v1622
  %v1887 = vpack.c.bf16 %v1625, %v1623
  %v1888 = vpack.c.bf16 %v1628, %v1626
  %v1889 = vpack.c.bf16 %v1629, %v1627
  %v1890 = vpack.c.bf16 %v1632, %v1630
  %v1891 = vpack.c.bf16 %v1633, %v1631
  %v1892 = vpack.c.bf16 %v1636, %v1634
  %v1893 = vpack.c.bf16 %v1637, %v1635
  %v1894 = vpack.c.bf16 %v1640, %v1638
  %v1895 = vpack.c.bf16 %v1641, %v1639
  %v1896 = vpack.c.bf16 %v1644, %v1642
  %v1897 = vpack.c.bf16 %v1645, %v1643
  %v1898 = vpack.c.bf16 %v1648, %v1646
  %v1899 = vpack.c.bf16 %v1649, %v1647
  %v1900 = vpack.c.bf16 %v1652, %v1650
  %v1901 = vpack.c.bf16 %v1653, %v1651
  %v1902 = vpack.c.bf16 %v1656, %v1654
  %v1903 = vpack.c.bf16 %v1657, %v1655
  %v1904 = vpack.c.bf16 %v1660, %v1658
  %v1905 = vpack.c.bf16 %v1661, %v1659
  %v1906 = vpack.c.bf16 %v1664, %v1662
  %v1907 = vpack.c.bf16 %v1665, %v1663
  %v1908 = vpack.c.bf16 %v1668, %v1666
  %v1909 = vpack.c.bf16 %v1669, %v1667
  %v1910 = vpack.c.bf16 %v1672, %v1670
  %v1911 = vpack.c.bf16 %v1673, %v1671
  %v1912 = vpack.c.bf16 %v1676, %v1674
  %v1913 = vpack.c.bf16 %v1677, %v1675
  %v1914 = vpack.c.bf16 %v1680, %v1678
  %v1915 = vpack.c.bf16 %v1681, %v1679
  %v1916 = vpack.c.bf16 %v1684, %v1682
  %v1917 = vpack.c.bf16 %v1685, %v1683
  %v1918 = vpack.c.bf16 %v1688, %v1686
  %v1919 = vpack.c.bf16 %v1689, %v1687
  %v1920 = vpack.c.bf16 %v1692, %v1690
  %v1921 = vpack.c.bf16 %v1693, %v1691
  %v1922 = vpack.c.bf16 %v1696, %v1694
  %v1923 = vpack.c.bf16 %v1697, %v1695
  %v1924 = vpack.c.bf16 %v1700, %v1698
  %v1925 = vpack.c.bf16 %v1701, %v1699
  %v1926 = vpack.c.bf16 %v1704, %v1702
  %v1927 = vpack.c.bf16 %v1705, %v1703
  %v1928 = vpack.c.bf16 %v1708, %v1706
  %v1929 = vpack.c.bf16 %v1709, %v1707
  %v1930 = vpack.c.bf16 %v1712, %v1710
  %v1931 = vpack.c.bf16 %v1713, %v1711
  %v1932 = vpack.c.bf16 %v1716, %v1714
  %v1933 = vpack.c.bf16 %v1717, %v1715
  %v1934 = vpack.c.bf16 %v1720, %v1718
  %v1935 = vpack.c.bf16 %v1721, %v1719
  %v1936 = vpack.c.bf16 %v1724, %v1722
  %v1937 = vpack.c.bf16 %v1725, %v1723
  %v1938 = vpack.c.bf16 %v1728, %v1726
  %v1939 = vpack.c.bf16 %v1729, %v1727
  %v1940 = vpack.c.bf16 %v1732, %v1730
  %v1941 = vpack.c.bf16 %v1733, %v1731
  %v1942 = vpack.c.bf16 %v1736, %v1734
  %v1943 = vpack.c.bf16 %v1737, %v1735
  %v1944 = vpack.c.bf16 %v1740, %v1738
  %v1945 = vpack.c.bf16 %v1741, %v1739
  %v1946 = vpack.c.bf16 %v1744, %v1742
  %v1947 = vpack.c.bf16 %v1745, %v1743
  %v1948 = vpack.c.bf16 %v1748, %v1746
  %v1949 = vpack.c.bf16 %v1749, %v1747
  %v1950 = vpack.c.bf16 %v1752, %v1750
  %v1951 = vpack.c.bf16 %v1753, %v1751
  %v1952 = vpack.c.bf16 %v1756, %v1754
  %v1953 = vpack.c.bf16 %v1757, %v1755
  %v1954 = vpack.c.bf16 %v1760, %v1758
  %v1955 = vpack.c.bf16 %v1761, %v1759
  %v1956 = vpack.c.bf16 %v1764, %v1762
  %v1957 = vpack.c.bf16 %v1765, %v1763
  %v1958 = vpack.c.bf16 %v1768, %v1766
  %v1959 = vpack.c.bf16 %v1769, %v1767
  %v1960 = vpack.c.bf16 %v1772, %v1770
  %v1961 = vpack.c.bf16 %v1773, %v1771
  %v1962 = vpack.c.bf16 %v1776, %v1774
  %v1963 = vpack.c.bf16 %v1777, %v1775
  %v1964 = vpack.c.bf16 %v1780, %v1778
  %v1965 = vpack.c.bf16 %v1781, %v1779
  %v1966 = vpack.c.bf16 %v1784, %v1782
  %v1967 = vpack.c.bf16 %v1785, %v1783
  %v1968 = vpack.c.bf16 %v1788, %v1786
  %v1969 = vpack.c.bf16 %v1789, %v1787
  %v1970 = vpack.c.bf16 %v1792, %v1790
  %v1971 = vpack.c.bf16 %v1793, %v1791
  %v1972 = vpack.c.bf16 %v1796, %v1794
  %v1973 = vpack.c.bf16 %v1797, %v1795
  %v1974 = vpack.c.bf16 %v1800, %v1798
  %v1975 = vpack.c.bf16 %v1801, %v1799
  %v1976 = vpack.c.bf16 %v1804, %v1802
  %v1977 = vpack.c.bf16 %v1805, %v1803
  %v1978 = vpack.c.bf16 %v1808, %v1806
  %v1979 = vpack.c.bf16 %v1809, %v1807
  %v1980 = vpack.c.bf16 %v1812, %v1810
  %v1981 = vpack.c.bf16 %v1813, %v1811
  %v1983 = vsel %vm340, %v1334, 0
  %v1986 = vsel %vm340, %v1345, 0
  %v1989 = vsel %vm340, %v1356, 0
  %v1992 = vsel %vm340, %v1367, 0
  %v1995 = vsel %vm340, %v1378, 0
  %v1998 = vsel %vm340, %v1389, 0
  %v2001 = vsel %vm340, %v1400, 0
  %v2004 = vsel %vm340, %v1411, 0
  %v2007 = vsel %vm340, %v1422, 0
  %v2010 = vsel %vm340, %v1433, 0
  %v2013 = vsel %vm340, %v1444, 0
  %v2016 = vsel %vm340, %v1455, 0
  %v2019 = vsel %vm340, %v1466, 0
  %v2022 = vsel %vm340, %v1477, 0
  %2024 = vmatprep.subr.bf16.mxu0 %v1829
  %2025 = vmatpush1.bf16.msra.mxu0 %v1828
  %2026 = vmatprep.subr.bf16.mxu0 %v1827
  %2027 = vmatpush1.bf16.msra.mxu0 %v1826
  %2028 = vmatprep.subr.bf16.mxu0 %v1825
  %2029 = vmatpush1.bf16.msra.mxu0 %v1824
  %2030 = vmatprep.subr.bf16.mxu0 %v1823
  %2031 = vmatpush1.bf16.msra.mxu0 %v1822
  %2032 = vmatprep.subr.bf16.mxu0 %v1821
  %2033 = vmatpush1.bf16.msra.mxu0 %v1820
  %2034 = vmatprep.subr.bf16.mxu0 %v1819
  %2035 = vmatpush1.bf16.msra.mxu0 %v1818
  %2036 = vmatprep.subr.bf16.mxu0 %v1817
  %2037 = vmatpush1.bf16.msra.mxu0 %v1816
  %2038 = vmatprep.subr.bf16.mxu0 %v1815
  %2039 = vmatpush1.bf16.msra.mxu0 %v1814
  %2040 = vmatprep.subr.bf16.mxu0 %v1845
  %2041 = vmatpush2.bf16.msra.mxu0 %v1844
  %2042 = vmatprep.subr.bf16.mxu0 %v1843
  %2043 = vmatpush2.bf16.msra.mxu0 %v1842
  %2044 = vmatprep.subr.bf16.mxu0 %v1841
  %2045 = vmatpush2.bf16.msra.mxu0 %v1840
  %2046 = vmatprep.subr.bf16.mxu0 %v1839
  %2047 = vmatpush2.bf16.msra.mxu0 %v1838
  %2048 = vmatprep.subr.bf16.mxu0 %v1837
  %2049 = vmatpush2.bf16.msra.mxu0 %v1836
  %2050 = vmatprep.subr.bf16.mxu0 %v1835
  %2051 = vmatpush2.bf16.msra.mxu0 %v1834
  %2052 = vmatprep.subr.bf16.mxu0 %v1833
  %2053 = vmatpush2.bf16.msra.mxu0 %v1832
  %2054 = vmatprep.subr.bf16.mxu0 %v1831
  %2055 = vmatpush2.bf16.msra.mxu0 %v1830
  %2056 = vmatprep.mubr.bf16.mxu0 %v1325
  %2057 = vmatmul.mubr.bf16.gmra.mxu0 %v1324
  %v2058 = vpop.f32.mrf.mxu0
  %v2059 = vadd.f32 0.0, %v2058
  %v2060 = vpop.f32.mrf.mxu0
  %v2061 = vadd.f32 0.0, %v2060
  %v2062 = vpop.f32.mrf.mxu0
  %v2063 = vadd.f32 0.0, %v2062
  %v2064 = vpop.f32.mrf.mxu0
  %v2065 = vadd.f32 0.0, %v2064
  %2066 = vmatprep.mubr.bf16.mxu0 %v1336
  %2067 = vmatmul.mubr.bf16.gmra.mxu0 %v1335
  %v2068 = vpop.f32.mrf.mxu0
  %v2069 = vadd.f32 0.0, %v2068
  %v2070 = vpop.f32.mrf.mxu0
  %v2071 = vadd.f32 0.0, %v2070
  %v2072 = vpop.f32.mrf.mxu0
  %v2073 = vadd.f32 0.0, %v2072
  %v2074 = vpop.f32.mrf.mxu0
  %v2075 = vadd.f32 0.0, %v2074
  %2076 = vmatprep.mubr.bf16.mxu0 %v1347
  %2077 = vmatmul.mubr.bf16.gmra.mxu0 %v1346
  %v2078 = vpop.f32.mrf.mxu0
  %v2079 = vadd.f32 0.0, %v2078
  %v2080 = vpop.f32.mrf.mxu0
  %v2081 = vadd.f32 0.0, %v2080
  %v2082 = vpop.f32.mrf.mxu0
  %v2083 = vadd.f32 0.0, %v2082
  %v2084 = vpop.f32.mrf.mxu0
  %v2085 = vadd.f32 0.0, %v2084
  %2086 = vmatprep.mubr.bf16.mxu0 %v1358
  %2087 = vmatmul.mubr.bf16.gmra.mxu0 %v1357
  %v2088 = vpop.f32.mrf.mxu0
  %v2089 = vadd.f32 0.0, %v2088
  %v2090 = vpop.f32.mrf.mxu0
  %v2091 = vadd.f32 0.0, %v2090
  %v2092 = vpop.f32.mrf.mxu0
  %v2093 = vadd.f32 0.0, %v2092
  %v2094 = vpop.f32.mrf.mxu0
  %v2095 = vadd.f32 0.0, %v2094
  %2096 = vmatprep.mubr.bf16.mxu0 %v1369
  %2097 = vmatmul.mubr.bf16.gmra.mxu0 %v1368
  %v2098 = vpop.f32.mrf.mxu0
  %v2099 = vadd.f32 0.0, %v2098
  %v2100 = vpop.f32.mrf.mxu0
  %v2101 = vadd.f32 0.0, %v2100
  %v2102 = vpop.f32.mrf.mxu0
  %v2103 = vadd.f32 0.0, %v2102
  %v2104 = vpop.f32.mrf.mxu0
  %v2105 = vadd.f32 0.0, %v2104
  %2106 = vmatprep.mubr.bf16.mxu0 %v1380
  %2107 = vmatmul.mubr.bf16.gmra.mxu0 %v1379
  %v2108 = vpop.f32.mrf.mxu0
  %v2109 = vadd.f32 0.0, %v2108
  %v2110 = vpop.f32.mrf.mxu0
  %v2111 = vadd.f32 0.0, %v2110
  %v2112 = vpop.f32.mrf.mxu0
  %v2113 = vadd.f32 0.0, %v2112
  %v2114 = vpop.f32.mrf.mxu0
  %v2115 = vadd.f32 0.0, %v2114
  %2116 = vmatprep.mubr.bf16.mxu0 %v1391
  %2117 = vmatmul.mubr.bf16.gmra.mxu0 %v1390
  %v2118 = vpop.f32.mrf.mxu0
  %v2119 = vadd.f32 0.0, %v2118
  %v2120 = vpop.f32.mrf.mxu0
  %v2121 = vadd.f32 0.0, %v2120
  %v2122 = vpop.f32.mrf.mxu0
  %v2123 = vadd.f32 0.0, %v2122
  %v2124 = vpop.f32.mrf.mxu0
  %v2125 = vadd.f32 0.0, %v2124
  %2126 = vmatprep.mubr.bf16.mxu0 %v1402
  %2127 = vmatmul.mubr.bf16.gmra.mxu0 %v1401
  %v2128 = vpop.f32.mrf.mxu0
  %v2129 = vadd.f32 0.0, %v2128
  %v2130 = vpop.f32.mrf.mxu0
  %v2131 = vadd.f32 0.0, %v2130
  %v2132 = vpop.f32.mrf.mxu0
  %v2133 = vadd.f32 0.0, %v2132
  %v2134 = vpop.f32.mrf.mxu0
  %v2135 = vadd.f32 0.0, %v2134
  %2136 = vmatprep.mubr.bf16.mxu0 %v1413
  %2137 = vmatmul.mubr.bf16.gmra.mxu0 %v1412
  %v2138 = vpop.f32.mrf.mxu0
  %v2139 = vadd.f32 0.0, %v2138
  %v2140 = vpop.f32.mrf.mxu0
  %v2141 = vadd.f32 0.0, %v2140
  %v2142 = vpop.f32.mrf.mxu0
  %v2143 = vadd.f32 0.0, %v2142
  %v2144 = vpop.f32.mrf.mxu0
  %v2145 = vadd.f32 0.0, %v2144
  %2146 = vmatprep.mubr.bf16.mxu0 %v1424
  %2147 = vmatmul.mubr.bf16.gmra.mxu0 %v1423
  %v2148 = vpop.f32.mrf.mxu0
  %v2149 = vadd.f32 0.0, %v2148
  %v2150 = vpop.f32.mrf.mxu0
  %v2151 = vadd.f32 0.0, %v2150
  %v2152 = vpop.f32.mrf.mxu0
  %v2153 = vadd.f32 0.0, %v2152
  %v2154 = vpop.f32.mrf.mxu0
  %v2155 = vadd.f32 0.0, %v2154
  %2156 = vmatprep.mubr.bf16.mxu0 %v1435
  %2157 = vmatmul.mubr.bf16.gmra.mxu0 %v1434
  %v2158 = vpop.f32.mrf.mxu0
  %v2159 = vadd.f32 0.0, %v2158
  %v2160 = vpop.f32.mrf.mxu0
  %v2161 = vadd.f32 0.0, %v2160
  %v2162 = vpop.f32.mrf.mxu0
  %v2163 = vadd.f32 0.0, %v2162
  %v2164 = vpop.f32.mrf.mxu0
  %v2165 = vadd.f32 0.0, %v2164
  %2166 = vmatprep.mubr.bf16.mxu0 %v1446
  %2167 = vmatmul.mubr.bf16.gmra.mxu0 %v1445
  %v2168 = vpop.f32.mrf.mxu0
  %v2169 = vadd.f32 0.0, %v2168
  %v2170 = vpop.f32.mrf.mxu0
  %v2171 = vadd.f32 0.0, %v2170
  %v2172 = vpop.f32.mrf.mxu0
  %v2173 = vadd.f32 0.0, %v2172
  %v2174 = vpop.f32.mrf.mxu0
  %v2175 = vadd.f32 0.0, %v2174
  %2176 = vmatprep.mubr.bf16.mxu0 %v1457
  %2177 = vmatmul.mubr.bf16.gmra.mxu0 %v1456
  %v2178 = vpop.f32.mrf.mxu0
  %v2179 = vadd.f32 0.0, %v2178
  %v2180 = vpop.f32.mrf.mxu0
  %v2181 = vadd.f32 0.0, %v2180
  %v2182 = vpop.f32.mrf.mxu0
  %v2183 = vadd.f32 0.0, %v2182
  %v2184 = vpop.f32.mrf.mxu0
  %v2185 = vadd.f32 0.0, %v2184
  %2186 = vmatprep.mubr.bf16.mxu0 %v1468
  %2187 = vmatmul.mubr.bf16.gmra.mxu0 %v1467
  %v2188 = vpop.f32.mrf.mxu0
  %v2189 = vadd.f32 0.0, %v2188
  %v2190 = vpop.f32.mrf.mxu0
  %v2191 = vadd.f32 0.0, %v2190
  %v2192 = vpop.f32.mrf.mxu0
  %v2193 = vadd.f32 0.0, %v2192
  %v2194 = vpop.f32.mrf.mxu0
  %v2195 = vadd.f32 0.0, %v2194
  %2196 = vdwg.mxu0
  %2197 = vmatprep.subr.bf16.mxu0 %v1861
  %2198 = vmatpush1.bf16.msra.mxu0 %v1860
  %2199 = vmatprep.subr.bf16.mxu0 %v1859
  %2200 = vmatpush1.bf16.msra.mxu0 %v1858
  %2201 = vmatprep.subr.bf16.mxu0 %v1857
  %2202 = vmatpush1.bf16.msra.mxu0 %v1856
  %2203 = vmatprep.subr.bf16.mxu0 %v1855
  %2204 = vmatpush1.bf16.msra.mxu0 %v1854
  %2205 = vmatprep.subr.bf16.mxu0 %v1853
  %2206 = vmatpush1.bf16.msra.mxu0 %v1852
  %2207 = vmatprep.subr.bf16.mxu0 %v1851
  %2208 = vmatpush1.bf16.msra.mxu0 %v1850
  %2209 = vmatprep.subr.bf16.mxu0 %v1849
  %2210 = vmatpush1.bf16.msra.mxu0 %v1848
  %2211 = vmatprep.subr.bf16.mxu0 %v1847
  %2212 = vmatpush1.bf16.msra.mxu0 %v1846
  %2213 = vmatprep.subr.bf16.mxu0 %v1877
  %2214 = vmatpush2.bf16.msra.mxu0 %v1876
  %2215 = vmatprep.subr.bf16.mxu0 %v1875
  %2216 = vmatpush2.bf16.msra.mxu0 %v1874
  %2217 = vmatprep.subr.bf16.mxu0 %v1873
  %2218 = vmatpush2.bf16.msra.mxu0 %v1872
  %2219 = vmatprep.subr.bf16.mxu0 %v1871
  %2220 = vmatpush2.bf16.msra.mxu0 %v1870
  %2221 = vmatprep.subr.bf16.mxu0 %v1869
  %2222 = vmatpush2.bf16.msra.mxu0 %v1868
  %2223 = vmatprep.subr.bf16.mxu0 %v1867
  %2224 = vmatpush2.bf16.msra.mxu0 %v1866
  %2225 = vmatprep.subr.bf16.mxu0 %v1865
  %2226 = vmatpush2.bf16.msra.mxu0 %v1864
  %2227 = vmatprep.subr.bf16.mxu0 %v1863
  %2228 = vmatpush2.bf16.msra.mxu0 %v1862
  %2229 = vmatprep.mubr.bf16.mxu0 %v1327
  %2230 = vmatmul.mubr.bf16.gmra.mxu0 %v1326
  %v2231 = vpop.f32.mrf.mxu0
  %v2232 = vadd.f32 %v2059, %v2231
  %v2233 = vpop.f32.mrf.mxu0
  %v2234 = vadd.f32 %v2061, %v2233
  %v2235 = vpop.f32.mrf.mxu0
  %v2236 = vadd.f32 %v2063, %v2235
  %v2237 = vpop.f32.mrf.mxu0
  %v2238 = vadd.f32 %v2065, %v2237
  %2239 = vmatprep.mubr.bf16.mxu0 %v1338
  %2240 = vmatmul.mubr.bf16.gmra.mxu0 %v1337
  %v2241 = vpop.f32.mrf.mxu0
  %v2242 = vadd.f32 %v2069, %v2241
  %v2243 = vpop.f32.mrf.mxu0
  %v2244 = vadd.f32 %v2071, %v2243
  %v2245 = vpop.f32.mrf.mxu0
  %v2246 = vadd.f32 %v2073, %v2245
  %v2247 = vpop.f32.mrf.mxu0
  %v2248 = vadd.f32 %v2075, %v2247
  %2249 = vmatprep.mubr.bf16.mxu0 %v1349
  %2250 = vmatmul.mubr.bf16.gmra.mxu0 %v1348
  %v2251 = vpop.f32.mrf.mxu0
  %v2252 = vadd.f32 %v2079, %v2251
  %v2253 = vpop.f32.mrf.mxu0
  %v2254 = vadd.f32 %v2081, %v2253
  %v2255 = vpop.f32.mrf.mxu0
  %v2256 = vadd.f32 %v2083, %v2255
  %v2257 = vpop.f32.mrf.mxu0
  %v2258 = vadd.f32 %v2085, %v2257
  %2259 = vmatprep.mubr.bf16.mxu0 %v1360
  %2260 = vmatmul.mubr.bf16.gmra.mxu0 %v1359
  %v2261 = vpop.f32.mrf.mxu0
  %v2262 = vadd.f32 %v2089, %v2261
  %v2263 = vpop.f32.mrf.mxu0
  %v2264 = vadd.f32 %v2091, %v2263
  %v2265 = vpop.f32.mrf.mxu0
  %v2266 = vadd.f32 %v2093, %v2265
  %v2267 = vpop.f32.mrf.mxu0
  %v2268 = vadd.f32 %v2095, %v2267
  %2269 = vmatprep.mubr.bf16.mxu0 %v1371
  %2270 = vmatmul.mubr.bf16.gmra.mxu0 %v1370
  %v2271 = vpop.f32.mrf.mxu0
  %v2272 = vadd.f32 %v2099, %v2271
  %v2273 = vpop.f32.mrf.mxu0
  %v2274 = vadd.f32 %v2101, %v2273
  %v2275 = vpop.f32.mrf.mxu0
  %v2276 = vadd.f32 %v2103, %v2275
  %v2277 = vpop.f32.mrf.mxu0
  %v2278 = vadd.f32 %v2105, %v2277
  %2279 = vmatprep.mubr.bf16.mxu0 %v1382
  %2280 = vmatmul.mubr.bf16.gmra.mxu0 %v1381
  %v2281 = vpop.f32.mrf.mxu0
  %v2282 = vadd.f32 %v2109, %v2281
  %v2283 = vpop.f32.mrf.mxu0
  %v2284 = vadd.f32 %v2111, %v2283
  %v2285 = vpop.f32.mrf.mxu0
  %v2286 = vadd.f32 %v2113, %v2285
  %v2287 = vpop.f32.mrf.mxu0
  %v2288 = vadd.f32 %v2115, %v2287
  %2289 = vmatprep.mubr.bf16.mxu0 %v1393
  %2290 = vmatmul.mubr.bf16.gmra.mxu0 %v1392
  %v2291 = vpop.f32.mrf.mxu0
  %v2292 = vadd.f32 %v2119, %v2291
  %v2293 = vpop.f32.mrf.mxu0
  %v2294 = vadd.f32 %v2121, %v2293
  %v2295 = vpop.f32.mrf.mxu0
  %v2296 = vadd.f32 %v2123, %v2295
  %v2297 = vpop.f32.mrf.mxu0
  %v2298 = vadd.f32 %v2125, %v2297
  %2299 = vmatprep.mubr.bf16.mxu0 %v1404
  %2300 = vmatmul.mubr.bf16.gmra.mxu0 %v1403
  %v2301 = vpop.f32.mrf.mxu0
  %v2302 = vadd.f32 %v2129, %v2301
  %v2303 = vpop.f32.mrf.mxu0
  %v2304 = vadd.f32 %v2131, %v2303
  %v2305 = vpop.f32.mrf.mxu0
  %v2306 = vadd.f32 %v2133, %v2305
  %v2307 = vpop.f32.mrf.mxu0
  %v2308 = vadd.f32 %v2135, %v2307
  %2309 = vmatprep.mubr.bf16.mxu0 %v1415
  %2310 = vmatmul.mubr.bf16.gmra.mxu0 %v1414
  %v2311 = vpop.f32.mrf.mxu0
  %v2312 = vadd.f32 %v2139, %v2311
  %v2313 = vpop.f32.mrf.mxu0
  %v2314 = vadd.f32 %v2141, %v2313
  %v2315 = vpop.f32.mrf.mxu0
  %v2316 = vadd.f32 %v2143, %v2315
  %v2317 = vpop.f32.mrf.mxu0
  %v2318 = vadd.f32 %v2145, %v2317
  %2319 = vmatprep.mubr.bf16.mxu0 %v1426
  %2320 = vmatmul.mubr.bf16.gmra.mxu0 %v1425
  %v2321 = vpop.f32.mrf.mxu0
  %v2322 = vadd.f32 %v2149, %v2321
  %v2323 = vpop.f32.mrf.mxu0
  %v2324 = vadd.f32 %v2151, %v2323
  %v2325 = vpop.f32.mrf.mxu0
  %v2326 = vadd.f32 %v2153, %v2325
  %v2327 = vpop.f32.mrf.mxu0
  %v2328 = vadd.f32 %v2155, %v2327
  %2329 = vmatprep.mubr.bf16.mxu0 %v1437
  %2330 = vmatmul.mubr.bf16.gmra.mxu0 %v1436
  %v2331 = vpop.f32.mrf.mxu0
  %v2332 = vadd.f32 %v2159, %v2331
  %v2333 = vpop.f32.mrf.mxu0
  %v2334 = vadd.f32 %v2161, %v2333
  %v2335 = vpop.f32.mrf.mxu0
  %v2336 = vadd.f32 %v2163, %v2335
  %v2337 = vpop.f32.mrf.mxu0
  %v2338 = vadd.f32 %v2165, %v2337
  %2339 = vmatprep.mubr.bf16.mxu0 %v1448
  %2340 = vmatmul.mubr.bf16.gmra.mxu0 %v1447
  %v2341 = vpop.f32.mrf.mxu0
  %v2342 = vadd.f32 %v2169, %v2341
  %v2343 = vpop.f32.mrf.mxu0
  %v2344 = vadd.f32 %v2171, %v2343
  %v2345 = vpop.f32.mrf.mxu0
  %v2346 = vadd.f32 %v2173, %v2345
  %v2347 = vpop.f32.mrf.mxu0
  %v2348 = vadd.f32 %v2175, %v2347
  %2349 = vmatprep.mubr.bf16.mxu0 %v1459
  %2350 = vmatmul.mubr.bf16.gmra.mxu0 %v1458
  %v2351 = vpop.f32.mrf.mxu0
  %v2352 = vadd.f32 %v2179, %v2351
  %v2353 = vpop.f32.mrf.mxu0
  %v2354 = vadd.f32 %v2181, %v2353
  %v2355 = vpop.f32.mrf.mxu0
  %v2356 = vadd.f32 %v2183, %v2355
  %v2357 = vpop.f32.mrf.mxu0
  %v2358 = vadd.f32 %v2185, %v2357
  %2359 = vmatprep.mubr.bf16.mxu0 %v1470
  %2360 = vmatmul.mubr.bf16.gmra.mxu0 %v1469
  %v2361 = vpop.f32.mrf.mxu0
  %v2362 = vadd.f32 %v2189, %v2361
  %v2363 = vpop.f32.mrf.mxu0
  %v2364 = vadd.f32 %v2191, %v2363
  %v2365 = vpop.f32.mrf.mxu0
  %v2366 = vadd.f32 %v2193, %v2365
  %v2367 = vpop.f32.mrf.mxu0
  %v2368 = vadd.f32 %v2195, %v2367
  %2369 = vdwg.mxu0
  %2370 = vmatprep.subr.bf16.mxu0 %v1893
  %2371 = vmatpush1.bf16.msra.mxu0 %v1892
  %2372 = vmatprep.subr.bf16.mxu0 %v1891
  %2373 = vmatpush1.bf16.msra.mxu0 %v1890
  %2374 = vmatprep.subr.bf16.mxu0 %v1889
  %2375 = vmatpush1.bf16.msra.mxu0 %v1888
  %2376 = vmatprep.subr.bf16.mxu0 %v1887
  %2377 = vmatpush1.bf16.msra.mxu0 %v1886
  %2378 = vmatprep.subr.bf16.mxu0 %v1885
  %2379 = vmatpush1.bf16.msra.mxu0 %v1884
  %2380 = vmatprep.subr.bf16.mxu0 %v1883
  %2381 = vmatpush1.bf16.msra.mxu0 %v1882
  %2382 = vmatprep.subr.bf16.mxu0 %v1881
  %2383 = vmatpush1.bf16.msra.mxu0 %v1880
  %2384 = vmatprep.subr.bf16.mxu0 %v1879
  %2385 = vmatpush1.bf16.msra.mxu0 %v1878
  %2386 = vmatprep.subr.bf16.mxu0 %v1909
  %2387 = vmatpush2.bf16.msra.mxu0 %v1908
  %2388 = vmatprep.subr.bf16.mxu0 %v1907
  %2389 = vmatpush2.bf16.msra.mxu0 %v1906
  %2390 = vmatprep.subr.bf16.mxu0 %v1905
  %2391 = vmatpush2.bf16.msra.mxu0 %v1904
  %2392 = vmatprep.subr.bf16.mxu0 %v1903
  %2393 = vmatpush2.bf16.msra.mxu0 %v1902
  %2394 = vmatprep.subr.bf16.mxu0 %v1901
  %2395 = vmatpush2.bf16.msra.mxu0 %v1900
  %2396 = vmatprep.subr.bf16.mxu0 %v1899
  %2397 = vmatpush2.bf16.msra.mxu0 %v1898
  %2398 = vmatprep.subr.bf16.mxu0 %v1897
  %2399 = vmatpush2.bf16.msra.mxu0 %v1896
  %2400 = vmatprep.subr.bf16.mxu0 %v1895
  %2401 = vmatpush2.bf16.msra.mxu0 %v1894
  %2402 = vmatprep.mubr.bf16.mxu0 %v1329
  %2403 = vmatmul.mubr.bf16.gmra.mxu0 %v1328
  %v2404 = vpop.f32.mrf.mxu0
  %v2405 = vadd.f32 %v2232, %v2404
  %v2406 = vpop.f32.mrf.mxu0
  %v2407 = vadd.f32 %v2234, %v2406
  %v2408 = vpop.f32.mrf.mxu0
  %v2409 = vadd.f32 %v2236, %v2408
  %v2410 = vpop.f32.mrf.mxu0
  %v2411 = vadd.f32 %v2238, %v2410
  %2412 = vmatprep.mubr.bf16.mxu0 %v1340
  %2413 = vmatmul.mubr.bf16.gmra.mxu0 %v1339
  %v2414 = vpop.f32.mrf.mxu0
  %v2415 = vadd.f32 %v2242, %v2414
  %v2416 = vpop.f32.mrf.mxu0
  %v2417 = vadd.f32 %v2244, %v2416
  %v2418 = vpop.f32.mrf.mxu0
  %v2419 = vadd.f32 %v2246, %v2418
  %v2420 = vpop.f32.mrf.mxu0
  %v2421 = vadd.f32 %v2248, %v2420
  %2422 = vmatprep.mubr.bf16.mxu0 %v1351
  %2423 = vmatmul.mubr.bf16.gmra.mxu0 %v1350
  %v2424 = vpop.f32.mrf.mxu0
  %v2425 = vadd.f32 %v2252, %v2424
  %v2426 = vpop.f32.mrf.mxu0
  %v2427 = vadd.f32 %v2254, %v2426
  %v2428 = vpop.f32.mrf.mxu0
  %v2429 = vadd.f32 %v2256, %v2428
  %v2430 = vpop.f32.mrf.mxu0
  %v2431 = vadd.f32 %v2258, %v2430
  %2432 = vmatprep.mubr.bf16.mxu0 %v1362
  %2433 = vmatmul.mubr.bf16.gmra.mxu0 %v1361
  %v2434 = vpop.f32.mrf.mxu0
  %v2435 = vadd.f32 %v2262, %v2434
  %v2436 = vpop.f32.mrf.mxu0
  %v2437 = vadd.f32 %v2264, %v2436
  %v2438 = vpop.f32.mrf.mxu0
  %v2439 = vadd.f32 %v2266, %v2438
  %v2440 = vpop.f32.mrf.mxu0
  %v2441 = vadd.f32 %v2268, %v2440
  %2442 = vmatprep.mubr.bf16.mxu0 %v1373
  %2443 = vmatmul.mubr.bf16.gmra.mxu0 %v1372
  %v2444 = vpop.f32.mrf.mxu0
  %v2445 = vadd.f32 %v2272, %v2444
  %v2446 = vpop.f32.mrf.mxu0
  %v2447 = vadd.f32 %v2274, %v2446
  %v2448 = vpop.f32.mrf.mxu0
  %v2449 = vadd.f32 %v2276, %v2448
  %v2450 = vpop.f32.mrf.mxu0
  %v2451 = vadd.f32 %v2278, %v2450
  %2452 = vmatprep.mubr.bf16.mxu0 %v1384
  %2453 = vmatmul.mubr.bf16.gmra.mxu0 %v1383
  %v2454 = vpop.f32.mrf.mxu0
  %v2455 = vadd.f32 %v2282, %v2454
  %v2456 = vpop.f32.mrf.mxu0
  %v2457 = vadd.f32 %v2284, %v2456
  %v2458 = vpop.f32.mrf.mxu0
  %v2459 = vadd.f32 %v2286, %v2458
  %v2460 = vpop.f32.mrf.mxu0
  %v2461 = vadd.f32 %v2288, %v2460
  %2462 = vmatprep.mubr.bf16.mxu0 %v1395
  %2463 = vmatmul.mubr.bf16.gmra.mxu0 %v1394
  %v2464 = vpop.f32.mrf.mxu0
  %v2465 = vadd.f32 %v2292, %v2464
  %v2466 = vpop.f32.mrf.mxu0
  %v2467 = vadd.f32 %v2294, %v2466
  %v2468 = vpop.f32.mrf.mxu0
  %v2469 = vadd.f32 %v2296, %v2468
  %v2470 = vpop.f32.mrf.mxu0
  %v2471 = vadd.f32 %v2298, %v2470
  %2472 = vmatprep.mubr.bf16.mxu0 %v1406
  %2473 = vmatmul.mubr.bf16.gmra.mxu0 %v1405
  %v2474 = vpop.f32.mrf.mxu0
  %v2475 = vadd.f32 %v2302, %v2474
  %v2476 = vpop.f32.mrf.mxu0
  %v2477 = vadd.f32 %v2304, %v2476
  %v2478 = vpop.f32.mrf.mxu0
  %v2479 = vadd.f32 %v2306, %v2478
  %v2480 = vpop.f32.mrf.mxu0
  %v2481 = vadd.f32 %v2308, %v2480
  %2482 = vmatprep.mubr.bf16.mxu0 %v1417
  %2483 = vmatmul.mubr.bf16.gmra.mxu0 %v1416
  %v2484 = vpop.f32.mrf.mxu0
  %v2485 = vadd.f32 %v2312, %v2484
  %v2486 = vpop.f32.mrf.mxu0
  %v2487 = vadd.f32 %v2314, %v2486
  %v2488 = vpop.f32.mrf.mxu0
  %v2489 = vadd.f32 %v2316, %v2488
  %v2490 = vpop.f32.mrf.mxu0
  %v2491 = vadd.f32 %v2318, %v2490
  %2492 = vmatprep.mubr.bf16.mxu0 %v1428
  %2493 = vmatmul.mubr.bf16.gmra.mxu0 %v1427
  %v2494 = vpop.f32.mrf.mxu0
  %v2495 = vadd.f32 %v2322, %v2494
  %v2496 = vpop.f32.mrf.mxu0
  %v2497 = vadd.f32 %v2324, %v2496
  %v2498 = vpop.f32.mrf.mxu0
  %v2499 = vadd.f32 %v2326, %v2498
  %v2500 = vpop.f32.mrf.mxu0
  %v2501 = vadd.f32 %v2328, %v2500
  %2502 = vmatprep.mubr.bf16.mxu0 %v1439
  %2503 = vmatmul.mubr.bf16.gmra.mxu0 %v1438
  %v2504 = vpop.f32.mrf.mxu0
  %v2505 = vadd.f32 %v2332, %v2504
  %v2506 = vpop.f32.mrf.mxu0
  %v2507 = vadd.f32 %v2334, %v2506
  %v2508 = vpop.f32.mrf.mxu0
  %v2509 = vadd.f32 %v2336, %v2508
  %v2510 = vpop.f32.mrf.mxu0
  %v2511 = vadd.f32 %v2338, %v2510
  %2512 = vmatprep.mubr.bf16.mxu0 %v1450
  %2513 = vmatmul.mubr.bf16.gmra.mxu0 %v1449
  %v2514 = vpop.f32.mrf.mxu0
  %v2515 = vadd.f32 %v2342, %v2514
  %v2516 = vpop.f32.mrf.mxu0
  %v2517 = vadd.f32 %v2344, %v2516
  %v2518 = vpop.f32.mrf.mxu0
  %v2519 = vadd.f32 %v2346, %v2518
  %v2520 = vpop.f32.mrf.mxu0
  %v2521 = vadd.f32 %v2348, %v2520
  %2522 = vmatprep.mubr.bf16.mxu0 %v1461
  %2523 = vmatmul.mubr.bf16.gmra.mxu0 %v1460
  %v2524 = vpop.f32.mrf.mxu0
  %v2525 = vadd.f32 %v2352, %v2524
  %v2526 = vpop.f32.mrf.mxu0
  %v2527 = vadd.f32 %v2354, %v2526
  %v2528 = vpop.f32.mrf.mxu0
  %v2529 = vadd.f32 %v2356, %v2528
  %v2530 = vpop.f32.mrf.mxu0
  %v2531 = vadd.f32 %v2358, %v2530
  %2532 = vmatprep.mubr.bf16.mxu0 %v1472
  %2533 = vmatmul.mubr.bf16.gmra.mxu0 %v1471
  %v2534 = vpop.f32.mrf.mxu0
  %v2535 = vadd.f32 %v2362, %v2534
  %v2536 = vpop.f32.mrf.mxu0
  %v2537 = vadd.f32 %v2364, %v2536
  %v2538 = vpop.f32.mrf.mxu0
  %v2539 = vadd.f32 %v2366, %v2538
  %v2540 = vpop.f32.mrf.mxu0
  %v2541 = vadd.f32 %v2368, %v2540
  %2542 = vdwg.mxu0
  %2543 = vmatprep.subr.bf16.mxu0 %v1925
  %2544 = vmatpush1.bf16.msra.mxu0 %v1924
  %2545 = vmatprep.subr.bf16.mxu0 %v1923
  %2546 = vmatpush1.bf16.msra.mxu0 %v1922
  %2547 = vmatprep.subr.bf16.mxu0 %v1921
  %2548 = vmatpush1.bf16.msra.mxu0 %v1920
  %2549 = vmatprep.subr.bf16.mxu0 %v1919
  %2550 = vmatpush1.bf16.msra.mxu0 %v1918
  %2551 = vmatprep.subr.bf16.mxu0 %v1917
  %2552 = vmatpush1.bf16.msra.mxu0 %v1916
  %2553 = vmatprep.subr.bf16.mxu0 %v1915
  %2554 = vmatpush1.bf16.msra.mxu0 %v1914
  %2555 = vmatprep.subr.bf16.mxu0 %v1913
  %2556 = vmatpush1.bf16.msra.mxu0 %v1912
  %2557 = vmatprep.subr.bf16.mxu0 %v1911
  %2558 = vmatpush1.bf16.msra.mxu0 %v1910
  %2559 = vmatprep.subr.bf16.mxu0 %v1941
  %2560 = vmatpush2.bf16.msra.mxu0 %v1940
  %2561 = vmatprep.subr.bf16.mxu0 %v1939
  %2562 = vmatpush2.bf16.msra.mxu0 %v1938
  %2563 = vmatprep.subr.bf16.mxu0 %v1937
  %2564 = vmatpush2.bf16.msra.mxu0 %v1936
  %2565 = vmatprep.subr.bf16.mxu0 %v1935
  %2566 = vmatpush2.bf16.msra.mxu0 %v1934
  %2567 = vmatprep.subr.bf16.mxu0 %v1933
  %2568 = vmatpush2.bf16.msra.mxu0 %v1932
  %2569 = vmatprep.subr.bf16.mxu0 %v1931
  %2570 = vmatpush2.bf16.msra.mxu0 %v1930
  %2571 = vmatprep.subr.bf16.mxu0 %v1929
  %2572 = vmatpush2.bf16.msra.mxu0 %v1928
  %2573 = vmatprep.subr.bf16.mxu0 %v1927
  %2574 = vmatpush2.bf16.msra.mxu0 %v1926
  %2575 = vmatprep.mubr.bf16.mxu0 %v1331
  %2576 = vmatmul.mubr.bf16.gmra.mxu0 %v1330
  %v2577 = vpop.f32.mrf.mxu0
  %v2578 = vadd.f32 %v2405, %v2577
  %v2579 = vpop.f32.mrf.mxu0
  %v2580 = vadd.f32 %v2407, %v2579
  %v2581 = vpop.f32.mrf.mxu0
  %v2582 = vadd.f32 %v2409, %v2581
  %v2583 = vpop.f32.mrf.mxu0
  %v2584 = vadd.f32 %v2411, %v2583
  %2585 = vmatprep.mubr.bf16.mxu0 %v1342
  %2586 = vmatmul.mubr.bf16.gmra.mxu0 %v1341
  %v2587 = vpop.f32.mrf.mxu0
  %v2588 = vadd.f32 %v2415, %v2587
  %v2589 = vpop.f32.mrf.mxu0
  %v2590 = vadd.f32 %v2417, %v2589
  %v2591 = vpop.f32.mrf.mxu0
  %v2592 = vadd.f32 %v2419, %v2591
  %v2593 = vpop.f32.mrf.mxu0
  %v2594 = vadd.f32 %v2421, %v2593
  %2595 = vmatprep.mubr.bf16.mxu0 %v1353
  %2596 = vmatmul.mubr.bf16.gmra.mxu0 %v1352
  %v2597 = vpop.f32.mrf.mxu0
  %v2598 = vadd.f32 %v2425, %v2597
  %v2599 = vpop.f32.mrf.mxu0
  %v2600 = vadd.f32 %v2427, %v2599
  %v2601 = vpop.f32.mrf.mxu0
  %v2602 = vadd.f32 %v2429, %v2601
  %v2603 = vpop.f32.mrf.mxu0
  %v2604 = vadd.f32 %v2431, %v2603
  %2605 = vmatprep.mubr.bf16.mxu0 %v1364
  %2606 = vmatmul.mubr.bf16.gmra.mxu0 %v1363
  %v2607 = vpop.f32.mrf.mxu0
  %v2608 = vadd.f32 %v2435, %v2607
  %v2609 = vpop.f32.mrf.mxu0
  %v2610 = vadd.f32 %v2437, %v2609
  %v2611 = vpop.f32.mrf.mxu0
  %v2612 = vadd.f32 %v2439, %v2611
  %v2613 = vpop.f32.mrf.mxu0
  %v2614 = vadd.f32 %v2441, %v2613
  %2615 = vmatprep.mubr.bf16.mxu0 %v1375
  %2616 = vmatmul.mubr.bf16.gmra.mxu0 %v1374
  %v2617 = vpop.f32.mrf.mxu0
  %v2618 = vadd.f32 %v2445, %v2617
  %v2619 = vpop.f32.mrf.mxu0
  %v2620 = vadd.f32 %v2447, %v2619
  %v2621 = vpop.f32.mrf.mxu0
  %v2622 = vadd.f32 %v2449, %v2621
  %v2623 = vpop.f32.mrf.mxu0
  %v2624 = vadd.f32 %v2451, %v2623
  %2625 = vmatprep.mubr.bf16.mxu0 %v1386
  %2626 = vmatmul.mubr.bf16.gmra.mxu0 %v1385
  %v2627 = vpop.f32.mrf.mxu0
  %v2628 = vadd.f32 %v2455, %v2627
  %v2629 = vpop.f32.mrf.mxu0
  %v2630 = vadd.f32 %v2457, %v2629
  %v2631 = vpop.f32.mrf.mxu0
  %v2632 = vadd.f32 %v2459, %v2631
  %v2633 = vpop.f32.mrf.mxu0
  %v2634 = vadd.f32 %v2461, %v2633
  %2635 = vmatprep.mubr.bf16.mxu0 %v1397
  %2636 = vmatmul.mubr.bf16.gmra.mxu0 %v1396
  %v2637 = vpop.f32.mrf.mxu0
  %v2638 = vadd.f32 %v2465, %v2637
  %v2639 = vpop.f32.mrf.mxu0
  %v2640 = vadd.f32 %v2467, %v2639
  %v2641 = vpop.f32.mrf.mxu0
  %v2642 = vadd.f32 %v2469, %v2641
  %v2643 = vpop.f32.mrf.mxu0
  %v2644 = vadd.f32 %v2471, %v2643
  %2645 = vmatprep.mubr.bf16.mxu0 %v1408
  %2646 = vmatmul.mubr.bf16.gmra.mxu0 %v1407
  %v2647 = vpop.f32.mrf.mxu0
  %v2648 = vadd.f32 %v2475, %v2647
  %v2649 = vpop.f32.mrf.mxu0
  %v2650 = vadd.f32 %v2477, %v2649
  %v2651 = vpop.f32.mrf.mxu0
  %v2652 = vadd.f32 %v2479, %v2651
  %v2653 = vpop.f32.mrf.mxu0
  %v2654 = vadd.f32 %v2481, %v2653
  %2655 = vmatprep.mubr.bf16.mxu0 %v1419
  %2656 = vmatmul.mubr.bf16.gmra.mxu0 %v1418
  %v2657 = vpop.f32.mrf.mxu0
  %v2658 = vadd.f32 %v2485, %v2657
  %v2659 = vpop.f32.mrf.mxu0
  %v2660 = vadd.f32 %v2487, %v2659
  %v2661 = vpop.f32.mrf.mxu0
  %v2662 = vadd.f32 %v2489, %v2661
  %v2663 = vpop.f32.mrf.mxu0
  %v2664 = vadd.f32 %v2491, %v2663
  %2665 = vmatprep.mubr.bf16.mxu0 %v1430
  %2666 = vmatmul.mubr.bf16.gmra.mxu0 %v1429
  %v2667 = vpop.f32.mrf.mxu0
  %v2668 = vadd.f32 %v2495, %v2667
  %v2669 = vpop.f32.mrf.mxu0
  %v2670 = vadd.f32 %v2497, %v2669
  %v2671 = vpop.f32.mrf.mxu0
  %v2672 = vadd.f32 %v2499, %v2671
  %v2673 = vpop.f32.mrf.mxu0
  %v2674 = vadd.f32 %v2501, %v2673
  %2675 = vmatprep.mubr.bf16.mxu0 %v1441
  %2676 = vmatmul.mubr.bf16.gmra.mxu0 %v1440
  %v2677 = vpop.f32.mrf.mxu0
  %v2678 = vadd.f32 %v2505, %v2677
  %v2679 = vpop.f32.mrf.mxu0
  %v2680 = vadd.f32 %v2507, %v2679
  %v2681 = vpop.f32.mrf.mxu0
  %v2682 = vadd.f32 %v2509, %v2681
  %v2683 = vpop.f32.mrf.mxu0
  %v2684 = vadd.f32 %v2511, %v2683
  %2685 = vmatprep.mubr.bf16.mxu0 %v1452
  %2686 = vmatmul.mubr.bf16.gmra.mxu0 %v1451
  %v2687 = vpop.f32.mrf.mxu0
  %v2688 = vadd.f32 %v2515, %v2687
  %v2689 = vpop.f32.mrf.mxu0
  %v2690 = vadd.f32 %v2517, %v2689
  %v2691 = vpop.f32.mrf.mxu0
  %v2692 = vadd.f32 %v2519, %v2691
  %v2693 = vpop.f32.mrf.mxu0
  %v2694 = vadd.f32 %v2521, %v2693
  %2695 = vmatprep.mubr.bf16.mxu0 %v1463
  %2696 = vmatmul.mubr.bf16.gmra.mxu0 %v1462
  %v2697 = vpop.f32.mrf.mxu0
  %v2698 = vadd.f32 %v2525, %v2697
  %v2699 = vpop.f32.mrf.mxu0
  %v2700 = vadd.f32 %v2527, %v2699
  %v2701 = vpop.f32.mrf.mxu0
  %v2702 = vadd.f32 %v2529, %v2701
  %v2703 = vpop.f32.mrf.mxu0
  %v2704 = vadd.f32 %v2531, %v2703
  %2705 = vmatprep.mubr.bf16.mxu0 %v1474
  %2706 = vmatmul.mubr.bf16.gmra.mxu0 %v1473
  %v2707 = vpop.f32.mrf.mxu0
  %v2708 = vadd.f32 %v2535, %v2707
  %v2709 = vpop.f32.mrf.mxu0
  %v2710 = vadd.f32 %v2537, %v2709
  %v2711 = vpop.f32.mrf.mxu0
  %v2712 = vadd.f32 %v2539, %v2711
  %v2713 = vpop.f32.mrf.mxu0
  %v2714 = vadd.f32 %v2541, %v2713
  %2715 = vdwg.mxu0
  %2716 = vmatprep.subr.bf16.mxu0 %v1957
  %2717 = vmatpush1.bf16.msra.mxu0 %v1956
  %2718 = vmatprep.subr.bf16.mxu0 %v1955
  %2719 = vmatpush1.bf16.msra.mxu0 %v1954
  %2720 = vmatprep.subr.bf16.mxu0 %v1953
  %2721 = vmatpush1.bf16.msra.mxu0 %v1952
  %2722 = vmatprep.subr.bf16.mxu0 %v1951
  %2723 = vmatpush1.bf16.msra.mxu0 %v1950
  %2724 = vmatprep.subr.bf16.mxu0 %v1949
  %2725 = vmatpush1.bf16.msra.mxu0 %v1948
  %2726 = vmatprep.subr.bf16.mxu0 %v1947
  %2727 = vmatpush1.bf16.msra.mxu0 %v1946
  %2728 = vmatprep.subr.bf16.mxu0 %v1945
  %2729 = vmatpush1.bf16.msra.mxu0 %v1944
  %2730 = vmatprep.subr.bf16.mxu0 %v1943
  %2731 = vmatpush1.bf16.msra.mxu0 %v1942
  %2732 = vmatprep.subr.bf16.mxu0 %v1973
  %2733 = vmatpush2.bf16.msra.mxu0 %v1972
  %2734 = vmatprep.subr.bf16.mxu0 %v1971
  %2735 = vmatpush2.bf16.msra.mxu0 %v1970
  %2736 = vmatprep.subr.bf16.mxu0 %v1969
  %2737 = vmatpush2.bf16.msra.mxu0 %v1968
  %2738 = vmatprep.subr.bf16.mxu0 %v1967
  %2739 = vmatpush2.bf16.msra.mxu0 %v1966
  %2740 = vmatprep.subr.bf16.mxu0 %v1965
  %2741 = vmatpush2.bf16.msra.mxu0 %v1964
  %2742 = vmatprep.subr.bf16.mxu0 %v1963
  %2743 = vmatpush2.bf16.msra.mxu0 %v1962
  %2744 = vmatprep.subr.bf16.mxu0 %v1961
  %2745 = vmatpush2.bf16.msra.mxu0 %v1960
  %2746 = vmatprep.subr.bf16.mxu0 %v1959
  %2747 = vmatpush2.bf16.msra.mxu0 %v1958
  %2748 = vmatprep.mubr.bf16.mxu0 %v1333
  %2749 = vmatmul.mubr.bf16.gmra.mxu0 %v1332
  %v2750 = vpop.f32.mrf.mxu0
  %v2751 = vadd.f32 %v2578, %v2750
  %v2752 = vpop.f32.mrf.mxu0
  %v2753 = vadd.f32 %v2580, %v2752
  %v2754 = vpop.f32.mrf.mxu0
  %v2755 = vadd.f32 %v2582, %v2754
  %v2756 = vpop.f32.mrf.mxu0
  %v2757 = vadd.f32 %v2584, %v2756
  %2758 = vmatprep.mubr.bf16.mxu0 %v1344
  %2759 = vmatmul.mubr.bf16.gmra.mxu0 %v1343
  %v2760 = vpop.f32.mrf.mxu0
  %v2761 = vadd.f32 %v2588, %v2760
  %v2762 = vpop.f32.mrf.mxu0
  %v2763 = vadd.f32 %v2590, %v2762
  %v2764 = vpop.f32.mrf.mxu0
  %v2765 = vadd.f32 %v2592, %v2764
  %v2766 = vpop.f32.mrf.mxu0
  %v2767 = vadd.f32 %v2594, %v2766
  %2768 = vmatprep.mubr.bf16.mxu0 %v1355
  %2769 = vmatmul.mubr.bf16.gmra.mxu0 %v1354
  %v2770 = vpop.f32.mrf.mxu0
  %v2771 = vadd.f32 %v2598, %v2770
  %v2772 = vpop.f32.mrf.mxu0
  %v2773 = vadd.f32 %v2600, %v2772
  %v2774 = vpop.f32.mrf.mxu0
  %v2775 = vadd.f32 %v2602, %v2774
  %v2776 = vpop.f32.mrf.mxu0
  %v2777 = vadd.f32 %v2604, %v2776
  %2778 = vmatprep.mubr.bf16.mxu0 %v1366
  %2779 = vmatmul.mubr.bf16.gmra.mxu0 %v1365
  %v2780 = vpop.f32.mrf.mxu0
  %v2781 = vadd.f32 %v2608, %v2780
  %v2782 = vpop.f32.mrf.mxu0
  %v2783 = vadd.f32 %v2610, %v2782
  %v2784 = vpop.f32.mrf.mxu0
  %v2785 = vadd.f32 %v2612, %v2784
  %v2786 = vpop.f32.mrf.mxu0
  %v2787 = vadd.f32 %v2614, %v2786
  %2788 = vmatprep.mubr.bf16.mxu0 %v1377
  %2789 = vmatmul.mubr.bf16.gmra.mxu0 %v1376
  %v2790 = vpop.f32.mrf.mxu0
  %v2791 = vadd.f32 %v2618, %v2790
  %v2792 = vpop.f32.mrf.mxu0
  %v2793 = vadd.f32 %v2620, %v2792
  %v2794 = vpop.f32.mrf.mxu0
  %v2795 = vadd.f32 %v2622, %v2794
  %v2796 = vpop.f32.mrf.mxu0
  %v2797 = vadd.f32 %v2624, %v2796
  %2798 = vmatprep.mubr.bf16.mxu0 %v1388
  %2799 = vmatmul.mubr.bf16.gmra.mxu0 %v1387
  %v2800 = vpop.f32.mrf.mxu0
  %v2801 = vadd.f32 %v2628, %v2800
  %v2802 = vpop.f32.mrf.mxu0
  %v2803 = vadd.f32 %v2630, %v2802
  %v2804 = vpop.f32.mrf.mxu0
  %v2805 = vadd.f32 %v2632, %v2804
  %v2806 = vpop.f32.mrf.mxu0
  %v2807 = vadd.f32 %v2634, %v2806
  %2808 = vmatprep.mubr.bf16.mxu0 %v1399
  %2809 = vmatmul.mubr.bf16.gmra.mxu0 %v1398
  %v2810 = vpop.f32.mrf.mxu0
  %v2811 = vadd.f32 %v2638, %v2810
  %v2812 = vpop.f32.mrf.mxu0
  %v2813 = vadd.f32 %v2640, %v2812
  %v2814 = vpop.f32.mrf.mxu0
  %v2815 = vadd.f32 %v2642, %v2814
  %v2816 = vpop.f32.mrf.mxu0
  %v2817 = vadd.f32 %v2644, %v2816
  %2818 = vmatprep.mubr.bf16.mxu0 %v1410
  %2819 = vmatmul.mubr.bf16.gmra.mxu0 %v1409
  %v2820 = vpop.f32.mrf.mxu0
  %v2821 = vadd.f32 %v2648, %v2820
  %v2822 = vpop.f32.mrf.mxu0
  %v2823 = vadd.f32 %v2650, %v2822
  %v2824 = vpop.f32.mrf.mxu0
  %v2825 = vadd.f32 %v2652, %v2824
  %v2826 = vpop.f32.mrf.mxu0
  %v2827 = vadd.f32 %v2654, %v2826
  %2828 = vmatprep.mubr.bf16.mxu0 %v1421
  %2829 = vmatmul.mubr.bf16.gmra.mxu0 %v1420
  %v2830 = vpop.f32.mrf.mxu0
  %v2831 = vadd.f32 %v2658, %v2830
  %v2832 = vpop.f32.mrf.mxu0
  %v2833 = vadd.f32 %v2660, %v2832
  %v2834 = vpop.f32.mrf.mxu0
  %v2835 = vadd.f32 %v2662, %v2834
  %v2836 = vpop.f32.mrf.mxu0
  %v2837 = vadd.f32 %v2664, %v2836
  %2838 = vmatprep.mubr.bf16.mxu0 %v1432
  %2839 = vmatmul.mubr.bf16.gmra.mxu0 %v1431
  %v2840 = vpop.f32.mrf.mxu0
  %v2841 = vadd.f32 %v2668, %v2840
  %v2842 = vpop.f32.mrf.mxu0
  %v2843 = vadd.f32 %v2670, %v2842
  %v2844 = vpop.f32.mrf.mxu0
  %v2845 = vadd.f32 %v2672, %v2844
  %v2846 = vpop.f32.mrf.mxu0
  %v2847 = vadd.f32 %v2674, %v2846
  %2848 = vmatprep.mubr.bf16.mxu0 %v1443
  %2849 = vmatmul.mubr.bf16.gmra.mxu0 %v1442
  %v2850 = vpop.f32.mrf.mxu0
  %v2851 = vadd.f32 %v2678, %v2850
  %v2852 = vpop.f32.mrf.mxu0
  %v2853 = vadd.f32 %v2680, %v2852
  %v2854 = vpop.f32.mrf.mxu0
  %v2855 = vadd.f32 %v2682, %v2854
  %v2856 = vpop.f32.mrf.mxu0
  %v2857 = vadd.f32 %v2684, %v2856
  %2858 = vmatprep.mubr.bf16.mxu0 %v1454
  %2859 = vmatmul.mubr.bf16.gmra.mxu0 %v1453
  %v2860 = vpop.f32.mrf.mxu0
  %v2861 = vadd.f32 %v2688, %v2860
  %v2862 = vpop.f32.mrf.mxu0
  %v2863 = vadd.f32 %v2690, %v2862
  %v2864 = vpop.f32.mrf.mxu0
  %v2865 = vadd.f32 %v2692, %v2864
  %v2866 = vpop.f32.mrf.mxu0
  %v2867 = vadd.f32 %v2694, %v2866
  %2868 = vmatprep.mubr.bf16.mxu0 %v1465
  %2869 = vmatmul.mubr.bf16.gmra.mxu0 %v1464
  %v2870 = vpop.f32.mrf.mxu0
  %v2871 = vadd.f32 %v2698, %v2870
  %v2872 = vpop.f32.mrf.mxu0
  %v2873 = vadd.f32 %v2700, %v2872
  %v2874 = vpop.f32.mrf.mxu0
  %v2875 = vadd.f32 %v2702, %v2874
  %v2876 = vpop.f32.mrf.mxu0
  %v2877 = vadd.f32 %v2704, %v2876
  %2878 = vmatprep.mubr.bf16.mxu0 %v1476
  %2879 = vmatmul.mubr.bf16.gmra.mxu0 %v1475
  %v2880 = vpop.f32.mrf.mxu0
  %v2881 = vadd.f32 %v2708, %v2880
  %v2882 = vpop.f32.mrf.mxu0
  %v2883 = vadd.f32 %v2710, %v2882
  %v2884 = vpop.f32.mrf.mxu0
  %v2885 = vadd.f32 %v2712, %v2884
  %v2886 = vpop.f32.mrf.mxu0
  %v2887 = vadd.f32 %v2714, %v2886
  %2888 = vdwg.mxu0
  %2889 = vmatprep.subr.bf16.mxu0 0
  %2890 = vmatpush1.bf16.msra.mxu0 0
  %2891 = vmatprep.subr.bf16.mxu0 0
  %2892 = vmatpush1.bf16.msra.mxu0 0
  %2893 = vmatprep.subr.bf16.mxu0 0
  %2894 = vmatpush1.bf16.msra.mxu0 0
  %2895 = vmatprep.subr.bf16.mxu0 0
  %2896 = vmatpush1.bf16.msra.mxu0 0
  %2897 = vmatprep.subr.bf16.mxu0 %v1981
  %2898 = vmatpush1.bf16.msra.mxu0 %v1980
  %2899 = vmatprep.subr.bf16.mxu0 %v1979
  %2900 = vmatpush1.bf16.msra.mxu0 %v1978
  %2901 = vmatprep.subr.bf16.mxu0 %v1977
  %2902 = vmatpush1.bf16.msra.mxu0 %v1976
  %2903 = vmatprep.subr.bf16.mxu0 %v1975
  %2904 = vmatpush1.bf16.msra.mxu0 %v1974
  %2905 = vmatprep.subr.bf16.mxu0 0
  %2906 = vmatpush2.bf16.msra.mxu0 0
  %2907 = vmatprep.subr.bf16.mxu0 0
  %2908 = vmatpush2.bf16.msra.mxu0 0
  %2909 = vmatprep.subr.bf16.mxu0 0
  %2910 = vmatpush2.bf16.msra.mxu0 0
  %2911 = vmatprep.subr.bf16.mxu0 0
  %2912 = vmatpush2.bf16.msra.mxu0 0
  %2913 = vmatprep.subr.bf16.mxu0 0
  %2914 = vmatpush2.bf16.msra.mxu0 0
  %2915 = vmatprep.subr.bf16.mxu0 0
  %2916 = vmatpush2.bf16.msra.mxu0 0
  %2917 = vmatprep.subr.bf16.mxu0 0
  %2918 = vmatpush2.bf16.msra.mxu0 0
  %2919 = vmatprep.subr.bf16.mxu0 0
  %2920 = vmatpush2.bf16.msra.mxu0 0
  %2921 = vmatprep.mubr.bf16.mxu0 0
  %2922 = vmatmul.mubr.bf16.gmra.mxu0 %v1983
  %v2923 = vpop.f32.mrf.mxu0
  %v2924 = vadd.f32 %v2751, %v2923
  %v2925 = vpop.f32.mrf.mxu0
  %v2926 = vadd.f32 %v2753, %v2925
  %v2927 = vpop.f32.mrf.mxu0
  %v2928 = vadd.f32 %v2755, %v2927
  %v2929 = vpop.f32.mrf.mxu0
  %v2930 = vadd.f32 %v2757, %v2929
  %2931 = vmatprep.mubr.bf16.mxu0 0
  %2932 = vmatmul.mubr.bf16.gmra.mxu0 %v1986
  %v2933 = vpop.f32.mrf.mxu0
  %v2934 = vadd.f32 %v2761, %v2933
  %v2935 = vpop.f32.mrf.mxu0
  %v2936 = vadd.f32 %v2763, %v2935
  %v2937 = vpop.f32.mrf.mxu0
  %v2938 = vadd.f32 %v2765, %v2937
  %v2939 = vpop.f32.mrf.mxu0
  %v2940 = vadd.f32 %v2767, %v2939
  %2941 = vmatprep.mubr.bf16.mxu0 0
  %2942 = vmatmul.mubr.bf16.gmra.mxu0 %v1989
  %v2943 = vpop.f32.mrf.mxu0
  %v2944 = vadd.f32 %v2771, %v2943
  %v2945 = vpop.f32.mrf.mxu0
  %v2946 = vadd.f32 %v2773, %v2945
  %v2947 = vpop.f32.mrf.mxu0
  %v2948 = vadd.f32 %v2775, %v2947
  %v2949 = vpop.f32.mrf.mxu0
  %v2950 = vadd.f32 %v2777, %v2949
  %2951 = vmatprep.mubr.bf16.mxu0 0
  %2952 = vmatmul.mubr.bf16.gmra.mxu0 %v1992
  %v2953 = vpop.f32.mrf.mxu0
  %v2954 = vadd.f32 %v2781, %v2953
  %v2955 = vpop.f32.mrf.mxu0
  %v2956 = vadd.f32 %v2783, %v2955
  %v2957 = vpop.f32.mrf.mxu0
  %v2958 = vadd.f32 %v2785, %v2957
  %v2959 = vpop.f32.mrf.mxu0
  %v2960 = vadd.f32 %v2787, %v2959
  %2961 = vmatprep.mubr.bf16.mxu0 0
  %2962 = vmatmul.mubr.bf16.gmra.mxu0 %v1995
  %v2963 = vpop.f32.mrf.mxu0
  %v2964 = vadd.f32 %v2791, %v2963
  %v2965 = vpop.f32.mrf.mxu0
  %v2966 = vadd.f32 %v2793, %v2965
  %v2967 = vpop.f32.mrf.mxu0
  %v2968 = vadd.f32 %v2795, %v2967
  %v2969 = vpop.f32.mrf.mxu0
  %v2970 = vadd.f32 %v2797, %v2969
  %2971 = vmatprep.mubr.bf16.mxu0 0
  %2972 = vmatmul.mubr.bf16.gmra.mxu0 %v1998
  %v2973 = vpop.f32.mrf.mxu0
  %v2974 = vadd.f32 %v2801, %v2973
  %v2975 = vpop.f32.mrf.mxu0
  %v2976 = vadd.f32 %v2803, %v2975
  %v2977 = vpop.f32.mrf.mxu0
  %v2978 = vadd.f32 %v2805, %v2977
  %v2979 = vpop.f32.mrf.mxu0
  %v2980 = vadd.f32 %v2807, %v2979
  %2981 = vmatprep.mubr.bf16.mxu0 0
  %2982 = vmatmul.mubr.bf16.gmra.mxu0 %v2001
  %v2983 = vpop.f32.mrf.mxu0
  %v2984 = vadd.f32 %v2811, %v2983
  %v2985 = vpop.f32.mrf.mxu0
  %v2986 = vadd.f32 %v2813, %v2985
  %v2987 = vpop.f32.mrf.mxu0
  %v2988 = vadd.f32 %v2815, %v2987
  %v2989 = vpop.f32.mrf.mxu0
  %v2990 = vadd.f32 %v2817, %v2989
  %2991 = vmatprep.mubr.bf16.mxu0 0
  %2992 = vmatmul.mubr.bf16.gmra.mxu0 %v2004
  %v2993 = vpop.f32.mrf.mxu0
  %v2994 = vadd.f32 %v2821, %v2993
  %v2995 = vpop.f32.mrf.mxu0
  %v2996 = vadd.f32 %v2823, %v2995
  %v2997 = vpop.f32.mrf.mxu0
  %v2998 = vadd.f32 %v2825, %v2997
  %v2999 = vpop.f32.mrf.mxu0
  %v3000 = vadd.f32 %v2827, %v2999
  %3001 = vmatprep.mubr.bf16.mxu0 0
  %3002 = vmatmul.mubr.bf16.gmra.mxu0 %v2007
  %v3003 = vpop.f32.mrf.mxu0
  %v3004 = vadd.f32 %v2831, %v3003
  %v3005 = vpop.f32.mrf.mxu0
  %v3006 = vadd.f32 %v2833, %v3005
  %v3007 = vpop.f32.mrf.mxu0
  %v3008 = vadd.f32 %v2835, %v3007
  %v3009 = vpop.f32.mrf.mxu0
  %v3010 = vadd.f32 %v2837, %v3009
  %3011 = vmatprep.mubr.bf16.mxu0 0
  %3012 = vmatmul.mubr.bf16.gmra.mxu0 %v2010
  %v3013 = vpop.f32.mrf.mxu0
  %v3014 = vadd.f32 %v2841, %v3013
  %v3015 = vpop.f32.mrf.mxu0
  %v3016 = vadd.f32 %v2843, %v3015
  %v3017 = vpop.f32.mrf.mxu0
  %v3018 = vadd.f32 %v2845, %v3017
  %v3019 = vpop.f32.mrf.mxu0
  %v3020 = vadd.f32 %v2847, %v3019
  %3021 = vmatprep.mubr.bf16.mxu0 0
  %3022 = vmatmul.mubr.bf16.gmra.mxu0 %v2013
  %v3023 = vpop.f32.mrf.mxu0
  %v3024 = vadd.f32 %v2851, %v3023
  %v3025 = vpop.f32.mrf.mxu0
  %v3026 = vadd.f32 %v2853, %v3025
  %v3027 = vpop.f32.mrf.mxu0
  %v3028 = vadd.f32 %v2855, %v3027
  %v3029 = vpop.f32.mrf.mxu0
  %v3030 = vadd.f32 %v2857, %v3029
  %3031 = vmatprep.mubr.bf16.mxu0 0
  %3032 = vmatmul.mubr.bf16.gmra.mxu0 %v2016
  %v3033 = vpop.f32.mrf.mxu0
  %v3034 = vadd.f32 %v2861, %v3033
  %v3035 = vpop.f32.mrf.mxu0
  %v3036 = vadd.f32 %v2863, %v3035
  %v3037 = vpop.f32.mrf.mxu0
  %v3038 = vadd.f32 %v2865, %v3037
  %v3039 = vpop.f32.mrf.mxu0
  %v3040 = vadd.f32 %v2867, %v3039
  %3041 = vmatprep.mubr.bf16.mxu0 0
  %3042 = vmatmul.mubr.bf16.gmra.mxu0 %v2019
  %v3043 = vpop.f32.mrf.mxu0
  %v3044 = vadd.f32 %v2871, %v3043
  %v3045 = vpop.f32.mrf.mxu0
  %v3046 = vadd.f32 %v2873, %v3045
  %v3047 = vpop.f32.mrf.mxu0
  %v3048 = vadd.f32 %v2875, %v3047
  %v3049 = vpop.f32.mrf.mxu0
  %v3050 = vadd.f32 %v2877, %v3049
  %3051 = vmatprep.mubr.bf16.mxu0 0
  %3052 = vmatmul.mubr.bf16.gmra.mxu0 %v2022
  %v3053 = vpop.f32.mrf.mxu0
  %v3054 = vadd.f32 %v2881, %v3053
  %v3055 = vpop.f32.mrf.mxu0
  %v3056 = vadd.f32 %v2883, %v3055
  %v3057 = vpop.f32.mrf.mxu0
  %v3058 = vadd.f32 %v2885, %v3057
  %v3059 = vpop.f32.mrf.mxu0
  %v3060 = vadd.f32 %v2887, %v3059
  %3061 = vdwg.mxu0
  %vm3062 = vcmask 556032
  %v3063 = vsel %vm3062, %v2926, 0.0
  %v3064 = vadd.f32 %v2924, %v3063
  %3065 = vadd.xlane.f32.xlu0 %v3064
  %v3066 = vpop.xlane.xlu0 %3065
  %v3067 = vsel %vm3062, %v2930, 0.0
  %v3068 = vadd.f32 %v2928, %v3067
  %3069 = vadd.xlane.f32.xlu0 %v3068
  %v3070 = vpop.xlane.xlu0 %3069
  %v3071 = vsel %vm3062, %v2936, 0.0
  %v3072 = vadd.f32 %v2934, %v3071
  %3073 = vadd.xlane.f32.xlu0 %v3072
  %v3074 = vpop.xlane.xlu0 %3073
  %v3075 = vsel %vm3062, %v2940, 0.0
  %v3076 = vadd.f32 %v2938, %v3075
  %3077 = vadd.xlane.f32.xlu0 %v3076
  %v3078 = vpop.xlane.xlu0 %3077
  %v3079 = vsel %vm3062, %v2946, 0.0
  %v3080 = vadd.f32 %v2944, %v3079
  %3081 = vadd.xlane.f32.xlu0 %v3080
  %v3082 = vpop.xlane.xlu0 %3081
  %v3083 = vsel %vm3062, %v2950, 0.0
  %v3084 = vadd.f32 %v2948, %v3083
  %3085 = vadd.xlane.f32.xlu0 %v3084
  %v3086 = vpop.xlane.xlu0 %3085
  %v3087 = vsel %vm3062, %v2956, 0.0
  %v3088 = vadd.f32 %v2954, %v3087
  %3089 = vadd.xlane.f32.xlu0 %v3088
  %v3090 = vpop.xlane.xlu0 %3089
  %v3091 = vsel %vm3062, %v2960, 0.0
  %v3092 = vadd.f32 %v2958, %v3091
  %3093 = vadd.xlane.f32.xlu0 %v3092
  %v3094 = vpop.xlane.xlu0 %3093
  %v3095 = vsel %vm3062, %v2966, 0.0
  %v3096 = vadd.f32 %v2964, %v3095
  %3097 = vadd.xlane.f32.xlu0 %v3096
  %v3098 = vpop.xlane.xlu0 %3097
  %v3099 = vsel %vm3062, %v2970, 0.0
  %v3100 = vadd.f32 %v2968, %v3099
  %3101 = vadd.xlane.f32.xlu0 %v3100
  %v3102 = vpop.xlane.xlu0 %3101
  %v3103 = vsel %vm3062, %v2976, 0.0
  %v3104 = vadd.f32 %v2974, %v3103
  %3105 = vadd.xlane.f32.xlu0 %v3104
  %v3106 = vpop.xlane.xlu0 %3105
  %v3107 = vsel %vm3062, %v2980, 0.0
  %v3108 = vadd.f32 %v2978, %v3107
  %3109 = vadd.xlane.f32.xlu0 %v3108
  %v3110 = vpop.xlane.xlu0 %3109
  %v3111 = vsel %vm3062, %v2986, 0.0
  %v3112 = vadd.f32 %v2984, %v3111
  %3113 = vadd.xlane.f32.xlu0 %v3112
  %v3114 = vpop.xlane.xlu0 %3113
  %v3115 = vsel %vm3062, %v2990, 0.0
  %v3116 = vadd.f32 %v2988, %v3115
  %3117 = vadd.xlane.f32.xlu0 %v3116
  %v3118 = vpop.xlane.xlu0 %3117
  %v3119 = vsel %vm3062, %v2996, 0.0
  %v3120 = vadd.f32 %v2994, %v3119
  %3121 = vadd.xlane.f32.xlu0 %v3120
  %v3122 = vpop.xlane.xlu0 %3121
  %v3123 = vsel %vm3062, %v3000, 0.0
  %v3124 = vadd.f32 %v2998, %v3123
  %3125 = vadd.xlane.f32.xlu0 %v3124
  %v3126 = vpop.xlane.xlu0 %3125
  %v3127 = vsel %vm3062, %v3006, 0.0
  %v3128 = vadd.f32 %v3004, %v3127
  %3129 = vadd.xlane.f32.xlu0 %v3128
  %v3130 = vpop.xlane.xlu0 %3129
  %v3131 = vsel %vm3062, %v3010, 0.0
  %v3132 = vadd.f32 %v3008, %v3131
  %3133 = vadd.xlane.f32.xlu0 %v3132
  %v3134 = vpop.xlane.xlu0 %3133
  %v3135 = vsel %vm3062, %v3016, 0.0
  %v3136 = vadd.f32 %v3014, %v3135
  %3137 = vadd.xlane.f32.xlu0 %v3136
  %v3138 = vpop.xlane.xlu0 %3137
  %v3139 = vsel %vm3062, %v3020, 0.0
  %v3140 = vadd.f32 %v3018, %v3139
  %3141 = vadd.xlane.f32.xlu0 %v3140
  %v3142 = vpop.xlane.xlu0 %3141
  %v3143 = vsel %vm3062, %v3026, 0.0
  %v3144 = vadd.f32 %v3024, %v3143
  %3145 = vadd.xlane.f32.xlu0 %v3144
  %v3146 = vpop.xlane.xlu0 %3145
  %v3147 = vsel %vm3062, %v3030, 0.0
  %v3148 = vadd.f32 %v3028, %v3147
  %3149 = vadd.xlane.f32.xlu0 %v3148
  %v3150 = vpop.xlane.xlu0 %3149
  %v3151 = vsel %vm3062, %v3036, 0.0
  %v3152 = vadd.f32 %v3034, %v3151
  %3153 = vadd.xlane.f32.xlu0 %v3152
  %v3154 = vpop.xlane.xlu0 %3153
  %v3155 = vsel %vm3062, %v3040, 0.0
  %v3156 = vadd.f32 %v3038, %v3155
  %3157 = vadd.xlane.f32.xlu0 %v3156
  %v3158 = vpop.xlane.xlu0 %3157
  %v3159 = vsel %vm3062, %v3046, 0.0
  %v3160 = vadd.f32 %v3044, %v3159
  %3161 = vadd.xlane.f32.xlu0 %v3160
  %v3162 = vpop.xlane.xlu0 %3161
  %v3163 = vsel %vm3062, %v3050, 0.0
  %v3164 = vadd.f32 %v3048, %v3163
  %3165 = vadd.xlane.f32.xlu0 %v3164
  %v3166 = vpop.xlane.xlu0 %3165
  %v3167 = vsel %vm3062, %v3056, 0.0
  %v3168 = vadd.f32 %v3054, %v3167
  %3169 = vadd.xlane.f32.xlu0 %v3168
  %v3170 = vpop.xlane.xlu0 %3169
  %v3171 = vsel %vm3062, %v3060, 0.0
  %v3172 = vadd.f32 %v3058, %v3171
  %3173 = vadd.xlane.f32.xlu0 %v3172
  %v3174 = vpop.xlane.xlu0 %3173
  %v3175 = vmul.f32 %v3066, 0.0051020407
  %v3176 = vmul.f32 %v3070, 0.0051020407
  %v3177 = vmul.f32 %v3074, 0.0051020407
  %v3178 = vmul.f32 %v3078, 0.0051020407
  %v3179 = vmul.f32 %v3082, 0.0051020407
  %v3180 = vmul.f32 %v3086, 0.0051020407
  %v3181 = vmul.f32 %v3090, 0.0051020407
  %v3182 = vmul.f32 %v3094, 0.0051020407
  %v3183 = vmul.f32 %v3098, 0.0051020407
  %v3184 = vmul.f32 %v3102, 0.0051020407
  %v3185 = vmul.f32 %v3106, 0.0051020407
  %v3186 = vmul.f32 %v3110, 0.0051020407
  %v3187 = vmul.f32 %v3114, 0.0051020407
  %v3188 = vmul.f32 %v3118, 0.0051020407
  %v3189 = vmul.f32 %v3122, 0.0051020407
  %v3190 = vmul.f32 %v3126, 0.0051020407
  %v3191 = vmul.f32 %v3130, 0.0051020407
  %v3192 = vmul.f32 %v3134, 0.0051020407
  %v3193 = vmul.f32 %v3138, 0.0051020407
  %v3194 = vmul.f32 %v3142, 0.0051020407
  %v3195 = vmul.f32 %v3146, 0.0051020407
  %v3196 = vmul.f32 %v3150, 0.0051020407
  %v3197 = vmul.f32 %v3154, 0.0051020407
  %v3198 = vmul.f32 %v3158, 0.0051020407
  %v3199 = vmul.f32 %v3162, 0.0051020407
  %v3200 = vmul.f32 %v3166, 0.0051020407
  %v3201 = vmul.f32 %v3170, 0.0051020407
  %v3202 = vmul.f32 %v3174, 0.0051020407
  %v3203 = vsub.f32 %v2924, %v3175
  %v3204 = vsub.f32 %v2926, %v3175
  %v3205 = vsub.f32 %v2928, %v3176
  %v3206 = vsub.f32 %v2930, %v3176
  %v3207 = vsub.f32 %v2934, %v3177
  %v3208 = vsub.f32 %v2936, %v3177
  %v3209 = vsub.f32 %v2938, %v3178
  %v3210 = vsub.f32 %v2940, %v3178
  %v3211 = vsub.f32 %v2944, %v3179
  %v3212 = vsub.f32 %v2946, %v3179
  %v3213 = vsub.f32 %v2948, %v3180
  %v3214 = vsub.f32 %v2950, %v3180
  %v3215 = vsub.f32 %v2954, %v3181
  %v3216 = vsub.f32 %v2956, %v3181
  %v3217 = vsub.f32 %v2958, %v3182
  %v3218 = vsub.f32 %v2960, %v3182
  %v3219 = vsub.f32 %v2964, %v3183
  %v3220 = vsub.f32 %v2966, %v3183
  %v3221 = vsub.f32 %v2968, %v3184
  %v3222 = vsub.f32 %v2970, %v3184
  %v3223 = vsub.f32 %v2974, %v3185
  %v3224 = vsub.f32 %v2976, %v3185
  %v3225 = vsub.f32 %v2978, %v3186
  %v3226 = vsub.f32 %v2980, %v3186
  %v3227 = vsub.f32 %v2984, %v3187
  %v3228 = vsub.f32 %v2986, %v3187
  %v3229 = vsub.f32 %v2988, %v3188
  %v3230 = vsub.f32 %v2990, %v3188
  %v3231 = vsub.f32 %v2994, %v3189
  %v3232 = vsub.f32 %v2996, %v3189
  %v3233 = vsub.f32 %v2998, %v3190
  %v3234 = vsub.f32 %v3000, %v3190
  %v3235 = vsub.f32 %v3004, %v3191
  %v3236 = vsub.f32 %v3006, %v3191
  %v3237 = vsub.f32 %v3008, %v3192
  %v3238 = vsub.f32 %v3010, %v3192
  %v3239 = vsub.f32 %v3014, %v3193
  %v3240 = vsub.f32 %v3016, %v3193
  %v3241 = vsub.f32 %v3018, %v3194
  %v3242 = vsub.f32 %v3020, %v3194
  %v3243 = vsub.f32 %v3024, %v3195
  %v3244 = vsub.f32 %v3026, %v3195
  %v3245 = vsub.f32 %v3028, %v3196
  %v3246 = vsub.f32 %v3030, %v3196
  %v3247 = vsub.f32 %v3034, %v3197
  %v3248 = vsub.f32 %v3036, %v3197
  %v3249 = vsub.f32 %v3038, %v3198
  %v3250 = vsub.f32 %v3040, %v3198
  %v3251 = vsub.f32 %v3044, %v3199
  %v3252 = vsub.f32 %v3046, %v3199
  %v3253 = vsub.f32 %v3048, %v3200
  %v3254 = vsub.f32 %v3050, %v3200
  %v3255 = vsub.f32 %v3054, %v3201
  %v3256 = vsub.f32 %v3056, %v3201
  %v3257 = vsub.f32 %v3058, %v3202
  %v3258 = vsub.f32 %v3060, %v3202
  %v3259 = vmul.f32 %v3203, %v3203
  %v3260 = vmul.f32 %v3204, %v3204
  %v3261 = vmul.f32 %v3205, %v3205
  %v3262 = vmul.f32 %v3206, %v3206
  %v3263 = vmul.f32 %v3207, %v3207
  %v3264 = vmul.f32 %v3208, %v3208
  %v3265 = vmul.f32 %v3209, %v3209
  %v3266 = vmul.f32 %v3210, %v3210
  %v3267 = vmul.f32 %v3211, %v3211
  %v3268 = vmul.f32 %v3212, %v3212
  %v3269 = vmul.f32 %v3213, %v3213
  %v3270 = vmul.f32 %v3214, %v3214
  %v3271 = vmul.f32 %v3215, %v3215
  %v3272 = vmul.f32 %v3216, %v3216
  %v3273 = vmul.f32 %v3217, %v3217
  %v3274 = vmul.f32 %v3218, %v3218
  %v3275 = vmul.f32 %v3219, %v3219
  %v3276 = vmul.f32 %v3220, %v3220
  %v3277 = vmul.f32 %v3221, %v3221
  %v3278 = vmul.f32 %v3222, %v3222
  %v3279 = vmul.f32 %v3223, %v3223
  %v3280 = vmul.f32 %v3224, %v3224
  %v3281 = vmul.f32 %v3225, %v3225
  %v3282 = vmul.f32 %v3226, %v3226
  %v3283 = vmul.f32 %v3227, %v3227
  %v3284 = vmul.f32 %v3228, %v3228
  %v3285 = vmul.f32 %v3229, %v3229
  %v3286 = vmul.f32 %v3230, %v3230
  %v3287 = vmul.f32 %v3231, %v3231
  %v3288 = vmul.f32 %v3232, %v3232
  %v3289 = vmul.f32 %v3233, %v3233
  %v3290 = vmul.f32 %v3234, %v3234
  %v3291 = vmul.f32 %v3235, %v3235
  %v3292 = vmul.f32 %v3236, %v3236
  %v3293 = vmul.f32 %v3237, %v3237
  %v3294 = vmul.f32 %v3238, %v3238
  %v3295 = vmul.f32 %v3239, %v3239
  %v3296 = vmul.f32 %v3240, %v3240
  %v3297 = vmul.f32 %v3241, %v3241
  %v3298 = vmul.f32 %v3242, %v3242
  %v3299 = vmul.f32 %v3243, %v3243
  %v3300 = vmul.f32 %v3244, %v3244
  %v3301 = vmul.f32 %v3245, %v3245
  %v3302 = vmul.f32 %v3246, %v3246
  %v3303 = vmul.f32 %v3247, %v3247
  %v3304 = vmul.f32 %v3248, %v3248
  %v3305 = vmul.f32 %v3249, %v3249
  %v3306 = vmul.f32 %v3250, %v3250
  %v3307 = vmul.f32 %v3251, %v3251
  %v3308 = vmul.f32 %v3252, %v3252
  %v3309 = vmul.f32 %v3253, %v3253
  %v3310 = vmul.f32 %v3254, %v3254
  %v3311 = vmul.f32 %v3255, %v3255
  %v3312 = vmul.f32 %v3256, %v3256
  %v3313 = vmul.f32 %v3257, %v3257
  %v3314 = vmul.f32 %v3258, %v3258
  %v3315 = vsel %vm3062, %v3260, 0.0
  %v3316 = vadd.f32 %v3259, %v3315
  %3317 = vadd.xlane.f32.xlu0 %v3316
  %v3318 = vpop.xlane.xlu0 %3317
  %v3319 = vsel %vm3062, %v3262, 0.0
  %v3320 = vadd.f32 %v3261, %v3319
  %3321 = vadd.xlane.f32.xlu0 %v3320
  %v3322 = vpop.xlane.xlu0 %3321
  %v3323 = vsel %vm3062, %v3264, 0.0
  %v3324 = vadd.f32 %v3263, %v3323
  %3325 = vadd.xlane.f32.xlu0 %v3324
  %v3326 = vpop.xlane.xlu0 %3325
  %v3327 = vsel %vm3062, %v3266, 0.0
  %v3328 = vadd.f32 %v3265, %v3327
  %3329 = vadd.xlane.f32.xlu0 %v3328
  %v3330 = vpop.xlane.xlu0 %3329
  %v3331 = vsel %vm3062, %v3268, 0.0
  %v3332 = vadd.f32 %v3267, %v3331
  %3333 = vadd.xlane.f32.xlu0 %v3332
  %v3334 = vpop.xlane.xlu0 %3333
  %v3335 = vsel %vm3062, %v3270, 0.0
  %v3336 = vadd.f32 %v3269, %v3335
  %3337 = vadd.xlane.f32.xlu0 %v3336
  %v3338 = vpop.xlane.xlu0 %3337
  %v3339 = vsel %vm3062, %v3272, 0.0
  %v3340 = vadd.f32 %v3271, %v3339
  %3341 = vadd.xlane.f32.xlu0 %v3340
  %v3342 = vpop.xlane.xlu0 %3341
  %v3343 = vsel %vm3062, %v3274, 0.0
  %v3344 = vadd.f32 %v3273, %v3343
  %3345 = vadd.xlane.f32.xlu0 %v3344
  %v3346 = vpop.xlane.xlu0 %3345
  %v3347 = vsel %vm3062, %v3276, 0.0
  %v3348 = vadd.f32 %v3275, %v3347
  %3349 = vadd.xlane.f32.xlu0 %v3348
  %v3350 = vpop.xlane.xlu0 %3349
  %v3351 = vsel %vm3062, %v3278, 0.0
  %v3352 = vadd.f32 %v3277, %v3351
  %3353 = vadd.xlane.f32.xlu0 %v3352
  %v3354 = vpop.xlane.xlu0 %3353
  %v3355 = vsel %vm3062, %v3280, 0.0
  %v3356 = vadd.f32 %v3279, %v3355
  %3357 = vadd.xlane.f32.xlu0 %v3356
  %v3358 = vpop.xlane.xlu0 %3357
  %v3359 = vsel %vm3062, %v3282, 0.0
  %v3360 = vadd.f32 %v3281, %v3359
  %3361 = vadd.xlane.f32.xlu0 %v3360
  %v3362 = vpop.xlane.xlu0 %3361
  %v3363 = vsel %vm3062, %v3284, 0.0
  %v3364 = vadd.f32 %v3283, %v3363
  %3365 = vadd.xlane.f32.xlu0 %v3364
  %v3366 = vpop.xlane.xlu0 %3365
  %v3367 = vsel %vm3062, %v3286, 0.0
  %v3368 = vadd.f32 %v3285, %v3367
  %3369 = vadd.xlane.f32.xlu0 %v3368
  %v3370 = vpop.xlane.xlu0 %3369
  %v3371 = vsel %vm3062, %v3288, 0.0
  %v3372 = vadd.f32 %v3287, %v3371
  %3373 = vadd.xlane.f32.xlu0 %v3372
  %v3374 = vpop.xlane.xlu0 %3373
  %v3375 = vsel %vm3062, %v3290, 0.0
  %v3376 = vadd.f32 %v3289, %v3375
  %3377 = vadd.xlane.f32.xlu0 %v3376
  %v3378 = vpop.xlane.xlu0 %3377
  %v3379 = vsel %vm3062, %v3292, 0.0
  %v3380 = vadd.f32 %v3291, %v3379
  %3381 = vadd.xlane.f32.xlu0 %v3380
  %v3382 = vpop.xlane.xlu0 %3381
  %v3383 = vsel %vm3062, %v3294, 0.0
  %v3384 = vadd.f32 %v3293, %v3383
  %3385 = vadd.xlane.f32.xlu0 %v3384
  %v3386 = vpop.xlane.xlu0 %3385
  %v3387 = vsel %vm3062, %v3296, 0.0
  %v3388 = vadd.f32 %v3295, %v3387
  %3389 = vadd.xlane.f32.xlu0 %v3388
  %v3390 = vpop.xlane.xlu0 %3389
  %v3391 = vsel %vm3062, %v3298, 0.0
  %v3392 = vadd.f32 %v3297, %v3391
  %3393 = vadd.xlane.f32.xlu0 %v3392
  %v3394 = vpop.xlane.xlu0 %3393
  %v3395 = vsel %vm3062, %v3300, 0.0
  %v3396 = vadd.f32 %v3299, %v3395
  %3397 = vadd.xlane.f32.xlu0 %v3396
  %v3398 = vpop.xlane.xlu0 %3397
  %v3399 = vsel %vm3062, %v3302, 0.0
  %v3400 = vadd.f32 %v3301, %v3399
  %3401 = vadd.xlane.f32.xlu0 %v3400
  %v3402 = vpop.xlane.xlu0 %3401
  %v3403 = vsel %vm3062, %v3304, 0.0
  %v3404 = vadd.f32 %v3303, %v3403
  %3405 = vadd.xlane.f32.xlu0 %v3404
  %v3406 = vpop.xlane.xlu0 %3405
  %v3407 = vsel %vm3062, %v3306, 0.0
  %v3408 = vadd.f32 %v3305, %v3407
  %3409 = vadd.xlane.f32.xlu0 %v3408
  %v3410 = vpop.xlane.xlu0 %3409
  %v3411 = vsel %vm3062, %v3308, 0.0
  %v3412 = vadd.f32 %v3307, %v3411
  %3413 = vadd.xlane.f32.xlu0 %v3412
  %v3414 = vpop.xlane.xlu0 %3413
  %v3415 = vsel %vm3062, %v3310, 0.0
  %v3416 = vadd.f32 %v3309, %v3415
  %3417 = vadd.xlane.f32.xlu0 %v3416
  %v3418 = vpop.xlane.xlu0 %3417
  %v3419 = vsel %vm3062, %v3312, 0.0
  %v3420 = vadd.f32 %v3311, %v3419
  %3421 = vadd.xlane.f32.xlu0 %v3420
  %v3422 = vpop.xlane.xlu0 %3421
  %v3423 = vsel %vm3062, %v3314, 0.0
  %v3424 = vadd.f32 %v3313, %v3423
  %3425 = vadd.xlane.f32.xlu0 %v3424
  %v3426 = vpop.xlane.xlu0 %3425
  %v3427 = vmul.f32 %v3318, 0.0051020407
  %v3428 = vmul.f32 %v3322, 0.0051020407
  %v3429 = vmul.f32 %v3326, 0.0051020407
  %v3430 = vmul.f32 %v3330, 0.0051020407
  %v3431 = vmul.f32 %v3334, 0.0051020407
  %v3432 = vmul.f32 %v3338, 0.0051020407
  %v3433 = vmul.f32 %v3342, 0.0051020407
  %v3434 = vmul.f32 %v3346, 0.0051020407
  %v3435 = vmul.f32 %v3350, 0.0051020407
  %v3436 = vmul.f32 %v3354, 0.0051020407
  %v3437 = vmul.f32 %v3358, 0.0051020407
  %v3438 = vmul.f32 %v3362, 0.0051020407
  %v3439 = vmul.f32 %v3366, 0.0051020407
  %v3440 = vmul.f32 %v3370, 0.0051020407
  %v3441 = vmul.f32 %v3374, 0.0051020407
  %v3442 = vmul.f32 %v3378, 0.0051020407
  %v3443 = vmul.f32 %v3382, 0.0051020407
  %v3444 = vmul.f32 %v3386, 0.0051020407
  %v3445 = vmul.f32 %v3390, 0.0051020407
  %v3446 = vmul.f32 %v3394, 0.0051020407
  %v3447 = vmul.f32 %v3398, 0.0051020407
  %v3448 = vmul.f32 %v3402, 0.0051020407
  %v3449 = vmul.f32 %v3406, 0.0051020407
  %v3450 = vmul.f32 %v3410, 0.0051020407
  %v3451 = vmul.f32 %v3414, 0.0051020407
  %v3452 = vmul.f32 %v3418, 0.0051020407
  %v3453 = vmul.f32 %v3422, 0.0051020407
  %v3454 = vmul.f32 %v3426, 0.0051020407
  %v3455 = vld [vmem:[%s5] sm:$0xff]
  %v3456 = vld [vmem:[%s5 + $0x8] sm:$0xff]
  %v3457 = vld [vmem:[%s5 + $0x10] sm:$0xff]
  %v3458 = vld [vmem:[%s5 + $0x18] sm:$0xff]
  %v3459 = vld [vmem:[%s5 + $0x20] sm:$0xff]
  %v3460 = vld [vmem:[%s5 + $0x28] sm:$0xff]
  %v3461 = vld [vmem:[%s5 + $0x30] sm:$0xff]
  %v3462 = vld [vmem:[%s5 + $0x38] sm:$0xff]
  %v3463 = vld [vmem:[%s5 + $0x40] sm:$0xff]
  %v3464 = vld [vmem:[%s5 + $0x48] sm:$0xff]
  %v3465 = vld [vmem:[%s5 + $0x50] sm:$0xff]
  %v3466 = vld [vmem:[%s5 + $0x58] sm:$0xff]
  %v3467 = vld [vmem:[%s5 + $0x60] sm:$0xff]
  %v3468 = vld [vmem:[%s5 + $0x68] sm:$0xff]
  %v3469 = vld [vmem:[%s5 + $0x70] sm:$0xff]
  %v3470 = vld [vmem:[%s5 + $0x78] sm:$0xff]
  %v3471 = vld [vmem:[%s5 + $0x80] sm:$0xff]
  %v3472 = vld [vmem:[%s5 + $0x88] sm:$0xff]
  %v3473 = vld [vmem:[%s5 + $0x90] sm:$0xff]
  %v3474 = vld [vmem:[%s5 + $0x98] sm:$0xff]
  %v3475 = vld [vmem:[%s5 + $0xa0] sm:$0xff]
  %v3476 = vld [vmem:[%s5 + $0xa8] sm:$0xff]
  %v3477 = vld [vmem:[%s5 + $0xb0] sm:$0xff]
  %v3478 = vld [vmem:[%s5 + $0xb8] sm:$0xff]
  %v3479 = vld [vmem:[%s5 + $0xc0] sm:$0xff]
  %v3480 = vld [vmem:[%s5 + $0xc8] sm:$0xff]
  %v3481 = vld [vmem:[%s5 + $0xd0] sm:$0xff]
  %v3482 = vld [vmem:[%s5 + $0xd8] sm:$0xff]
  %v3483 = vadd.f32 %v3427, 0.001
  %v3484 = vadd.f32 %v3428, 0.001
  %v3485 = vadd.f32 %v3429, 0.001
  %v3486 = vadd.f32 %v3430, 0.001
  %v3487 = vadd.f32 %v3431, 0.001
  %v3488 = vadd.f32 %v3432, 0.001
  %v3489 = vadd.f32 %v3433, 0.001
  %v3490 = vadd.f32 %v3434, 0.001
  %v3491 = vadd.f32 %v3435, 0.001
  %v3492 = vadd.f32 %v3436, 0.001
  %v3493 = vadd.f32 %v3437, 0.001
  %v3494 = vadd.f32 %v3438, 0.001
  %v3495 = vadd.f32 %v3439, 0.001
  %v3496 = vadd.f32 %v3440, 0.001
  %v3497 = vadd.f32 %v3441, 0.001
  %v3498 = vadd.f32 %v3442, 0.001
  %v3499 = vadd.f32 %v3443, 0.001
  %v3500 = vadd.f32 %v3444, 0.001
  %v3501 = vadd.f32 %v3445, 0.001
  %v3502 = vadd.f32 %v3446, 0.001
  %v3503 = vadd.f32 %v3447, 0.001
  %v3504 = vadd.f32 %v3448, 0.001
  %v3505 = vadd.f32 %v3449, 0.001
  %v3506 = vadd.f32 %v3450, 0.001
  %v3507 = vadd.f32 %v3451, 0.001
  %v3508 = vadd.f32 %v3452, 0.001
  %v3509 = vadd.f32 %v3453, 0.001
  %v3510 = vadd.f32 %v3454, 0.001
  %v3511 = vrsqrt.pop %v3483
  %v3512 = vrsqrt.pop %v3484
  %v3513 = vrsqrt.pop %v3485
  %v3514 = vrsqrt.pop %v3486
  %v3515 = vrsqrt.pop %v3487
  %v3516 = vrsqrt.pop %v3488
  %v3517 = vrsqrt.pop %v3489
  %v3518 = vrsqrt.pop %v3490
  %v3519 = vrsqrt.pop %v3491
  %v3520 = vrsqrt.pop %v3492
  %v3521 = vrsqrt.pop %v3493
  %v3522 = vrsqrt.pop %v3494
  %v3523 = vrsqrt.pop %v3495
  %v3524 = vrsqrt.pop %v3496
  %v3525 = vrsqrt.pop %v3497
  %v3526 = vrsqrt.pop %v3498
  %v3527 = vrsqrt.pop %v3499
  %v3528 = vrsqrt.pop %v3500
  %v3529 = vrsqrt.pop %v3501
  %v3530 = vrsqrt.pop %v3502
  %v3531 = vrsqrt.pop %v3503
  %v3532 = vrsqrt.pop %v3504
  %v3533 = vrsqrt.pop %v3505
  %v3534 = vrsqrt.pop %v3506
  %v3535 = vrsqrt.pop %v3507
  %v3536 = vrsqrt.pop %v3508
  %v3537 = vrsqrt.pop %v3509
  %v3538 = vrsqrt.pop %v3510
  %v3539 = vmul.f32 %v3455, %v3511
  %v3540 = vmul.f32 %v3456, %v3512
  %v3541 = vmul.f32 %v3457, %v3513
  %v3542 = vmul.f32 %v3458, %v3514
  %v3543 = vmul.f32 %v3459, %v3515
  %v3544 = vmul.f32 %v3460, %v3516
  %v3545 = vmul.f32 %v3461, %v3517
  %v3546 = vmul.f32 %v3462, %v3518
  %v3547 = vmul.f32 %v3463, %v3519
  %v3548 = vmul.f32 %v3464, %v3520
  %v3549 = vmul.f32 %v3465, %v3521
  %v3550 = vmul.f32 %v3466, %v3522
  %v3551 = vmul.f32 %v3467, %v3523
  %v3552 = vmul.f32 %v3468, %v3524
  %v3553 = vmul.f32 %v3469, %v3525
  %v3554 = vmul.f32 %v3470, %v3526
  %v3555 = vmul.f32 %v3471, %v3527
  %v3556 = vmul.f32 %v3472, %v3528
  %v3557 = vmul.f32 %v3473, %v3529
  %v3558 = vmul.f32 %v3474, %v3530
  %v3559 = vmul.f32 %v3475, %v3531
  %v3560 = vmul.f32 %v3476, %v3532
  %v3561 = vmul.f32 %v3477, %v3533
  %v3562 = vmul.f32 %v3478, %v3534
  %v3563 = vmul.f32 %v3479, %v3535
  %v3564 = vmul.f32 %v3480, %v3536
  %v3565 = vmul.f32 %v3481, %v3537
  %v3566 = vmul.f32 %v3482, %v3538
  %3568 = vset.pattern.permute.xlu0 0
  %3569 = vperm.xlu0 %3568, %v3539
  %v3570 = vpop.permute.xlu0 %3569
  %3573 = vset.pattern.permute.xlu0 0
  %3574 = vperm.xlu0 %3573, %v3540
  %v3575 = vpop.permute.xlu0 %3574
  %3578 = vset.pattern.permute.xlu0 0
  %3579 = vperm.xlu0 %3578, %v3541
  %v3580 = vpop.permute.xlu0 %3579
  %3583 = vset.pattern.permute.xlu0 0
  %3584 = vperm.xlu0 %3583, %v3542
  %v3585 = vpop.permute.xlu0 %3584
  %3588 = vset.pattern.permute.xlu0 0
  %3589 = vperm.xlu0 %3588, %v3543
  %v3590 = vpop.permute.xlu0 %3589
  %3593 = vset.pattern.permute.xlu0 0
  %3594 = vperm.xlu0 %3593, %v3544
  %v3595 = vpop.permute.xlu0 %3594
  %3598 = vset.pattern.permute.xlu0 0
  %3599 = vperm.xlu0 %3598, %v3545
  %v3600 = vpop.permute.xlu0 %3599
  %3603 = vset.pattern.permute.xlu0 0
  %3604 = vperm.xlu0 %3603, %v3546
  %v3605 = vpop.permute.xlu0 %3604
  %3608 = vset.pattern.permute.xlu0 0
  %3609 = vperm.xlu0 %3608, %v3547
  %v3610 = vpop.permute.xlu0 %3609
  %3613 = vset.pattern.permute.xlu0 0
  %3614 = vperm.xlu0 %3613, %v3548
  %v3615 = vpop.permute.xlu0 %3614
  %3618 = vset.pattern.permute.xlu0 0
  %3619 = vperm.xlu0 %3618, %v3549
  %v3620 = vpop.permute.xlu0 %3619
  %3623 = vset.pattern.permute.xlu0 0
  %3624 = vperm.xlu0 %3623, %v3550
  %v3625 = vpop.permute.xlu0 %3624
  %3628 = vset.pattern.permute.xlu0 0
  %3629 = vperm.xlu0 %3628, %v3551
  %v3630 = vpop.permute.xlu0 %3629
  %3633 = vset.pattern.permute.xlu0 0
  %3634 = vperm.xlu0 %3633, %v3552
  %v3635 = vpop.permute.xlu0 %3634
  %3638 = vset.pattern.permute.xlu0 0
  %3639 = vperm.xlu0 %3638, %v3553
  %v3640 = vpop.permute.xlu0 %3639
  %3643 = vset.pattern.permute.xlu0 0
  %3644 = vperm.xlu0 %3643, %v3554
  %v3645 = vpop.permute.xlu0 %3644
  %3648 = vset.pattern.permute.xlu0 0
  %3649 = vperm.xlu0 %3648, %v3555
  %v3650 = vpop.permute.xlu0 %3649
  %3653 = vset.pattern.permute.xlu0 0
  %3654 = vperm.xlu0 %3653, %v3556
  %v3655 = vpop.permute.xlu0 %3654
  %3658 = vset.pattern.permute.xlu0 0
  %3659 = vperm.xlu0 %3658, %v3557
  %v3660 = vpop.permute.xlu0 %3659
  %3663 = vset.pattern.permute.xlu0 0
  %3664 = vperm.xlu0 %3663, %v3558
  %v3665 = vpop.permute.xlu0 %3664
  %3668 = vset.pattern.permute.xlu0 0
  %3669 = vperm.xlu0 %3668, %v3559
  %v3670 = vpop.permute.xlu0 %3669
  %3673 = vset.pattern.permute.xlu0 0
  %3674 = vperm.xlu0 %3673, %v3560
  %v3675 = vpop.permute.xlu0 %3674
  %3678 = vset.pattern.permute.xlu0 0
  %3679 = vperm.xlu0 %3678, %v3561
  %v3680 = vpop.permute.xlu0 %3679
  %3683 = vset.pattern.permute.xlu0 0
  %3684 = vperm.xlu0 %3683, %v3562
  %v3685 = vpop.permute.xlu0 %3684
  %3688 = vset.pattern.permute.xlu0 0
  %3689 = vperm.xlu0 %3688, %v3563
  %v3690 = vpop.permute.xlu0 %3689
  %3693 = vset.pattern.permute.xlu0 0
  %3694 = vperm.xlu0 %3693, %v3564
  %v3695 = vpop.permute.xlu0 %3694
  %3698 = vset.pattern.permute.xlu0 0
  %3699 = vperm.xlu0 %3698, %v3565
  %v3700 = vpop.permute.xlu0 %3699
  %3703 = vset.pattern.permute.xlu0 0
  %3704 = vperm.xlu0 %3703, %v3566
  %v3705 = vpop.permute.xlu0 %3704
  %v3707 = vmul.f32 %v3203, %v3570
  %v3708 = vmul.f32 %v3204, %v3570
  %v3709 = vmul.f32 %v3205, %v3575
  %v3710 = vmul.f32 %v3206, %v3575
  %v3711 = vmul.f32 %v3207, %v3580
  %v3712 = vmul.f32 %v3208, %v3580
  %v3713 = vmul.f32 %v3209, %v3585
  %v3714 = vmul.f32 %v3210, %v3585
  %v3715 = vmul.f32 %v3211, %v3590
  %v3716 = vmul.f32 %v3212, %v3590
  %v3717 = vmul.f32 %v3213, %v3595
  %v3718 = vmul.f32 %v3214, %v3595
  %v3719 = vmul.f32 %v3215, %v3600
  %v3720 = vmul.f32 %v3216, %v3600
  %v3721 = vmul.f32 %v3217, %v3605
  %v3722 = vmul.f32 %v3218, %v3605
  %v3723 = vmul.f32 %v3219, %v3610
  %v3724 = vmul.f32 %v3220, %v3610
  %v3725 = vmul.f32 %v3221, %v3615
  %v3726 = vmul.f32 %v3222, %v3615
  %v3727 = vmul.f32 %v3223, %v3620
  %v3728 = vmul.f32 %v3224, %v3620
  %v3729 = vmul.f32 %v3225, %v3625
  %v3730 = vmul.f32 %v3226, %v3625
  %v3731 = vmul.f32 %v3227, %v3630
  %v3732 = vmul.f32 %v3228, %v3630
  %v3733 = vmul.f32 %v3229, %v3635
  %v3734 = vmul.f32 %v3230, %v3635
  %v3735 = vmul.f32 %v3231, %v3640
  %v3736 = vmul.f32 %v3232, %v3640
  %v3737 = vmul.f32 %v3233, %v3645
  %v3738 = vmul.f32 %v3234, %v3645
  %v3739 = vmul.f32 %v3235, %v3650
  %v3740 = vmul.f32 %v3236, %v3650
  %v3741 = vmul.f32 %v3237, %v3655
  %v3742 = vmul.f32 %v3238, %v3655
  %v3743 = vmul.f32 %v3239, %v3660
  %v3744 = vmul.f32 %v3240, %v3660
  %v3745 = vmul.f32 %v3241, %v3665
  %v3746 = vmul.f32 %v3242, %v3665
  %v3747 = vmul.f32 %v3243, %v3670
  %v3748 = vmul.f32 %v3244, %v3670
  %v3749 = vmul.f32 %v3245, %v3675
  %v3750 = vmul.f32 %v3246, %v3675
  %v3751 = vmul.f32 %v3247, %v3680
  %v3752 = vmul.f32 %v3248, %v3680
  %v3753 = vmul.f32 %v3249, %v3685
  %v3754 = vmul.f32 %v3250, %v3685
  %v3755 = vmul.f32 %v3251, %v3690
  %v3756 = vmul.f32 %v3252, %v3690
  %v3757 = vmul.f32 %v3253, %v3695
  %v3758 = vmul.f32 %v3254, %v3695
  %v3759 = vmul.f32 %v3255, %v3700
  %v3760 = vmul.f32 %v3256, %v3700
  %v3761 = vmul.f32 %v3257, %v3705
  %v3762 = vmul.f32 %v3258, %v3705
  %3764 = vset.pattern.permute.xlu0 1
  %3765 = vperm.xlu0 %3764, %v3455
  %v3766 = vpop.permute.xlu0 %3765
  %3769 = vset.pattern.permute.xlu0 1
  %3770 = vperm.xlu0 %3769, %v3456
  %v3771 = vpop.permute.xlu0 %3770
  %3774 = vset.pattern.permute.xlu0 1
  %3775 = vperm.xlu0 %3774, %v3457
  %v3776 = vpop.permute.xlu0 %3775
  %3779 = vset.pattern.permute.xlu0 1
  %3780 = vperm.xlu0 %3779, %v3458
  %v3781 = vpop.permute.xlu0 %3780
  %3784 = vset.pattern.permute.xlu0 1
  %3785 = vperm.xlu0 %3784, %v3459
  %v3786 = vpop.permute.xlu0 %3785
  %3789 = vset.pattern.permute.xlu0 1
  %3790 = vperm.xlu0 %3789, %v3460
  %v3791 = vpop.permute.xlu0 %3790
  %3794 = vset.pattern.permute.xlu0 1
  %3795 = vperm.xlu0 %3794, %v3461
  %v3796 = vpop.permute.xlu0 %3795
  %3799 = vset.pattern.permute.xlu0 1
  %3800 = vperm.xlu0 %3799, %v3462
  %v3801 = vpop.permute.xlu0 %3800
  %3804 = vset.pattern.permute.xlu0 1
  %3805 = vperm.xlu0 %3804, %v3463
  %v3806 = vpop.permute.xlu0 %3805
  %3809 = vset.pattern.permute.xlu0 1
  %3810 = vperm.xlu0 %3809, %v3464
  %v3811 = vpop.permute.xlu0 %3810
  %3814 = vset.pattern.permute.xlu0 1
  %3815 = vperm.xlu0 %3814, %v3465
  %v3816 = vpop.permute.xlu0 %3815
  %3819 = vset.pattern.permute.xlu0 1
  %3820 = vperm.xlu0 %3819, %v3466
  %v3821 = vpop.permute.xlu0 %3820
  %3824 = vset.pattern.permute.xlu0 1
  %3825 = vperm.xlu0 %3824, %v3467
  %v3826 = vpop.permute.xlu0 %3825
  %3829 = vset.pattern.permute.xlu0 1
  %3830 = vperm.xlu0 %3829, %v3468
  %v3831 = vpop.permute.xlu0 %3830
  %3834 = vset.pattern.permute.xlu0 1
  %3835 = vperm.xlu0 %3834, %v3469
  %v3836 = vpop.permute.xlu0 %3835
  %3839 = vset.pattern.permute.xlu0 1
  %3840 = vperm.xlu0 %3839, %v3470
  %v3841 = vpop.permute.xlu0 %3840
  %3844 = vset.pattern.permute.xlu0 1
  %3845 = vperm.xlu0 %3844, %v3471
  %v3846 = vpop.permute.xlu0 %3845
  %3849 = vset.pattern.permute.xlu0 1
  %3850 = vperm.xlu0 %3849, %v3472
  %v3851 = vpop.permute.xlu0 %3850
  %3854 = vset.pattern.permute.xlu0 1
  %3855 = vperm.xlu0 %3854, %v3473
  %v3856 = vpop.permute.xlu0 %3855
  %3859 = vset.pattern.permute.xlu0 1
  %3860 = vperm.xlu0 %3859, %v3474
  %v3861 = vpop.permute.xlu0 %3860
  %3864 = vset.pattern.permute.xlu0 1
  %3865 = vperm.xlu0 %3864, %v3475
  %v3866 = vpop.permute.xlu0 %3865
  %3869 = vset.pattern.permute.xlu0 1
  %3870 = vperm.xlu0 %3869, %v3476
  %v3871 = vpop.permute.xlu0 %3870
  %3874 = vset.pattern.permute.xlu0 1
  %3875 = vperm.xlu0 %3874, %v3477
  %v3876 = vpop.permute.xlu0 %3875
  %3879 = vset.pattern.permute.xlu0 1
  %3880 = vperm.xlu0 %3879, %v3478
  %v3881 = vpop.permute.xlu0 %3880
  %3884 = vset.pattern.permute.xlu0 1
  %3885 = vperm.xlu0 %3884, %v3479
  %v3886 = vpop.permute.xlu0 %3885
  %3889 = vset.pattern.permute.xlu0 1
  %3890 = vperm.xlu0 %3889, %v3480
  %v3891 = vpop.permute.xlu0 %3890
  %3894 = vset.pattern.permute.xlu0 1
  %3895 = vperm.xlu0 %3894, %v3481
  %v3896 = vpop.permute.xlu0 %3895
  %3899 = vset.pattern.permute.xlu0 1
  %3900 = vperm.xlu0 %3899, %v3482
  %v3901 = vpop.permute.xlu0 %3900
  %v3903 = vadd.f32 %v3707, %v3766
  %v3904 = vadd.f32 %v3708, %v3766
  %v3905 = vadd.f32 %v3709, %v3771
  %v3906 = vadd.f32 %v3710, %v3771
  %v3907 = vadd.f32 %v3711, %v3776
  %v3908 = vadd.f32 %v3712, %v3776
  %v3909 = vadd.f32 %v3713, %v3781
  %v3910 = vadd.f32 %v3714, %v3781
  %v3911 = vadd.f32 %v3715, %v3786
  %v3912 = vadd.f32 %v3716, %v3786
  %v3913 = vadd.f32 %v3717, %v3791
  %v3914 = vadd.f32 %v3718, %v3791
  %v3915 = vadd.f32 %v3719, %v3796
  %v3916 = vadd.f32 %v3720, %v3796
  %v3917 = vadd.f32 %v3721, %v3801
  %v3918 = vadd.f32 %v3722, %v3801
  %v3919 = vadd.f32 %v3723, %v3806
  %v3920 = vadd.f32 %v3724, %v3806
  %v3921 = vadd.f32 %v3725, %v3811
  %v3922 = vadd.f32 %v3726, %v3811
  %v3923 = vadd.f32 %v3727, %v3816
  %v3924 = vadd.f32 %v3728, %v3816
  %v3925 = vadd.f32 %v3729, %v3821
  %v3926 = vadd.f32 %v3730, %v3821
  %v3927 = vadd.f32 %v3731, %v3826
  %v3928 = vadd.f32 %v3732, %v3826
  %v3929 = vadd.f32 %v3733, %v3831
  %v3930 = vadd.f32 %v3734, %v3831
  %v3931 = vadd.f32 %v3735, %v3836
  %v3932 = vadd.f32 %v3736, %v3836
  %v3933 = vadd.f32 %v3737, %v3841
  %v3934 = vadd.f32 %v3738, %v3841
  %v3935 = vadd.f32 %v3739, %v3846
  %v3936 = vadd.f32 %v3740, %v3846
  %v3937 = vadd.f32 %v3741, %v3851
  %v3938 = vadd.f32 %v3742, %v3851
  %v3939 = vadd.f32 %v3743, %v3856
  %v3940 = vadd.f32 %v3744, %v3856
  %v3941 = vadd.f32 %v3745, %v3861
  %v3942 = vadd.f32 %v3746, %v3861
  %v3943 = vadd.f32 %v3747, %v3866
  %v3944 = vadd.f32 %v3748, %v3866
  %v3945 = vadd.f32 %v3749, %v3871
  %v3946 = vadd.f32 %v3750, %v3871
  %v3947 = vadd.f32 %v3751, %v3876
  %v3948 = vadd.f32 %v3752, %v3876
  %v3949 = vadd.f32 %v3753, %v3881
  %v3950 = vadd.f32 %v3754, %v3881
  %v3951 = vadd.f32 %v3755, %v3886
  %v3952 = vadd.f32 %v3756, %v3886
  %v3953 = vadd.f32 %v3757, %v3891
  %v3954 = vadd.f32 %v3758, %v3891
  %v3955 = vadd.f32 %v3759, %v3896
  %v3956 = vadd.f32 %v3760, %v3896
  %v3957 = vadd.f32 %v3761, %v3901
  %v3958 = vadd.f32 %v3762, %v3901
  %3959 = vst [vmem:[%s6] sm:$0xff] %v3903
  %3960 = vst.msk [vmem:[%s6 + $0x8] sm:$0xff] %vm3062, %v3904
  %3961 = vst [vmem:[%s6 + $0x10] sm:$0xff] %v3905
  %3962 = vst.msk [vmem:[%s6 + $0x18] sm:$0xff] %vm3062, %v3906
  %3963 = vst [vmem:[%s6 + $0x20] sm:$0xff] %v3907
  %3964 = vst.msk [vmem:[%s6 + $0x28] sm:$0xff] %vm3062, %v3908
  %3965 = vst [vmem:[%s6 + $0x30] sm:$0xff] %v3909
  %3966 = vst.msk [vmem:[%s6 + $0x38] sm:$0xff] %vm3062, %v3910
  %3967 = vst [vmem:[%s6 + $0x40] sm:$0xff] %v3911
  %3968 = vst.msk [vmem:[%s6 + $0x48] sm:$0xff] %vm3062, %v3912
  %3969 = vst [vmem:[%s6 + $0x50] sm:$0xff] %v3913
  %3970 = vst.msk [vmem:[%s6 + $0x58] sm:$0xff] %vm3062, %v3914
  %3971 = vst [vmem:[%s6 + $0x60] sm:$0xff] %v3915
  %3972 = vst.msk [vmem:[%s6 + $0x68] sm:$0xff] %vm3062, %v3916
  %3973 = vst [vmem:[%s6 + $0x70] sm:$0xff] %v3917
  %3974 = vst.msk [vmem:[%s6 + $0x78] sm:$0xff] %vm3062, %v3918
  %3975 = vst [vmem:[%s6 + $0x80] sm:$0xff] %v3919
  %3976 = vst.msk [vmem:[%s6 + $0x88] sm:$0xff] %vm3062, %v3920
  %3977 = vst [vmem:[%s6 + $0x90] sm:$0xff] %v3921
  %3978 = vst.msk [vmem:[%s6 + $0x98] sm:$0xff] %vm3062, %v3922
  %3979 = vst [vmem:[%s6 + $0xa0] sm:$0xff] %v3923
  %3980 = vst.msk [vmem:[%s6 + $0xa8] sm:$0xff] %vm3062, %v3924
  %3981 = vst [vmem:[%s6 + $0xb0] sm:$0xff] %v3925
  %3982 = vst.msk [vmem:[%s6 + $0xb8] sm:$0xff] %vm3062, %v3926
  %3983 = vst [vmem:[%s6 + $0xc0] sm:$0xff] %v3927
  %3984 = vst.msk [vmem:[%s6 + $0xc8] sm:$0xff] %vm3062, %v3928
  %3985 = vst [vmem:[%s6 + $0xd0] sm:$0xff] %v3929
  %3986 = vst.msk [vmem:[%s6 + $0xd8] sm:$0xff] %vm3062, %v3930
  %3987 = vst [vmem:[%s6 + $0xe0] sm:$0xff] %v3931
  %3988 = vst.msk [vmem:[%s6 + $0xe8] sm:$0xff] %vm3062, %v3932
  %3989 = vst [vmem:[%s6 + $0xf0] sm:$0xff] %v3933
  %3990 = vst.msk [vmem:[%s6 + $0xf8] sm:$0xff] %vm3062, %v3934
  %3991 = vst [vmem:[%s6 + $0x100] sm:$0xff] %v3935
  %3992 = vst.msk [vmem:[%s6 + $0x108] sm:$0xff] %vm3062, %v3936
  %3993 = vst [vmem:[%s6 + $0x110] sm:$0xff] %v3937
  %3994 = vst.msk [vmem:[%s6 + $0x118] sm:$0xff] %vm3062, %v3938
  %3995 = vst [vmem:[%s6 + $0x120] sm:$0xff] %v3939
  %3996 = vst.msk [vmem:[%s6 + $0x128] sm:$0xff] %vm3062, %v3940
  %3997 = vst [vmem:[%s6 + $0x130] sm:$0xff] %v3941
  %3998 = vst.msk [vmem:[%s6 + $0x138] sm:$0xff] %vm3062, %v3942
  %3999 = vst [vmem:[%s6 + $0x140] sm:$0xff] %v3943
  %4000 = vst.msk [vmem:[%s6 + $0x148] sm:$0xff] %vm3062, %v3944
  %4001 = vst [vmem:[%s6 + $0x150] sm:$0xff] %v3945
  %4002 = vst.msk [vmem:[%s6 + $0x158] sm:$0xff] %vm3062, %v3946
  %4003 = vst [vmem:[%s6 + $0x160] sm:$0xff] %v3947
  %4004 = vst.msk [vmem:[%s6 + $0x168] sm:$0xff] %vm3062, %v3948
  %4005 = vst [vmem:[%s6 + $0x170] sm:$0xff] %v3949
  %4006 = vst.msk [vmem:[%s6 + $0x178] sm:$0xff] %vm3062, %v3950
  %4007 = vst [vmem:[%s6 + $0x180] sm:$0xff] %v3951
  %4008 = vst.msk [vmem:[%s6 + $0x188] sm:$0xff] %vm3062, %v3952
  %4009 = vst [vmem:[%s6 + $0x190] sm:$0xff] %v3953
  %4010 = vst.msk [vmem:[%s6 + $0x198] sm:$0xff] %vm3062, %v3954
  %4011 = vst [vmem:[%s6 + $0x1a0] sm:$0xff] %v3955
  %4012 = vst.msk [vmem:[%s6 + $0x1a8] sm:$0xff] %vm3062, %v3956
  %4013 = vst [vmem:[%s6 + $0x1b0] sm:$0xff] %v3957
  %4014 = vst.msk [vmem:[%s6 + $0x1b8] sm:$0xff] %vm3062, %v3958
  // Predicated region
  $region26: #{module_m_forward.1} parent=0 // pred_check
    _
  $region27: #{module_m_forward.1} parent=0 // pred_check_branch
    %4016 = sbr.rel (0) target = $region29
  $region28: #{module_m_forward.1} parent=0 // pred_region
    _
  $region29: #{module_m_forward.1} parent=0 // pred_fallthru
    _
  // Predicated region
  $region30: #{module_m_forward.1} parent=0 // pred_check
    _
  $region31: #{module_m_forward.1} parent=0 // pred_check_branch
    %4018 = sbr.rel (0) target = $region33
  $region32: #{module_m_forward.1} parent=0 // pred_region
    _
  $region33: #{module_m_forward.1} parent=0 // pred_fallthru
    _

</llo_original>
